<compile_context>
chip_gen: v5e
topology: v5e:2x2
jax: 0.10.0
libtpu: 0.0.40
codegen_flags: <defaults>
</compile_context>

<pallas_src>
import jax
import jax.numpy as jnp
from jax.experimental import pallas as pl
from jax.experimental.pallas import tpu as pltpu


# ----------------------------------------------------------------------------
# Fused kernel
# ----------------------------------------------------------------------------
def _leaky(x):
    return jnp.where(x > 0, x, 0.2 * x)


def _discriminator_kernel(sc_ref, ray_ref, start_ref, end_ref,
                          w1_ref, b1_ref, w2_ref, b2_ref, ws1_ref, bs1_ref,
                          w3_ref, b3_ref, w4_ref, b4_ref, ws2_ref, bs2_ref,
                          w5_ref, b5_ref, w6_ref, b6_ref,
                          wq_ref, wk_ref, wv_ref, bv_ref, w7_ref, b7_ref,
                          fc1f_ref, fc1s_ref, fc1e_ref, fc1b_ref,
                          fc2w_ref, fc2b_ref, fc3w_ref, fc3b_ref,
                          o_ref):
    f32 = jnp.float32
    gamma = sc_ref[0]            # SelfAttention gamma (scalar, SMEM)
    bq = sc_ref[1]               # query conv bias (scalar)
    bk = sc_ref[2]               # key conv bias (scalar)
    batch = ray_ref.shape[0]

    # ---- shift-selector matrices (memoized across layers / batch) ----------
    sel_cache = {}

    def selector(lin, lout, stride, offset):
        key = (lin, lout, stride, offset)
        if key not in sel_cache:
            src = jax.lax.broadcasted_iota(jnp.int32, (lin, lout), 0)
            dst = jax.lax.broadcasted_iota(jnp.int32, (lin, lout), 1)
            sel_cache[key] = jnp.where(src == dst * stride + offset,
                                       1.0, 0.0).astype(f32)
        return sel_cache[key]

    # ---- Conv1d on a (Cin, L) slab -> (Cout, Lout), zero padding -----------
    def conv(x, w_ref, b_ref, *, ksize, stride=1, pad=0, dil=1, leaky=False):
        lin = x.shape[1]
        lout = (lin + 2 * pad - dil * (ksize - 1) - 1) // stride + 1
        acc = None
        for k in range(ksize):
            wk = w_ref[k] if ksize > 1 else w_ref[...]   # (Cout, Cin)
            off = k * dil - pad
            if stride == 1 and off == 0:
                xs = x
            else:
                xs = jnp.dot(x, selector(lin, lout, stride, off),
                             preferred_element_type=f32)         # (Cin, Lout)
            term = jnp.dot(wk, xs, preferred_element_type=f32)   # (Cout, Lout)
            acc = term if acc is None else acc + term
        y = acc + b_ref[...]
        return _leaky(y) if leaky else y

    # ---- whole forward, unrolled over the (tiny) batch ---------------------
    for b in range(batch):
        x = ray_ref[b:b + 1, :]                                   # (1, 16)
        # TODO(synk): Dropout(0.3) is identity in eval mode; training-mode RNG
        # masking is not implemented.
        x1 = conv(x, w1_ref, b1_ref, ksize=7, stride=2, pad=3, leaky=True)   # (16, 8)
        x2 = conv(x1, w2_ref, b2_ref, ksize=3, pad=1, leaky=True)            # (32, 8)
        x2 = x2 + conv(x1, ws1_ref, bs1_ref, ksize=1)                        # (32, 8)
        x3 = conv(x2, w3_ref, b3_ref, ksize=3, pad=1, dil=2, leaky=True)     # (64, 6)
        x4 = conv(x3, w4_ref, b4_ref, ksize=3, pad=1, leaky=True)            # (32, 6)
        x4 = x4 + conv(x3, ws2_ref, bs2_ref, ksize=1)                        # (32, 6)
        x5 = conv(x4, w5_ref, b5_ref, ksize=3, pad=1, leaky=True)            # (16, 6)
        x6 = conv(x5, w6_ref, b6_ref, ksize=3, pad=1, leaky=True)            # (8, 6)

        # SelfAttention1d(8) on (C=8, L=6)
        q = jnp.dot(wq_ref[...], x6, preferred_element_type=f32) + bq        # (1, 6)
        kk = jnp.dot(wk_ref[...], x6, preferred_element_type=f32) + bk       # (1, 6)
        v = jnp.dot(wv_ref[...], x6, preferred_element_type=f32) + bv_ref[...]  # (8, 6)
        # attention[l, m] = sum_c q[c, l] * k[c, m]
        logits = jax.lax.dot_general(q, kk, (((0,), (0,)), ((), ())),
                                     preferred_element_type=f32)             # (6, 6)
        logits = logits - jnp.max(logits, axis=-1, keepdims=True)
        e = jnp.exp(logits)
        att = e * pl.reciprocal(jnp.sum(e, axis=-1, keepdims=True), approx=True)
        # out[c, l] = sum_m v[c, m] * att[l, m]
        out = jax.lax.dot_general(v, att, (((1,), (1,)), ((), ())),
                                  preferred_element_type=f32)                # (8, 6)
        xa = gamma * out + x6

        xf = conv(xa, w7_ref, b7_ref, ksize=3, pad=1)                        # (1, 6)
        feat = jnp.mean(xf, axis=-1, keepdims=True)                          # (1, 1)

        # MLP: Linear(7,128)+BN(folded)+LeakyReLU -> Linear(128,64)+BN+LeakyReLU
        #      -> Linear(64,1).  fc1 is pre-split by input source so no concat
        #      of [feat, start, end] is needed in-kernel.
        s_b = start_ref[b:b + 1, :]                                          # (1, 3)
        e_b = end_ref[b:b + 1, :]                                            # (1, 3)
        h = (feat * fc1f_ref[...]
             + jnp.dot(s_b, fc1s_ref[...], preferred_element_type=f32)
             + jnp.dot(e_b, fc1e_ref[...], preferred_element_type=f32)
             + fc1b_ref[...])                                                # (1, 128)
        h = _leaky(h)
        h = jnp.dot(h, fc2w_ref[...], preferred_element_type=f32) + fc2b_ref[...]  # (1, 64)
        h = _leaky(h)
        val = jnp.dot(h, fc3w_ref[...], preferred_element_type=f32) + fc3b_ref[...]  # (1, 1)
        o_ref[b:b + 1, :] = val.astype(o_ref.dtype)


# ----------------------------------------------------------------------------
# Wrapper: single fused pallas_call, everything VMEM-resident
# ----------------------------------------------------------------------------
def discriminator_forward(params, ray, start_point, end_point):
    B = ray.shape[0]
    args = (
        params["scalars"],
        ray.astype(jnp.float32),
        start_point.astype(jnp.float32),
        end_point.astype(jnp.float32),
        params["w1"], params["b1"], params["w2"], params["b2"],
        params["ws1"], params["bs1"], params["w3"], params["b3"],
        params["w4"], params["b4"], params["ws2"], params["bs2"],
        params["w5"], params["b5"], params["w6"], params["b6"],
        params["wq"], params["wk"], params["wv"], params["bv"],
        params["w7"], params["b7"],
        params["fc1f"], params["fc1s"], params["fc1e"], params["fc1b"],
        params["fc2w"], params["fc2b"], params["fc3w"], params["fc3b"],
    )
    in_specs = ([pl.BlockSpec(memory_space=pltpu.MemorySpace.SMEM)]
                + [pl.BlockSpec(memory_space=pltpu.MemorySpace.VMEM)] * (len(args) - 1))
    return pl.pallas_call(
        _discriminator_kernel,
        out_shape=jax.ShapeDtypeStruct((B, 1), jnp.float32),
        in_specs=in_specs,
        out_specs=pl.BlockSpec(memory_space=pltpu.MemorySpace.VMEM),
    )(*args)


# ----------------------------------------------------------------------------
# Parameters (deterministic synthetic init matching the PyTorch __init__ shapes)
# ----------------------------------------------------------------------------
def init_params(key):
    keys = iter(jax.random.split(key, 48))

    def nrm(shape, scale=0.2):
        return scale * jax.random.normal(next(keys), shape, jnp.float32)

    p = {}
    p["conv1_w"] = nrm((16, 1, 7));  p["conv1_b"] = nrm((16,))
    p["conv2_w"] = nrm((32, 16, 3)); p["conv2_b"] = nrm((32,))
    p["skip1_w"] = nrm((32, 16, 1)); p["skip1_b"] = nrm((32,))
    p["conv3_w"] = nrm((64, 32, 3)); p["conv3_b"] = nrm((64,))
    p["conv4_w"] = nrm((32, 64, 3)); p["conv4_b"] = nrm((32,))
    p["skip2_w"] = nrm((32, 64, 1)); p["skip2_b"] = nrm((32,))
    p["conv5_w"] = nrm((16, 32, 3)); p["conv5_b"] = nrm((16,))
    p["conv6_w"] = nrm((8, 16, 3));  p["conv6_b"] = nrm((8,))
    # SelfAttention1d(8): query/key conv 8 -> 1, value conv 8 -> 8 (kernel_size=1)
    p["att_wq"] = nrm((1, 8)); p["att_bq"] = nrm((1,))
    p["att_wk"] = nrm((1, 8)); p["att_bk"] = nrm((1,))
    p["att_wv"] = nrm((8, 8)); p["att_bv"] = nrm((8,))
    p["att_gamma"] = jnp.zeros((1,), jnp.float32)  # matches nn.Parameter(torch.zeros(1))
    p["conv7_w"] = nrm((1, 8, 3)); p["conv7_b"] = nrm((1,))
    # MLP: Linear(7,128) + BN(128) + Linear(128,64) + BN(64) + Linear(64,1)
    p["fc1_w"] = nrm((128, 7));  p["fc1_b"] = nrm((128,))
    p["bn1_g"] = jnp.ones((128,), jnp.float32); p["bn1_b"] = jnp.zeros((128,), jnp.float32)
    p["bn1_rm"] = jnp.zeros((128,), jnp.float32); p["bn1_rv"] = jnp.ones((128,), jnp.float32)
    p["fc2_w"] = nrm((64, 128)); p["fc2_b"] = nrm((64,))
    p["bn2_g"] = jnp.ones((64,), jnp.float32); p["bn2_b"] = jnp.zeros((64,), jnp.float32)
    p["bn2_rm"] = jnp.zeros((64,), jnp.float32); p["bn2_rv"] = jnp.ones((64,), jnp.float32)
    p["fc3_w"] = nrm((1, 64)); p["fc3_b"] = nrm((1,))
    return p


def fold_bn(w, b, gamma, beta, rmean, rvar, eps=1e-5):
    """Fold eval-mode BatchNorm1d into a preceding Linear (w: (out, in))."""
    s = gamma / jnp.sqrt(rvar + eps)
    return w * s[:, None], (b - rmean) * s + beta


def prepare_params(p):
    """One-time re-layout: conv weights -> (K, Cout, Cin), biases -> columns,
    BN folded into FC weights, FC weights pre-transposed, fc1 split by source.
    Runs once outside jit so the forward pass has zero XLA glue on params."""
    f32 = jnp.float32

    def conv_w(w):   # torch (Cout, Cin, K) -> (K, Cout, Cin)
        return jnp.transpose(w, (2, 0, 1)).astype(f32)

    def col(b):
        return b.reshape(-1, 1).astype(f32)

    def row(b):
        return b.reshape(1, -1).astype(f32)

    q = {}
    q["w1"], q["b1"] = conv_w(p["conv1_w"]), col(p["conv1_b"])
    q["w2"], q["b2"] = conv_w(p["conv2_w"]), col(p["conv2_b"])
    q["ws1"], q["bs1"] = p["skip1_w"][:, :, 0].astype(f32), col(p["skip1_b"])
    q["w3"], q["b3"] = conv_w(p["conv3_w"]), col(p["conv3_b"])
    q["w4"], q["b4"] = conv_w(p["conv4_w"]), col(p["conv4_b"])
    q["ws2"], q["bs2"] = p["skip2_w"][:, :, 0].astype(f32), col(p["skip2_b"])
    q["w5"], q["b5"] = conv_w(p["conv5_w"]), col(p["conv5_b"])
    q["w6"], q["b6"] = conv_w(p["conv6_w"]), col(p["conv6_b"])
    q["wq"] = p["att_wq"].astype(f32)
    q["wk"] = p["att_wk"].astype(f32)
    q["wv"] = p["att_wv"].astype(f32)
    q["bv"] = col(p["att_bv"])
    q["scalars"] = jnp.concatenate(
        [p["att_gamma"], p["att_bq"], p["att_bk"]]).astype(f32)      # SMEM (3,)
    q["w7"], q["b7"] = conv_w(p["conv7_w"]), col(p["conv7_b"])

    w1, b1 = fold_bn(p["fc1_w"], p["fc1_b"], p["bn1_g"], p["bn1_b"],
                     p["bn1_rm"], p["bn1_rv"])
    w1t = w1.T.astype(f32)                 # (7, 128); rows = [feat, start(3), end(3)]
    q["fc1f"] = w1t[0:1, :]
    q["fc1s"] = w1t[1:4, :]
    q["fc1e"] = w1t[4:7, :]
    q["fc1b"] = row(b1)
    w2, b2 = fold_bn(p["fc2_w"], p["fc2_b"], p["bn2_g"], p["bn2_b"],
                     p["bn2_rm"], p["bn2_rv"])
    q["fc2w"] = w2.T.astype(f32)           # (128, 64)
    q["fc2b"] = row(b2)
    q["fc3w"] = p["fc3_w"].T.astype(f32)   # (64, 1)
    q["fc3b"] = row(p["fc3_b"])
    return q


# ----------------------------------------------------------------------------
if __name__ == "__main__":
    key = jax.random.PRNGKey(0)
    pkey, rkey, skey, ekey = jax.random.split(key, 4)

    params = prepare_params(init_params(pkey))

    B, num_points = 2, 16
    ray = jax.random.normal(rkey, (B, num_points), jnp.float32)
    start_point = jax.random.normal(skey, (B, 3), jnp.float32)
    end_point = jax.random.normal(ekey, (B, 3), jnp.float32)

    fwd = jax.jit(discriminator_forward)
    out = fwd(params, ray, start_point, end_point)
    out = jax.block_until_ready(out)

    assert out.shape == (B, 1), out.shape
    assert jnp.all(jnp.isfinite(out))
    print("KERNEL_OK")
</pallas_src>

<mosaic_0001>
module attributes {stable_mosaic.version = 11 : i64} {
  func.func @_discriminator_kernel(%arg0: memref<3xf32, #tpu.memory_space<smem>>, %arg1: memref<2x16xf32, #tpu.memory_space<vmem>>, %arg2: memref<2x3xf32, #tpu.memory_space<vmem>>, %arg3: memref<2x3xf32, #tpu.memory_space<vmem>>, %arg4: memref<7x16x1xf32, #tpu.memory_space<vmem>>, %arg5: memref<16x1xf32, #tpu.memory_space<vmem>>, %arg6: memref<3x32x16xf32, #tpu.memory_space<vmem>>, %arg7: memref<32x1xf32, #tpu.memory_space<vmem>>, %arg8: memref<32x16xf32, #tpu.memory_space<vmem>>, %arg9: memref<32x1xf32, #tpu.memory_space<vmem>>, %arg10: memref<3x64x32xf32, #tpu.memory_space<vmem>>, %arg11: memref<64x1xf32, #tpu.memory_space<vmem>>, %arg12: memref<3x32x64xf32, #tpu.memory_space<vmem>>, %arg13: memref<32x1xf32, #tpu.memory_space<vmem>>, %arg14: memref<32x64xf32, #tpu.memory_space<vmem>>, %arg15: memref<32x1xf32, #tpu.memory_space<vmem>>, %arg16: memref<3x16x32xf32, #tpu.memory_space<vmem>>, %arg17: memref<16x1xf32, #tpu.memory_space<vmem>>, %arg18: memref<3x8x16xf32, #tpu.memory_space<vmem>>, %arg19: memref<8x1xf32, #tpu.memory_space<vmem>>, %arg20: memref<1x8xf32, #tpu.memory_space<vmem>>, %arg21: memref<1x8xf32, #tpu.memory_space<vmem>>, %arg22: memref<8x8xf32, #tpu.memory_space<vmem>>, %arg23: memref<8x1xf32, #tpu.memory_space<vmem>>, %arg24: memref<3x1x8xf32, #tpu.memory_space<vmem>>, %arg25: memref<1x1xf32, #tpu.memory_space<vmem>>, %arg26: memref<1x128xf32, #tpu.memory_space<vmem>>, %arg27: memref<3x128xf32, #tpu.memory_space<vmem>>, %arg28: memref<3x128xf32, #tpu.memory_space<vmem>>, %arg29: memref<1x128xf32, #tpu.memory_space<vmem>>, %arg30: memref<128x64xf32, #tpu.memory_space<vmem>>, %arg31: memref<1x64xf32, #tpu.memory_space<vmem>>, %arg32: memref<64x1xf32, #tpu.memory_space<vmem>>, %arg33: memref<1x1xf32, #tpu.memory_space<vmem>>, %arg34: memref<2x1xf32, #tpu.memory_space<vmem>>) attributes {dimension_semantics = [], scalar_prefetch = 0 : i64, scratch_operands = 0 : i64, tpu.core_type = #tpu.core_type<tc>} {
    %c0 = arith.constant 0 : index
    %0 = memref.load %arg0[%c0] : memref<3xf32, #tpu.memory_space<smem>>
    %c1 = arith.constant 1 : index
    %1 = memref.load %arg0[%c1] : memref<3xf32, #tpu.memory_space<smem>>
    %c2 = arith.constant 2 : index
    %2 = memref.load %arg0[%c2] : memref<3xf32, #tpu.memory_space<smem>>
    %c0_0 = arith.constant 0 : index
    %c0_1 = arith.constant 0 : index
    %3 = vector.load %arg1[%c0_0, %c0_1] : memref<2x16xf32, #tpu.memory_space<vmem>>, vector<1x16xf32>
    %c0_2 = arith.constant 0 : index
    %c0_3 = arith.constant 0 : index
    %c0_4 = arith.constant 0 : index
    %4 = vector.load %arg4[%c0_2, %c0_3, %c0_4] : memref<7x16x1xf32, #tpu.memory_space<vmem>>, vector<1x16x1xf32>
    %5 = vector.shape_cast %4 : vector<1x16x1xf32> to vector<16x1xf32>
    %6 = tpu.iota {dimensions = array<i32: 0>} : vector<16x8xi32>
    %7 = tpu.iota {dimensions = array<i32: 1>} : vector<16x8xi32>
    %c2_i32 = arith.constant 2 : i32
    %8 = vector.broadcast %c2_i32 : i32 to vector<16x8xi32>
    %9 = arith.muli %7, %8 : vector<16x8xi32>
    %c-3_i32 = arith.constant -3 : i32
    %10 = vector.broadcast %c-3_i32 : i32 to vector<16x8xi32>
    %11 = arith.addi %9, %10 : vector<16x8xi32>
    %12 = arith.cmpi eq, %6, %11 : vector<16x8xi32>
    %cst = arith.constant 1.000000e+00 : f32
    %cst_5 = arith.constant 0.000000e+00 : f32
    %13 = vector.broadcast %cst : f32 to vector<16x8xf32>
    %14 = vector.broadcast %cst_5 : f32 to vector<16x8xf32>
    %15 = arith.select %12, %13, %14 : vector<16x8xi1>, vector<16x8xf32>
    %cst_6 = arith.constant dense<0.000000e+00> : vector<1x8xf32>
    %16 = tpu.matmul %3, %15, %cst_6 {dimension_numbers = #tpu.dot_dimension_numbers<[1], [0], [0], [1], [0, 0, 1, 1], [], []>} : vector<1x16xf32>, vector<16x8xf32>, vector<1x8xf32> -> vector<1x8xf32>
    %cst_7 = arith.constant dense<0.000000e+00> : vector<16x8xf32>
    %17 = tpu.matmul %5, %16, %cst_7 {dimension_numbers = #tpu.dot_dimension_numbers<[1], [0], [0], [1], [0, 0, 1, 1], [], []>} : vector<16x1xf32>, vector<1x8xf32>, vector<16x8xf32> -> vector<16x8xf32>
    %c1_8 = arith.constant 1 : index
    %c0_9 = arith.constant 0 : index
    %c0_10 = arith.constant 0 : index
    %18 = vector.load %arg4[%c1_8, %c0_9, %c0_10] : memref<7x16x1xf32, #tpu.memory_space<vmem>>, vector<1x16x1xf32>
    %19 = vector.shape_cast %18 : vector<1x16x1xf32> to vector<16x1xf32>
    %20 = tpu.iota {dimensions = array<i32: 0>} : vector<16x8xi32>
    %21 = tpu.iota {dimensions = array<i32: 1>} : vector<16x8xi32>
    %c2_i32_11 = arith.constant 2 : i32
    %22 = vector.broadcast %c2_i32_11 : i32 to vector<16x8xi32>
    %23 = arith.muli %21, %22 : vector<16x8xi32>
    %c-2_i32 = arith.constant -2 : i32
    %24 = vector.broadcast %c-2_i32 : i32 to vector<16x8xi32>
    %25 = arith.addi %23, %24 : vector<16x8xi32>
    %26 = arith.cmpi eq, %20, %25 : vector<16x8xi32>
    %cst_12 = arith.constant 1.000000e+00 : f32
    %cst_13 = arith.constant 0.000000e+00 : f32
    %27 = vector.broadcast %cst_12 : f32 to vector<16x8xf32>
    %28 = vector.broadcast %cst_13 : f32 to vector<16x8xf32>
    %29 = arith.select %26, %27, %28 : vector<16x8xi1>, vector<16x8xf32>
    %cst_14 = arith.constant dense<0.000000e+00> : vector<1x8xf32>
    %30 = tpu.matmul %3, %29, %cst_14 {dimension_numbers = #tpu.dot_dimension_numbers<[1], [0], [0], [1], [0, 0, 1, 1], [], []>} : vector<1x16xf32>, vector<16x8xf32>, vector<1x8xf32> -> vector<1x8xf32>
    %cst_15 = arith.constant dense<0.000000e+00> : vector<16x8xf32>
    %31 = tpu.matmul %19, %30, %cst_15 {dimension_numbers = #tpu.dot_dimension_numbers<[1], [0], [0], [1], [0, 0, 1, 1], [], []>} : vector<16x1xf32>, vector<1x8xf32>, vector<16x8xf32> -> vector<16x8xf32>
    %32 = arith.addf %17, %31 : vector<16x8xf32>
    %c2_16 = arith.constant 2 : index
    %c0_17 = arith.constant 0 : index
    %c0_18 = arith.constant 0 : index
    %33 = vector.load %arg4[%c2_16, %c0_17, %c0_18] : memref<7x16x1xf32, #tpu.memory_space<vmem>>, vector<1x16x1xf32>
    %34 = vector.shape_cast %33 : vector<1x16x1xf32> to vector<16x1xf32>
    %35 = tpu.iota {dimensions = array<i32: 0>} : vector<16x8xi32>
    %36 = tpu.iota {dimensions = array<i32: 1>} : vector<16x8xi32>
    %c2_i32_19 = arith.constant 2 : i32
    %37 = vector.broadcast %c2_i32_19 : i32 to vector<16x8xi32>
    %38 = arith.muli %36, %37 : vector<16x8xi32>
    %c-1_i32 = arith.constant -1 : i32
    %39 = vector.broadcast %c-1_i32 : i32 to vector<16x8xi32>
    %40 = arith.addi %38, %39 : vector<16x8xi32>
    %41 = arith.cmpi eq, %35, %40 : vector<16x8xi32>
    %cst_20 = arith.constant 1.000000e+00 : f32
    %cst_21 = arith.constant 0.000000e+00 : f32
    %42 = vector.broadcast %cst_20 : f32 to vector<16x8xf32>
    %43 = vector.broadcast %cst_21 : f32 to vector<16x8xf32>
    %44 = arith.select %41, %42, %43 : vector<16x8xi1>, vector<16x8xf32>
    %cst_22 = arith.constant dense<0.000000e+00> : vector<1x8xf32>
    %45 = tpu.matmul %3, %44, %cst_22 {dimension_numbers = #tpu.dot_dimension_numbers<[1], [0], [0], [1], [0, 0, 1, 1], [], []>} : vector<1x16xf32>, vector<16x8xf32>, vector<1x8xf32> -> vector<1x8xf32>
    %cst_23 = arith.constant dense<0.000000e+00> : vector<16x8xf32>
    %46 = tpu.matmul %34, %45, %cst_23 {dimension_numbers = #tpu.dot_dimension_numbers<[1], [0], [0], [1], [0, 0, 1, 1], [], []>} : vector<16x1xf32>, vector<1x8xf32>, vector<16x8xf32> -> vector<16x8xf32>
    %47 = arith.addf %32, %46 : vector<16x8xf32>
    %c3 = arith.constant 3 : index
    %c0_24 = arith.constant 0 : index
    %c0_25 = arith.constant 0 : index
    %48 = vector.load %arg4[%c3, %c0_24, %c0_25] : memref<7x16x1xf32, #tpu.memory_space<vmem>>, vector<1x16x1xf32>
    %49 = vector.shape_cast %48 : vector<1x16x1xf32> to vector<16x1xf32>
    %50 = tpu.iota {dimensions = array<i32: 0>} : vector<16x8xi32>
    %51 = tpu.iota {dimensions = array<i32: 1>} : vector<16x8xi32>
    %c2_i32_26 = arith.constant 2 : i32
    %52 = vector.broadcast %c2_i32_26 : i32 to vector<16x8xi32>
    %53 = arith.muli %51, %52 : vector<16x8xi32>
    %c0_i32 = arith.constant 0 : i32
    %54 = vector.broadcast %c0_i32 : i32 to vector<16x8xi32>
    %55 = arith.addi %53, %54 : vector<16x8xi32>
    %56 = arith.cmpi eq, %50, %55 : vector<16x8xi32>
    %cst_27 = arith.constant 1.000000e+00 : f32
    %cst_28 = arith.constant 0.000000e+00 : f32
    %57 = vector.broadcast %cst_27 : f32 to vector<16x8xf32>
    %58 = vector.broadcast %cst_28 : f32 to vector<16x8xf32>
    %59 = arith.select %56, %57, %58 : vector<16x8xi1>, vector<16x8xf32>
    %cst_29 = arith.constant dense<0.000000e+00> : vector<1x8xf32>
    %60 = tpu.matmul %3, %59, %cst_29 {dimension_numbers = #tpu.dot_dimension_numbers<[1], [0], [0], [1], [0, 0, 1, 1], [], []>} : vector<1x16xf32>, vector<16x8xf32>, vector<1x8xf32> -> vector<1x8xf32>
    %cst_30 = arith.constant dense<0.000000e+00> : vector<16x8xf32>
    %61 = tpu.matmul %49, %60, %cst_30 {dimension_numbers = #tpu.dot_dimension_numbers<[1], [0], [0], [1], [0, 0, 1, 1], [], []>} : vector<16x1xf32>, vector<1x8xf32>, vector<16x8xf32> -> vector<16x8xf32>
    %62 = arith.addf %47, %61 : vector<16x8xf32>
    %c4 = arith.constant 4 : index
    %c0_31 = arith.constant 0 : index
    %c0_32 = arith.constant 0 : index
    %63 = vector.load %arg4[%c4, %c0_31, %c0_32] : memref<7x16x1xf32, #tpu.memory_space<vmem>>, vector<1x16x1xf32>
    %64 = vector.shape_cast %63 : vector<1x16x1xf32> to vector<16x1xf32>
    %65 = tpu.iota {dimensions = array<i32: 0>} : vector<16x8xi32>
    %66 = tpu.iota {dimensions = array<i32: 1>} : vector<16x8xi32>
    %c2_i32_33 = arith.constant 2 : i32
    %67 = vector.broadcast %c2_i32_33 : i32 to vector<16x8xi32>
    %68 = arith.muli %66, %67 : vector<16x8xi32>
    %c1_i32 = arith.constant 1 : i32
    %69 = vector.broadcast %c1_i32 : i32 to vector<16x8xi32>
    %70 = arith.addi %68, %69 : vector<16x8xi32>
    %71 = arith.cmpi eq, %65, %70 : vector<16x8xi32>
    %cst_34 = arith.constant 1.000000e+00 : f32
    %cst_35 = arith.constant 0.000000e+00 : f32
    %72 = vector.broadcast %cst_34 : f32 to vector<16x8xf32>
    %73 = vector.broadcast %cst_35 : f32 to vector<16x8xf32>
    %74 = arith.select %71, %72, %73 : vector<16x8xi1>, vector<16x8xf32>
    %cst_36 = arith.constant dense<0.000000e+00> : vector<1x8xf32>
    %75 = tpu.matmul %3, %74, %cst_36 {dimension_numbers = #tpu.dot_dimension_numbers<[1], [0], [0], [1], [0, 0, 1, 1], [], []>} : vector<1x16xf32>, vector<16x8xf32>, vector<1x8xf32> -> vector<1x8xf32>
    %cst_37 = arith.constant dense<0.000000e+00> : vector<16x8xf32>
    %76 = tpu.matmul %64, %75, %cst_37 {dimension_numbers = #tpu.dot_dimension_numbers<[1], [0], [0], [1], [0, 0, 1, 1], [], []>} : vector<16x1xf32>, vector<1x8xf32>, vector<16x8xf32> -> vector<16x8xf32>
    %77 = arith.addf %62, %76 : vector<16x8xf32>
    %c5 = arith.constant 5 : index
    %c0_38 = arith.constant 0 : index
    %c0_39 = arith.constant 0 : index
    %78 = vector.load %arg4[%c5, %c0_38, %c0_39] : memref<7x16x1xf32, #tpu.memory_space<vmem>>, vector<1x16x1xf32>
    %79 = vector.shape_cast %78 : vector<1x16x1xf32> to vector<16x1xf32>
    %80 = tpu.iota {dimensions = array<i32: 0>} : vector<16x8xi32>
    %81 = tpu.iota {dimensions = array<i32: 1>} : vector<16x8xi32>
    %c2_i32_40 = arith.constant 2 : i32
    %82 = vector.broadcast %c2_i32_40 : i32 to vector<16x8xi32>
    %83 = arith.muli %81, %82 : vector<16x8xi32>
    %c2_i32_41 = arith.constant 2 : i32
    %84 = vector.broadcast %c2_i32_41 : i32 to vector<16x8xi32>
    %85 = arith.addi %83, %84 : vector<16x8xi32>
    %86 = arith.cmpi eq, %80, %85 : vector<16x8xi32>
    %cst_42 = arith.constant 1.000000e+00 : f32
    %cst_43 = arith.constant 0.000000e+00 : f32
    %87 = vector.broadcast %cst_42 : f32 to vector<16x8xf32>
    %88 = vector.broadcast %cst_43 : f32 to vector<16x8xf32>
    %89 = arith.select %86, %87, %88 : vector<16x8xi1>, vector<16x8xf32>
    %cst_44 = arith.constant dense<0.000000e+00> : vector<1x8xf32>
    %90 = tpu.matmul %3, %89, %cst_44 {dimension_numbers = #tpu.dot_dimension_numbers<[1], [0], [0], [1], [0, 0, 1, 1], [], []>} : vector<1x16xf32>, vector<16x8xf32>, vector<1x8xf32> -> vector<1x8xf32>
    %cst_45 = arith.constant dense<0.000000e+00> : vector<16x8xf32>
    %91 = tpu.matmul %79, %90, %cst_45 {dimension_numbers = #tpu.dot_dimension_numbers<[1], [0], [0], [1], [0, 0, 1, 1], [], []>} : vector<16x1xf32>, vector<1x8xf32>, vector<16x8xf32> -> vector<16x8xf32>
    %92 = arith.addf %77, %91 : vector<16x8xf32>
    %c6 = arith.constant 6 : index
    %c0_46 = arith.constant 0 : index
    %c0_47 = arith.constant 0 : index
    %93 = vector.load %arg4[%c6, %c0_46, %c0_47] : memref<7x16x1xf32, #tpu.memory_space<vmem>>, vector<1x16x1xf32>
    %94 = vector.shape_cast %93 : vector<1x16x1xf32> to vector<16x1xf32>
    %95 = tpu.iota {dimensions = array<i32: 0>} : vector<16x8xi32>
    %96 = tpu.iota {dimensions = array<i32: 1>} : vector<16x8xi32>
    %c2_i32_48 = arith.constant 2 : i32
    %97 = vector.broadcast %c2_i32_48 : i32 to vector<16x8xi32>
    %98 = arith.muli %96, %97 : vector<16x8xi32>
    %c3_i32 = arith.constant 3 : i32
    %99 = vector.broadcast %c3_i32 : i32 to vector<16x8xi32>
    %100 = arith.addi %98, %99 : vector<16x8xi32>
    %101 = arith.cmpi eq, %95, %100 : vector<16x8xi32>
    %cst_49 = arith.constant 1.000000e+00 : f32
    %cst_50 = arith.constant 0.000000e+00 : f32
    %102 = vector.broadcast %cst_49 : f32 to vector<16x8xf32>
    %103 = vector.broadcast %cst_50 : f32 to vector<16x8xf32>
    %104 = arith.select %101, %102, %103 : vector<16x8xi1>, vector<16x8xf32>
    %cst_51 = arith.constant dense<0.000000e+00> : vector<1x8xf32>
    %105 = tpu.matmul %3, %104, %cst_51 {dimension_numbers = #tpu.dot_dimension_numbers<[1], [0], [0], [1], [0, 0, 1, 1], [], []>} : vector<1x16xf32>, vector<16x8xf32>, vector<1x8xf32> -> vector<1x8xf32>
    %cst_52 = arith.constant dense<0.000000e+00> : vector<16x8xf32>
    %106 = tpu.matmul %94, %105, %cst_52 {dimension_numbers = #tpu.dot_dimension_numbers<[1], [0], [0], [1], [0, 0, 1, 1], [], []>} : vector<16x1xf32>, vector<1x8xf32>, vector<16x8xf32> -> vector<16x8xf32>
    %107 = arith.addf %92, %106 : vector<16x8xf32>
    %c0_53 = arith.constant 0 : index
    %c0_54 = arith.constant 0 : index
    %108 = vector.load %arg5[%c0_53, %c0_54] : memref<16x1xf32, #tpu.memory_space<vmem>>, vector<16x1xf32>
    %109 = vector.broadcast %108 : vector<16x1xf32> to vector<16x8xf32>
    %110 = arith.addf %107, %109 : vector<16x8xf32>
    %cst_55 = arith.constant 0.000000e+00 : f32
    %111 = vector.broadcast %cst_55 : f32 to vector<16x8xf32>
    %112 = arith.cmpf ogt, %110, %111 : vector<16x8xf32>
    %cst_56 = arith.constant 2.000000e-01 : f32
    %113 = vector.broadcast %cst_56 : f32 to vector<16x8xf32>
    %114 = arith.mulf %113, %110 : vector<16x8xf32>
    %115 = arith.select %112, %110, %114 : vector<16x8xi1>, vector<16x8xf32>
    %c0_57 = arith.constant 0 : index
    %c0_58 = arith.constant 0 : index
    %c0_59 = arith.constant 0 : index
    %116 = vector.load %arg6[%c0_57, %c0_58, %c0_59] : memref<3x32x16xf32, #tpu.memory_space<vmem>>, vector<1x32x16xf32>
    %117 = vector.shape_cast %116 : vector<1x32x16xf32> to vector<32x16xf32>
    %118 = tpu.iota {dimensions = array<i32: 0>} : vector<8x8xi32>
    %119 = tpu.iota {dimensions = array<i32: 1>} : vector<8x8xi32>
    %c1_i32_60 = arith.constant 1 : i32
    %120 = vector.broadcast %c1_i32_60 : i32 to vector<8x8xi32>
    %121 = arith.muli %119, %120 : vector<8x8xi32>
    %c-1_i32_61 = arith.constant -1 : i32
    %122 = vector.broadcast %c-1_i32_61 : i32 to vector<8x8xi32>
    %123 = arith.addi %121, %122 : vector<8x8xi32>
    %124 = arith.cmpi eq, %118, %123 : vector<8x8xi32>
    %cst_62 = arith.constant 1.000000e+00 : f32
    %cst_63 = arith.constant 0.000000e+00 : f32
    %125 = vector.broadcast %cst_62 : f32 to vector<8x8xf32>
    %126 = vector.broadcast %cst_63 : f32 to vector<8x8xf32>
    %127 = arith.select %124, %125, %126 : vector<8x8xi1>, vector<8x8xf32>
    %cst_64 = arith.constant dense<0.000000e+00> : vector<16x8xf32>
    %128 = tpu.matmul %115, %127, %cst_64 {dimension_numbers = #tpu.dot_dimension_numbers<[1], [0], [0], [1], [0, 0, 1, 1], [], []>} : vector<16x8xf32>, vector<8x8xf32>, vector<16x8xf32> -> vector<16x8xf32>
    %cst_65 = arith.constant dense<0.000000e+00> : vector<32x8xf32>
    %129 = tpu.matmul %117, %128, %cst_65 {dimension_numbers = #tpu.dot_dimension_numbers<[1], [0], [0], [1], [0, 0, 1, 1], [], []>} : vector<32x16xf32>, vector<16x8xf32>, vector<32x8xf32> -> vector<32x8xf32>
    %c1_66 = arith.constant 1 : index
    %c0_67 = arith.constant 0 : index
    %c0_68 = arith.constant 0 : index
    %130 = vector.load %arg6[%c1_66, %c0_67, %c0_68] : memref<3x32x16xf32, #tpu.memory_space<vmem>>, vector<1x32x16xf32>
    %131 = vector.shape_cast %130 : vector<1x32x16xf32> to vector<32x16xf32>
    %cst_69 = arith.constant dense<0.000000e+00> : vector<32x8xf32>
    %132 = tpu.matmul %131, %115, %cst_69 {dimension_numbers = #tpu.dot_dimension_numbers<[1], [0], [0], [1], [0, 0, 1, 1], [], []>} : vector<32x16xf32>, vector<16x8xf32>, vector<32x8xf32> -> vector<32x8xf32>
    %133 = arith.addf %129, %132 : vector<32x8xf32>
    %c2_70 = arith.constant 2 : index
    %c0_71 = arith.constant 0 : index
    %c0_72 = arith.constant 0 : index
    %134 = vector.load %arg6[%c2_70, %c0_71, %c0_72] : memref<3x32x16xf32, #tpu.memory_space<vmem>>, vector<1x32x16xf32>
    %135 = vector.shape_cast %134 : vector<1x32x16xf32> to vector<32x16xf32>
    %136 = tpu.iota {dimensions = array<i32: 0>} : vector<8x8xi32>
    %137 = tpu.iota {dimensions = array<i32: 1>} : vector<8x8xi32>
    %c1_i32_73 = arith.constant 1 : i32
    %138 = vector.broadcast %c1_i32_73 : i32 to vector<8x8xi32>
    %139 = arith.muli %137, %138 : vector<8x8xi32>
    %c1_i32_74 = arith.constant 1 : i32
    %140 = vector.broadcast %c1_i32_74 : i32 to vector<8x8xi32>
    %141 = arith.addi %139, %140 : vector<8x8xi32>
    %142 = arith.cmpi eq, %136, %141 : vector<8x8xi32>
    %cst_75 = arith.constant 1.000000e+00 : f32
    %cst_76 = arith.constant 0.000000e+00 : f32
    %143 = vector.broadcast %cst_75 : f32 to vector<8x8xf32>
    %144 = vector.broadcast %cst_76 : f32 to vector<8x8xf32>
    %145 = arith.select %142, %143, %144 : vector<8x8xi1>, vector<8x8xf32>
    %cst_77 = arith.constant dense<0.000000e+00> : vector<16x8xf32>
    %146 = tpu.matmul %115, %145, %cst_77 {dimension_numbers = #tpu.dot_dimension_numbers<[1], [0], [0], [1], [0, 0, 1, 1], [], []>} : vector<16x8xf32>, vector<8x8xf32>, vector<16x8xf32> -> vector<16x8xf32>
    %cst_78 = arith.constant dense<0.000000e+00> : vector<32x8xf32>
    %147 = tpu.matmul %135, %146, %cst_78 {dimension_numbers = #tpu.dot_dimension_numbers<[1], [0], [0], [1], [0, 0, 1, 1], [], []>} : vector<32x16xf32>, vector<16x8xf32>, vector<32x8xf32> -> vector<32x8xf32>
    %148 = arith.addf %133, %147 : vector<32x8xf32>
    %c0_79 = arith.constant 0 : index
    %c0_80 = arith.constant 0 : index
    %149 = vector.load %arg7[%c0_79, %c0_80] : memref<32x1xf32, #tpu.memory_space<vmem>>, vector<32x1xf32>
    %150 = vector.broadcast %149 : vector<32x1xf32> to vector<32x8xf32>
    %151 = arith.addf %148, %150 : vector<32x8xf32>
    %cst_81 = arith.constant 0.000000e+00 : f32
    %152 = vector.broadcast %cst_81 : f32 to vector<32x8xf32>
    %153 = arith.cmpf ogt, %151, %152 : vector<32x8xf32>
    %cst_82 = arith.constant 2.000000e-01 : f32
    %154 = vector.broadcast %cst_82 : f32 to vector<32x8xf32>
    %155 = arith.mulf %154, %151 : vector<32x8xf32>
    %156 = arith.select %153, %151, %155 : vector<32x8xi1>, vector<32x8xf32>
    %c0_83 = arith.constant 0 : index
    %c0_84 = arith.constant 0 : index
    %157 = vector.load %arg8[%c0_83, %c0_84] : memref<32x16xf32, #tpu.memory_space<vmem>>, vector<32x16xf32>
    %cst_85 = arith.constant dense<0.000000e+00> : vector<32x8xf32>
    %158 = tpu.matmul %157, %115, %cst_85 {dimension_numbers = #tpu.dot_dimension_numbers<[1], [0], [0], [1], [0, 0, 1, 1], [], []>} : vector<32x16xf32>, vector<16x8xf32>, vector<32x8xf32> -> vector<32x8xf32>
    %c0_86 = arith.constant 0 : index
    %c0_87 = arith.constant 0 : index
    %159 = vector.load %arg9[%c0_86, %c0_87] : memref<32x1xf32, #tpu.memory_space<vmem>>, vector<32x1xf32>
    %160 = vector.broadcast %159 : vector<32x1xf32> to vector<32x8xf32>
    %161 = arith.addf %158, %160 : vector<32x8xf32>
    %162 = arith.addf %156, %161 : vector<32x8xf32>
    %c0_88 = arith.constant 0 : index
    %c0_89 = arith.constant 0 : index
    %c0_90 = arith.constant 0 : index
    %163 = vector.load %arg10[%c0_88, %c0_89, %c0_90] : memref<3x64x32xf32, #tpu.memory_space<vmem>>, vector<1x64x32xf32>
    %164 = vector.shape_cast %163 : vector<1x64x32xf32> to vector<64x32xf32>
    %165 = tpu.iota {dimensions = array<i32: 0>} : vector<8x6xi32>
    %166 = tpu.iota {dimensions = array<i32: 1>} : vector<8x6xi32>
    %c1_i32_91 = arith.constant 1 : i32
    %167 = vector.broadcast %c1_i32_91 : i32 to vector<8x6xi32>
    %168 = arith.muli %166, %167 : vector<8x6xi32>
    %c-1_i32_92 = arith.constant -1 : i32
    %169 = vector.broadcast %c-1_i32_92 : i32 to vector<8x6xi32>
    %170 = arith.addi %168, %169 : vector<8x6xi32>
    %171 = arith.cmpi eq, %165, %170 : vector<8x6xi32>
    %cst_93 = arith.constant 1.000000e+00 : f32
    %cst_94 = arith.constant 0.000000e+00 : f32
    %172 = vector.broadcast %cst_93 : f32 to vector<8x6xf32>
    %173 = vector.broadcast %cst_94 : f32 to vector<8x6xf32>
    %174 = arith.select %171, %172, %173 : vector<8x6xi1>, vector<8x6xf32>
    %cst_95 = arith.constant dense<0.000000e+00> : vector<32x6xf32>
    %175 = tpu.matmul %162, %174, %cst_95 {dimension_numbers = #tpu.dot_dimension_numbers<[1], [0], [0], [1], [0, 0, 1, 1], [], []>} : vector<32x8xf32>, vector<8x6xf32>, vector<32x6xf32> -> vector<32x6xf32>
    %cst_96 = arith.constant dense<0.000000e+00> : vector<64x6xf32>
    %176 = tpu.matmul %164, %175, %cst_96 {dimension_numbers = #tpu.dot_dimension_numbers<[1], [0], [0], [1], [0, 0, 1, 1], [], []>} : vector<64x32xf32>, vector<32x6xf32>, vector<64x6xf32> -> vector<64x6xf32>
    %c1_97 = arith.constant 1 : index
    %c0_98 = arith.constant 0 : index
    %c0_99 = arith.constant 0 : index
    %177 = vector.load %arg10[%c1_97, %c0_98, %c0_99] : memref<3x64x32xf32, #tpu.memory_space<vmem>>, vector<1x64x32xf32>
    %178 = vector.shape_cast %177 : vector<1x64x32xf32> to vector<64x32xf32>
    %179 = tpu.iota {dimensions = array<i32: 0>} : vector<8x6xi32>
    %180 = tpu.iota {dimensions = array<i32: 1>} : vector<8x6xi32>
    %c1_i32_100 = arith.constant 1 : i32
    %181 = vector.broadcast %c1_i32_100 : i32 to vector<8x6xi32>
    %182 = arith.muli %180, %181 : vector<8x6xi32>
    %c1_i32_101 = arith.constant 1 : i32
    %183 = vector.broadcast %c1_i32_101 : i32 to vector<8x6xi32>
    %184 = arith.addi %182, %183 : vector<8x6xi32>
    %185 = arith.cmpi eq, %179, %184 : vector<8x6xi32>
    %cst_102 = arith.constant 1.000000e+00 : f32
    %cst_103 = arith.constant 0.000000e+00 : f32
    %186 = vector.broadcast %cst_102 : f32 to vector<8x6xf32>
    %187 = vector.broadcast %cst_103 : f32 to vector<8x6xf32>
    %188 = arith.select %185, %186, %187 : vector<8x6xi1>, vector<8x6xf32>
    %cst_104 = arith.constant dense<0.000000e+00> : vector<32x6xf32>
    %189 = tpu.matmul %162, %188, %cst_104 {dimension_numbers = #tpu.dot_dimension_numbers<[1], [0], [0], [1], [0, 0, 1, 1], [], []>} : vector<32x8xf32>, vector<8x6xf32>, vector<32x6xf32> -> vector<32x6xf32>
    %cst_105 = arith.constant dense<0.000000e+00> : vector<64x6xf32>
    %190 = tpu.matmul %178, %189, %cst_105 {dimension_numbers = #tpu.dot_dimension_numbers<[1], [0], [0], [1], [0, 0, 1, 1], [], []>} : vector<64x32xf32>, vector<32x6xf32>, vector<64x6xf32> -> vector<64x6xf32>
    %191 = arith.addf %176, %190 : vector<64x6xf32>
    %c2_106 = arith.constant 2 : index
    %c0_107 = arith.constant 0 : index
    %c0_108 = arith.constant 0 : index
    %192 = vector.load %arg10[%c2_106, %c0_107, %c0_108] : memref<3x64x32xf32, #tpu.memory_space<vmem>>, vector<1x64x32xf32>
    %193 = vector.shape_cast %192 : vector<1x64x32xf32> to vector<64x32xf32>
    %194 = tpu.iota {dimensions = array<i32: 0>} : vector<8x6xi32>
    %195 = tpu.iota {dimensions = array<i32: 1>} : vector<8x6xi32>
    %c1_i32_109 = arith.constant 1 : i32
    %196 = vector.broadcast %c1_i32_109 : i32 to vector<8x6xi32>
    %197 = arith.muli %195, %196 : vector<8x6xi32>
    %c3_i32_110 = arith.constant 3 : i32
    %198 = vector.broadcast %c3_i32_110 : i32 to vector<8x6xi32>
    %199 = arith.addi %197, %198 : vector<8x6xi32>
    %200 = arith.cmpi eq, %194, %199 : vector<8x6xi32>
    %cst_111 = arith.constant 1.000000e+00 : f32
    %cst_112 = arith.constant 0.000000e+00 : f32
    %201 = vector.broadcast %cst_111 : f32 to vector<8x6xf32>
    %202 = vector.broadcast %cst_112 : f32 to vector<8x6xf32>
    %203 = arith.select %200, %201, %202 : vector<8x6xi1>, vector<8x6xf32>
    %cst_113 = arith.constant dense<0.000000e+00> : vector<32x6xf32>
    %204 = tpu.matmul %162, %203, %cst_113 {dimension_numbers = #tpu.dot_dimension_numbers<[1], [0], [0], [1], [0, 0, 1, 1], [], []>} : vector<32x8xf32>, vector<8x6xf32>, vector<32x6xf32> -> vector<32x6xf32>
    %cst_114 = arith.constant dense<0.000000e+00> : vector<64x6xf32>
    %205 = tpu.matmul %193, %204, %cst_114 {dimension_numbers = #tpu.dot_dimension_numbers<[1], [0], [0], [1], [0, 0, 1, 1], [], []>} : vector<64x32xf32>, vector<32x6xf32>, vector<64x6xf32> -> vector<64x6xf32>
    %206 = arith.addf %191, %205 : vector<64x6xf32>
    %c0_115 = arith.constant 0 : index
    %c0_116 = arith.constant 0 : index
    %207 = vector.load %arg11[%c0_115, %c0_116] : memref<64x1xf32, #tpu.memory_space<vmem>>, vector<64x1xf32>
    %208 = vector.broadcast %207 : vector<64x1xf32> to vector<64x6xf32>
    %209 = arith.addf %206, %208 : vector<64x6xf32>
    %cst_117 = arith.constant 0.000000e+00 : f32
    %210 = vector.broadcast %cst_117 : f32 to vector<64x6xf32>
    %211 = arith.cmpf ogt, %209, %210 : vector<64x6xf32>
    %cst_118 = arith.constant 2.000000e-01 : f32
    %212 = vector.broadcast %cst_118 : f32 to vector<64x6xf32>
    %213 = arith.mulf %212, %209 : vector<64x6xf32>
    %214 = arith.select %211, %209, %213 : vector<64x6xi1>, vector<64x6xf32>
    %c0_119 = arith.constant 0 : index
    %c0_120 = arith.constant 0 : index
    %c0_121 = arith.constant 0 : index
    %215 = vector.load %arg12[%c0_119, %c0_120, %c0_121] : memref<3x32x64xf32, #tpu.memory_space<vmem>>, vector<1x32x64xf32>
    %216 = vector.shape_cast %215 : vector<1x32x64xf32> to vector<32x64xf32>
    %217 = tpu.iota {dimensions = array<i32: 0>} : vector<6x6xi32>
    %218 = tpu.iota {dimensions = array<i32: 1>} : vector<6x6xi32>
    %c1_i32_122 = arith.constant 1 : i32
    %219 = vector.broadcast %c1_i32_122 : i32 to vector<6x6xi32>
    %220 = arith.muli %218, %219 : vector<6x6xi32>
    %c-1_i32_123 = arith.constant -1 : i32
    %221 = vector.broadcast %c-1_i32_123 : i32 to vector<6x6xi32>
    %222 = arith.addi %220, %221 : vector<6x6xi32>
    %223 = arith.cmpi eq, %217, %222 : vector<6x6xi32>
    %cst_124 = arith.constant 1.000000e+00 : f32
    %cst_125 = arith.constant 0.000000e+00 : f32
    %224 = vector.broadcast %cst_124 : f32 to vector<6x6xf32>
    %225 = vector.broadcast %cst_125 : f32 to vector<6x6xf32>
    %226 = arith.select %223, %224, %225 : vector<6x6xi1>, vector<6x6xf32>
    %cst_126 = arith.constant dense<0.000000e+00> : vector<64x6xf32>
    %227 = tpu.matmul %214, %226, %cst_126 {dimension_numbers = #tpu.dot_dimension_numbers<[1], [0], [0], [1], [0, 0, 1, 1], [], []>} : vector<64x6xf32>, vector<6x6xf32>, vector<64x6xf32> -> vector<64x6xf32>
    %cst_127 = arith.constant dense<0.000000e+00> : vector<32x6xf32>
    %228 = tpu.matmul %216, %227, %cst_127 {dimension_numbers = #tpu.dot_dimension_numbers<[1], [0], [0], [1], [0, 0, 1, 1], [], []>} : vector<32x64xf32>, vector<64x6xf32>, vector<32x6xf32> -> vector<32x6xf32>
    %c1_128 = arith.constant 1 : index
    %c0_129 = arith.constant 0 : index
    %c0_130 = arith.constant 0 : index
    %229 = vector.load %arg12[%c1_128, %c0_129, %c0_130] : memref<3x32x64xf32, #tpu.memory_space<vmem>>, vector<1x32x64xf32>
    %230 = vector.shape_cast %229 : vector<1x32x64xf32> to vector<32x64xf32>
    %cst_131 = arith.constant dense<0.000000e+00> : vector<32x6xf32>
    %231 = tpu.matmul %230, %214, %cst_131 {dimension_numbers = #tpu.dot_dimension_numbers<[1], [0], [0], [1], [0, 0, 1, 1], [], []>} : vector<32x64xf32>, vector<64x6xf32>, vector<32x6xf32> -> vector<32x6xf32>
    %232 = arith.addf %228, %231 : vector<32x6xf32>
    %c2_132 = arith.constant 2 : index
    %c0_133 = arith.constant 0 : index
    %c0_134 = arith.constant 0 : index
    %233 = vector.load %arg12[%c2_132, %c0_133, %c0_134] : memref<3x32x64xf32, #tpu.memory_space<vmem>>, vector<1x32x64xf32>
    %234 = vector.shape_cast %233 : vector<1x32x64xf32> to vector<32x64xf32>
    %235 = tpu.iota {dimensions = array<i32: 0>} : vector<6x6xi32>
    %236 = tpu.iota {dimensions = array<i32: 1>} : vector<6x6xi32>
    %c1_i32_135 = arith.constant 1 : i32
    %237 = vector.broadcast %c1_i32_135 : i32 to vector<6x6xi32>
    %238 = arith.muli %236, %237 : vector<6x6xi32>
    %c1_i32_136 = arith.constant 1 : i32
    %239 = vector.broadcast %c1_i32_136 : i32 to vector<6x6xi32>
    %240 = arith.addi %238, %239 : vector<6x6xi32>
    %241 = arith.cmpi eq, %235, %240 : vector<6x6xi32>
    %cst_137 = arith.constant 1.000000e+00 : f32
    %cst_138 = arith.constant 0.000000e+00 : f32
    %242 = vector.broadcast %cst_137 : f32 to vector<6x6xf32>
    %243 = vector.broadcast %cst_138 : f32 to vector<6x6xf32>
    %244 = arith.select %241, %242, %243 : vector<6x6xi1>, vector<6x6xf32>
    %cst_139 = arith.constant dense<0.000000e+00> : vector<64x6xf32>
    %245 = tpu.matmul %214, %244, %cst_139 {dimension_numbers = #tpu.dot_dimension_numbers<[1], [0], [0], [1], [0, 0, 1, 1], [], []>} : vector<64x6xf32>, vector<6x6xf32>, vector<64x6xf32> -> vector<64x6xf32>
    %cst_140 = arith.constant dense<0.000000e+00> : vector<32x6xf32>
    %246 = tpu.matmul %234, %245, %cst_140 {dimension_numbers = #tpu.dot_dimension_numbers<[1], [0], [0], [1], [0, 0, 1, 1], [], []>} : vector<32x64xf32>, vector<64x6xf32>, vector<32x6xf32> -> vector<32x6xf32>
    %247 = arith.addf %232, %246 : vector<32x6xf32>
    %c0_141 = arith.constant 0 : index
    %c0_142 = arith.constant 0 : index
    %248 = vector.load %arg13[%c0_141, %c0_142] : memref<32x1xf32, #tpu.memory_space<vmem>>, vector<32x1xf32>
    %249 = vector.broadcast %248 : vector<32x1xf32> to vector<32x6xf32>
    %250 = arith.addf %247, %249 : vector<32x6xf32>
    %cst_143 = arith.constant 0.000000e+00 : f32
    %251 = vector.broadcast %cst_143 : f32 to vector<32x6xf32>
    %252 = arith.cmpf ogt, %250, %251 : vector<32x6xf32>
    %cst_144 = arith.constant 2.000000e-01 : f32
    %253 = vector.broadcast %cst_144 : f32 to vector<32x6xf32>
    %254 = arith.mulf %253, %250 : vector<32x6xf32>
    %255 = arith.select %252, %250, %254 : vector<32x6xi1>, vector<32x6xf32>
    %c0_145 = arith.constant 0 : index
    %c0_146 = arith.constant 0 : index
    %256 = vector.load %arg14[%c0_145, %c0_146] : memref<32x64xf32, #tpu.memory_space<vmem>>, vector<32x64xf32>
    %cst_147 = arith.constant dense<0.000000e+00> : vector<32x6xf32>
    %257 = tpu.matmul %256, %214, %cst_147 {dimension_numbers = #tpu.dot_dimension_numbers<[1], [0], [0], [1], [0, 0, 1, 1], [], []>} : vector<32x64xf32>, vector<64x6xf32>, vector<32x6xf32> -> vector<32x6xf32>
    %c0_148 = arith.constant 0 : index
    %c0_149 = arith.constant 0 : index
    %258 = vector.load %arg15[%c0_148, %c0_149] : memref<32x1xf32, #tpu.memory_space<vmem>>, vector<32x1xf32>
    %259 = vector.broadcast %258 : vector<32x1xf32> to vector<32x6xf32>
    %260 = arith.addf %257, %259 : vector<32x6xf32>
    %261 = arith.addf %255, %260 : vector<32x6xf32>
    %c0_150 = arith.constant 0 : index
    %c0_151 = arith.constant 0 : index
    %c0_152 = arith.constant 0 : index
    %262 = vector.load %arg16[%c0_150, %c0_151, %c0_152] : memref<3x16x32xf32, #tpu.memory_space<vmem>>, vector<1x16x32xf32>
    %263 = vector.shape_cast %262 : vector<1x16x32xf32> to vector<16x32xf32>
    %cst_153 = arith.constant dense<0.000000e+00> : vector<32x6xf32>
    %264 = tpu.matmul %261, %226, %cst_153 {dimension_numbers = #tpu.dot_dimension_numbers<[1], [0], [0], [1], [0, 0, 1, 1], [], []>} : vector<32x6xf32>, vector<6x6xf32>, vector<32x6xf32> -> vector<32x6xf32>
    %cst_154 = arith.constant dense<0.000000e+00> : vector<16x6xf32>
    %265 = tpu.matmul %263, %264, %cst_154 {dimension_numbers = #tpu.dot_dimension_numbers<[1], [0], [0], [1], [0, 0, 1, 1], [], []>} : vector<16x32xf32>, vector<32x6xf32>, vector<16x6xf32> -> vector<16x6xf32>
    %c1_155 = arith.constant 1 : index
    %c0_156 = arith.constant 0 : index
    %c0_157 = arith.constant 0 : index
    %266 = vector.load %arg16[%c1_155, %c0_156, %c0_157] : memref<3x16x32xf32, #tpu.memory_space<vmem>>, vector<1x16x32xf32>
    %267 = vector.shape_cast %266 : vector<1x16x32xf32> to vector<16x32xf32>
    %cst_158 = arith.constant dense<0.000000e+00> : vector<16x6xf32>
    %268 = tpu.matmul %267, %261, %cst_158 {dimension_numbers = #tpu.dot_dimension_numbers<[1], [0], [0], [1], [0, 0, 1, 1], [], []>} : vector<16x32xf32>, vector<32x6xf32>, vector<16x6xf32> -> vector<16x6xf32>
    %269 = arith.addf %265, %268 : vector<16x6xf32>
    %c2_159 = arith.constant 2 : index
    %c0_160 = arith.constant 0 : index
    %c0_161 = arith.constant 0 : index
    %270 = vector.load %arg16[%c2_159, %c0_160, %c0_161] : memref<3x16x32xf32, #tpu.memory_space<vmem>>, vector<1x16x32xf32>
    %271 = vector.shape_cast %270 : vector<1x16x32xf32> to vector<16x32xf32>
    %cst_162 = arith.constant dense<0.000000e+00> : vector<32x6xf32>
    %272 = tpu.matmul %261, %244, %cst_162 {dimension_numbers = #tpu.dot_dimension_numbers<[1], [0], [0], [1], [0, 0, 1, 1], [], []>} : vector<32x6xf32>, vector<6x6xf32>, vector<32x6xf32> -> vector<32x6xf32>
    %cst_163 = arith.constant dense<0.000000e+00> : vector<16x6xf32>
    %273 = tpu.matmul %271, %272, %cst_163 {dimension_numbers = #tpu.dot_dimension_numbers<[1], [0], [0], [1], [0, 0, 1, 1], [], []>} : vector<16x32xf32>, vector<32x6xf32>, vector<16x6xf32> -> vector<16x6xf32>
    %274 = arith.addf %269, %273 : vector<16x6xf32>
    %c0_164 = arith.constant 0 : index
    %c0_165 = arith.constant 0 : index
    %275 = vector.load %arg17[%c0_164, %c0_165] : memref<16x1xf32, #tpu.memory_space<vmem>>, vector<16x1xf32>
    %276 = vector.broadcast %275 : vector<16x1xf32> to vector<16x6xf32>
    %277 = arith.addf %274, %276 : vector<16x6xf32>
    %cst_166 = arith.constant 0.000000e+00 : f32
    %278 = vector.broadcast %cst_166 : f32 to vector<16x6xf32>
    %279 = arith.cmpf ogt, %277, %278 : vector<16x6xf32>
    %cst_167 = arith.constant 2.000000e-01 : f32
    %280 = vector.broadcast %cst_167 : f32 to vector<16x6xf32>
    %281 = arith.mulf %280, %277 : vector<16x6xf32>
    %282 = arith.select %279, %277, %281 : vector<16x6xi1>, vector<16x6xf32>
    %c0_168 = arith.constant 0 : index
    %c0_169 = arith.constant 0 : index
    %c0_170 = arith.constant 0 : index
    %283 = vector.load %arg18[%c0_168, %c0_169, %c0_170] : memref<3x8x16xf32, #tpu.memory_space<vmem>>, vector<1x8x16xf32>
    %284 = vector.shape_cast %283 : vector<1x8x16xf32> to vector<8x16xf32>
    %cst_171 = arith.constant dense<0.000000e+00> : vector<16x6xf32>
    %285 = tpu.matmul %282, %226, %cst_171 {dimension_numbers = #tpu.dot_dimension_numbers<[1], [0], [0], [1], [0, 0, 1, 1], [], []>} : vector<16x6xf32>, vector<6x6xf32>, vector<16x6xf32> -> vector<16x6xf32>
    %cst_172 = arith.constant dense<0.000000e+00> : vector<8x6xf32>
    %286 = tpu.matmul %284, %285, %cst_172 {dimension_numbers = #tpu.dot_dimension_numbers<[1], [0], [0], [1], [0, 0, 1, 1], [], []>} : vector<8x16xf32>, vector<16x6xf32>, vector<8x6xf32> -> vector<8x6xf32>
    %c1_173 = arith.constant 1 : index
    %c0_174 = arith.constant 0 : index
    %c0_175 = arith.constant 0 : index
    %287 = vector.load %arg18[%c1_173, %c0_174, %c0_175] : memref<3x8x16xf32, #tpu.memory_space<vmem>>, vector<1x8x16xf32>
    %288 = vector.shape_cast %287 : vector<1x8x16xf32> to vector<8x16xf32>
    %cst_176 = arith.constant dense<0.000000e+00> : vector<8x6xf32>
    %289 = tpu.matmul %288, %282, %cst_176 {dimension_numbers = #tpu.dot_dimension_numbers<[1], [0], [0], [1], [0, 0, 1, 1], [], []>} : vector<8x16xf32>, vector<16x6xf32>, vector<8x6xf32> -> vector<8x6xf32>
    %290 = arith.addf %286, %289 : vector<8x6xf32>
    %c2_177 = arith.constant 2 : index
    %c0_178 = arith.constant 0 : index
    %c0_179 = arith.constant 0 : index
    %291 = vector.load %arg18[%c2_177, %c0_178, %c0_179] : memref<3x8x16xf32, #tpu.memory_space<vmem>>, vector<1x8x16xf32>
    %292 = vector.shape_cast %291 : vector<1x8x16xf32> to vector<8x16xf32>
    %cst_180 = arith.constant dense<0.000000e+00> : vector<16x6xf32>
    %293 = tpu.matmul %282, %244, %cst_180 {dimension_numbers = #tpu.dot_dimension_numbers<[1], [0], [0], [1], [0, 0, 1, 1], [], []>} : vector<16x6xf32>, vector<6x6xf32>, vector<16x6xf32> -> vector<16x6xf32>
    %cst_181 = arith.constant dense<0.000000e+00> : vector<8x6xf32>
    %294 = tpu.matmul %292, %293, %cst_181 {dimension_numbers = #tpu.dot_dimension_numbers<[1], [0], [0], [1], [0, 0, 1, 1], [], []>} : vector<8x16xf32>, vector<16x6xf32>, vector<8x6xf32> -> vector<8x6xf32>
    %295 = arith.addf %290, %294 : vector<8x6xf32>
    %c0_182 = arith.constant 0 : index
    %c0_183 = arith.constant 0 : index
    %296 = vector.load %arg19[%c0_182, %c0_183] : memref<8x1xf32, #tpu.memory_space<vmem>>, vector<8x1xf32>
    %297 = vector.broadcast %296 : vector<8x1xf32> to vector<8x6xf32>
    %298 = arith.addf %295, %297 : vector<8x6xf32>
    %cst_184 = arith.constant 0.000000e+00 : f32
    %299 = vector.broadcast %cst_184 : f32 to vector<8x6xf32>
    %300 = arith.cmpf ogt, %298, %299 : vector<8x6xf32>
    %cst_185 = arith.constant 2.000000e-01 : f32
    %301 = vector.broadcast %cst_185 : f32 to vector<8x6xf32>
    %302 = arith.mulf %301, %298 : vector<8x6xf32>
    %303 = arith.select %300, %298, %302 : vector<8x6xi1>, vector<8x6xf32>
    %c0_186 = arith.constant 0 : index
    %c0_187 = arith.constant 0 : index
    %304 = vector.load %arg20[%c0_186, %c0_187] : memref<1x8xf32, #tpu.memory_space<vmem>>, vector<1x8xf32>
    %cst_188 = arith.constant dense<0.000000e+00> : vector<1x6xf32>
    %305 = tpu.matmul %304, %303, %cst_188 {dimension_numbers = #tpu.dot_dimension_numbers<[1], [0], [0], [1], [0, 0, 1, 1], [], []>} : vector<1x8xf32>, vector<8x6xf32>, vector<1x6xf32> -> vector<1x6xf32>
    %306 = vector.broadcast %1 : f32 to vector<1x6xf32>
    %307 = arith.addf %305, %306 : vector<1x6xf32>
    %c0_189 = arith.constant 0 : index
    %c0_190 = arith.constant 0 : index
    %308 = vector.load %arg21[%c0_189, %c0_190] : memref<1x8xf32, #tpu.memory_space<vmem>>, vector<1x8xf32>
    %cst_191 = arith.constant dense<0.000000e+00> : vector<1x6xf32>
    %309 = tpu.matmul %308, %303, %cst_191 {dimension_numbers = #tpu.dot_dimension_numbers<[1], [0], [0], [1], [0, 0, 1, 1], [], []>} : vector<1x8xf32>, vector<8x6xf32>, vector<1x6xf32> -> vector<1x6xf32>
    %310 = vector.broadcast %2 : f32 to vector<1x6xf32>
    %311 = arith.addf %309, %310 : vector<1x6xf32>
    %c0_192 = arith.constant 0 : index
    %c0_193 = arith.constant 0 : index
    %312 = vector.load %arg22[%c0_192, %c0_193] : memref<8x8xf32, #tpu.memory_space<vmem>>, vector<8x8xf32>
    %cst_194 = arith.constant dense<0.000000e+00> : vector<8x6xf32>
    %313 = tpu.matmul %312, %303, %cst_194 {dimension_numbers = #tpu.dot_dimension_numbers<[1], [0], [0], [1], [0, 0, 1, 1], [], []>} : vector<8x8xf32>, vector<8x6xf32>, vector<8x6xf32> -> vector<8x6xf32>
    %c0_195 = arith.constant 0 : index
    %c0_196 = arith.constant 0 : index
    %314 = vector.load %arg23[%c0_195, %c0_196] : memref<8x1xf32, #tpu.memory_space<vmem>>, vector<8x1xf32>
    %315 = vector.broadcast %314 : vector<8x1xf32> to vector<8x6xf32>
    %316 = arith.addf %313, %315 : vector<8x6xf32>
    %cst_197 = arith.constant dense<0.000000e+00> : vector<6x6xf32>
    %317 = tpu.matmul %307, %311, %cst_197 {dimension_numbers = #tpu.dot_dimension_numbers<[0], [0], [1], [1], [0, 1, 1, 1], [], []>} : vector<1x6xf32>, vector<1x6xf32>, vector<6x6xf32> -> vector<6x6xf32>
    %cst_198 = arith.constant dense<0xFF800000> : vector<6xf32>
    %318 = vector.multi_reduction <maximumf>, %317, %cst_198 [1] : vector<6x6xf32> to vector<6xf32>
    %319 = vector.shape_cast %318 : vector<6xf32> to vector<6x1xf32>
    %320 = vector.broadcast %319 : vector<6x1xf32> to vector<6x6xf32>
    %321 = arith.subf %317, %320 : vector<6x6xf32>
    %322 = math.exp %321 : vector<6x6xf32>
    %cst_199 = arith.constant dense<0.000000e+00> : vector<6xf32>
    %323 = vector.multi_reduction <add>, %322, %cst_199 [1] : vector<6x6xf32> to vector<6xf32>
    %324 = vector.shape_cast %323 : vector<6xf32> to vector<6x1xf32>
    %325 = tpu.reciprocal %324 {approx = true} : vector<6x1xf32> -> vector<6x1xf32>
    %326 = vector.broadcast %325 : vector<6x1xf32> to vector<6x6xf32>
    %327 = arith.mulf %322, %326 : vector<6x6xf32>
    %cst_200 = arith.constant dense<0.000000e+00> : vector<8x6xf32>
    %328 = tpu.matmul %316, %327, %cst_200 {dimension_numbers = #tpu.dot_dimension_numbers<[1], [1], [0], [0], [0, 0, 1, 0], [], []>} : vector<8x6xf32>, vector<6x6xf32>, vector<8x6xf32> -> vector<8x6xf32>
    %329 = vector.broadcast %0 : f32 to vector<8x6xf32>
    %330 = arith.mulf %329, %328 : vector<8x6xf32>
    %331 = arith.addf %330, %303 : vector<8x6xf32>
    %c0_201 = arith.constant 0 : index
    %c0_202 = arith.constant 0 : index
    %c0_203 = arith.constant 0 : index
    %332 = vector.load %arg24[%c0_201, %c0_202, %c0_203] : memref<3x1x8xf32, #tpu.memory_space<vmem>>, vector<1x1x8xf32>
    %333 = vector.shape_cast %332 : vector<1x1x8xf32> to vector<1x8xf32>
    %cst_204 = arith.constant dense<0.000000e+00> : vector<8x6xf32>
    %334 = tpu.matmul %331, %226, %cst_204 {dimension_numbers = #tpu.dot_dimension_numbers<[1], [0], [0], [1], [0, 0, 1, 1], [], []>} : vector<8x6xf32>, vector<6x6xf32>, vector<8x6xf32> -> vector<8x6xf32>
    %cst_205 = arith.constant dense<0.000000e+00> : vector<1x6xf32>
    %335 = tpu.matmul %333, %334, %cst_205 {dimension_numbers = #tpu.dot_dimension_numbers<[1], [0], [0], [1], [0, 0, 1, 1], [], []>} : vector<1x8xf32>, vector<8x6xf32>, vector<1x6xf32> -> vector<1x6xf32>
    %c1_206 = arith.constant 1 : index
    %c0_207 = arith.constant 0 : index
    %c0_208 = arith.constant 0 : index
    %336 = vector.load %arg24[%c1_206, %c0_207, %c0_208] : memref<3x1x8xf32, #tpu.memory_space<vmem>>, vector<1x1x8xf32>
    %337 = vector.shape_cast %336 : vector<1x1x8xf32> to vector<1x8xf32>
    %cst_209 = arith.constant dense<0.000000e+00> : vector<1x6xf32>
    %338 = tpu.matmul %337, %331, %cst_209 {dimension_numbers = #tpu.dot_dimension_numbers<[1], [0], [0], [1], [0, 0, 1, 1], [], []>} : vector<1x8xf32>, vector<8x6xf32>, vector<1x6xf32> -> vector<1x6xf32>
    %339 = arith.addf %335, %338 : vector<1x6xf32>
    %c2_210 = arith.constant 2 : index
    %c0_211 = arith.constant 0 : index
    %c0_212 = arith.constant 0 : index
    %340 = vector.load %arg24[%c2_210, %c0_211, %c0_212] : memref<3x1x8xf32, #tpu.memory_space<vmem>>, vector<1x1x8xf32>
    %341 = vector.shape_cast %340 : vector<1x1x8xf32> to vector<1x8xf32>
    %cst_213 = arith.constant dense<0.000000e+00> : vector<8x6xf32>
    %342 = tpu.matmul %331, %244, %cst_213 {dimension_numbers = #tpu.dot_dimension_numbers<[1], [0], [0], [1], [0, 0, 1, 1], [], []>} : vector<8x6xf32>, vector<6x6xf32>, vector<8x6xf32> -> vector<8x6xf32>
    %cst_214 = arith.constant dense<0.000000e+00> : vector<1x6xf32>
    %343 = tpu.matmul %341, %342, %cst_214 {dimension_numbers = #tpu.dot_dimension_numbers<[1], [0], [0], [1], [0, 0, 1, 1], [], []>} : vector<1x8xf32>, vector<8x6xf32>, vector<1x6xf32> -> vector<1x6xf32>
    %344 = arith.addf %339, %343 : vector<1x6xf32>
    %c0_215 = arith.constant 0 : index
    %c0_216 = arith.constant 0 : index
    %345 = vector.load %arg25[%c0_215, %c0_216] : memref<1x1xf32, #tpu.memory_space<vmem>>, vector<1x1xf32>
    %346 = vector.broadcast %345 : vector<1x1xf32> to vector<1x6xf32>
    %347 = arith.addf %344, %346 : vector<1x6xf32>
    %cst_217 = arith.constant dense<0.000000e+00> : vector<1xf32>
    %348 = vector.multi_reduction <add>, %347, %cst_217 [1] : vector<1x6xf32> to vector<1xf32>
    %349 = vector.shape_cast %348 : vector<1xf32> to vector<1x1xf32>
    %cst_218 = arith.constant 6.000000e+00 : f32
    %350 = vector.broadcast %cst_218 : f32 to vector<1x1xf32>
    %351 = arith.divf %349, %350 : vector<1x1xf32>
    %c0_219 = arith.constant 0 : index
    %c0_220 = arith.constant 0 : index
    %352 = vector.load %arg2[%c0_219, %c0_220] : memref<2x3xf32, #tpu.memory_space<vmem>>, vector<1x3xf32>
    %c0_221 = arith.constant 0 : index
    %c0_222 = arith.constant 0 : index
    %353 = vector.load %arg3[%c0_221, %c0_222] : memref<2x3xf32, #tpu.memory_space<vmem>>, vector<1x3xf32>
    %c0_223 = arith.constant 0 : index
    %c0_224 = arith.constant 0 : index
    %354 = vector.load %arg26[%c0_223, %c0_224] : memref<1x128xf32, #tpu.memory_space<vmem>>, vector<1x128xf32>
    %355 = vector.broadcast %351 : vector<1x1xf32> to vector<1x128xf32>
    %356 = arith.mulf %355, %354 : vector<1x128xf32>
    %c0_225 = arith.constant 0 : index
    %c0_226 = arith.constant 0 : index
    %357 = vector.load %arg27[%c0_225, %c0_226] : memref<3x128xf32, #tpu.memory_space<vmem>>, vector<3x128xf32>
    %cst_227 = arith.constant dense<0.000000e+00> : vector<1x128xf32>
    %358 = tpu.matmul %352, %357, %cst_227 {dimension_numbers = #tpu.dot_dimension_numbers<[1], [0], [0], [1], [0, 0, 1, 1], [], []>} : vector<1x3xf32>, vector<3x128xf32>, vector<1x128xf32> -> vector<1x128xf32>
    %359 = arith.addf %356, %358 : vector<1x128xf32>
    %c0_228 = arith.constant 0 : index
    %c0_229 = arith.constant 0 : index
    %360 = vector.load %arg28[%c0_228, %c0_229] : memref<3x128xf32, #tpu.memory_space<vmem>>, vector<3x128xf32>
    %cst_230 = arith.constant dense<0.000000e+00> : vector<1x128xf32>
    %361 = tpu.matmul %353, %360, %cst_230 {dimension_numbers = #tpu.dot_dimension_numbers<[1], [0], [0], [1], [0, 0, 1, 1], [], []>} : vector<1x3xf32>, vector<3x128xf32>, vector<1x128xf32> -> vector<1x128xf32>
    %362 = arith.addf %359, %361 : vector<1x128xf32>
    %c0_231 = arith.constant 0 : index
    %c0_232 = arith.constant 0 : index
    %363 = vector.load %arg29[%c0_231, %c0_232] : memref<1x128xf32, #tpu.memory_space<vmem>>, vector<1x128xf32>
    %364 = arith.addf %362, %363 : vector<1x128xf32>
    %cst_233 = arith.constant 0.000000e+00 : f32
    %365 = vector.broadcast %cst_233 : f32 to vector<1x128xf32>
    %366 = arith.cmpf ogt, %364, %365 : vector<1x128xf32>
    %cst_234 = arith.constant 2.000000e-01 : f32
    %367 = vector.broadcast %cst_234 : f32 to vector<1x128xf32>
    %368 = arith.mulf %367, %364 : vector<1x128xf32>
    %369 = arith.select %366, %364, %368 : vector<1x128xi1>, vector<1x128xf32>
    %c0_235 = arith.constant 0 : index
    %c0_236 = arith.constant 0 : index
    %370 = vector.load %arg30[%c0_235, %c0_236] : memref<128x64xf32, #tpu.memory_space<vmem>>, vector<128x64xf32>
    %cst_237 = arith.constant dense<0.000000e+00> : vector<1x64xf32>
    %371 = tpu.matmul %369, %370, %cst_237 {dimension_numbers = #tpu.dot_dimension_numbers<[1], [0], [0], [1], [0, 0, 1, 1], [], []>} : vector<1x128xf32>, vector<128x64xf32>, vector<1x64xf32> -> vector<1x64xf32>
    %c0_238 = arith.constant 0 : index
    %c0_239 = arith.constant 0 : index
    %372 = vector.load %arg31[%c0_238, %c0_239] : memref<1x64xf32, #tpu.memory_space<vmem>>, vector<1x64xf32>
    %373 = arith.addf %371, %372 : vector<1x64xf32>
    %cst_240 = arith.constant 0.000000e+00 : f32
    %374 = vector.broadcast %cst_240 : f32 to vector<1x64xf32>
    %375 = arith.cmpf ogt, %373, %374 : vector<1x64xf32>
    %cst_241 = arith.constant 2.000000e-01 : f32
    %376 = vector.broadcast %cst_241 : f32 to vector<1x64xf32>
    %377 = arith.mulf %376, %373 : vector<1x64xf32>
    %378 = arith.select %375, %373, %377 : vector<1x64xi1>, vector<1x64xf32>
    %c0_242 = arith.constant 0 : index
    %c0_243 = arith.constant 0 : index
    %379 = vector.load %arg32[%c0_242, %c0_243] : memref<64x1xf32, #tpu.memory_space<vmem>>, vector<64x1xf32>
    %cst_244 = arith.constant dense<0.000000e+00> : vector<1x1xf32>
    %380 = tpu.matmul %378, %379, %cst_244 {dimension_numbers = #tpu.dot_dimension_numbers<[1], [0], [0], [1], [0, 0, 1, 1], [], []>} : vector<1x64xf32>, vector<64x1xf32>, vector<1x1xf32> -> vector<1x1xf32>
    %c0_245 = arith.constant 0 : index
    %c0_246 = arith.constant 0 : index
    %381 = vector.load %arg33[%c0_245, %c0_246] : memref<1x1xf32, #tpu.memory_space<vmem>>, vector<1x1xf32>
    %382 = arith.addf %380, %381 : vector<1x1xf32>
    %c0_247 = arith.constant 0 : index
    %c0_248 = arith.constant 0 : index
    %383 = vector.load %arg34[%c0_247, %c0_248] : memref<2x1xf32, #tpu.memory_space<vmem>>, vector<1x1xf32>
    tpu.vector_store %arg34[%c0_247, %c0_248], %382 {strides = array<i32>} : memref<2x1xf32, #tpu.memory_space<vmem>>, vector<1x1xf32>,
    %c1_249 = arith.constant 1 : index
    %c0_250 = arith.constant 0 : index
    %384 = vector.load %arg1[%c1_249, %c0_250] : memref<2x16xf32, #tpu.memory_space<vmem>>, vector<1x16xf32>
    %c0_251 = arith.constant 0 : index
    %c0_252 = arith.constant 0 : index
    %c0_253 = arith.constant 0 : index
    %385 = vector.load %arg4[%c0_251, %c0_252, %c0_253] : memref<7x16x1xf32, #tpu.memory_space<vmem>>, vector<1x16x1xf32>
    %386 = vector.shape_cast %385 : vector<1x16x1xf32> to vector<16x1xf32>
    %cst_254 = arith.constant dense<0.000000e+00> : vector<1x8xf32>
    %387 = tpu.matmul %384, %15, %cst_254 {dimension_numbers = #tpu.dot_dimension_numbers<[1], [0], [0], [1], [0, 0, 1, 1], [], []>} : vector<1x16xf32>, vector<16x8xf32>, vector<1x8xf32> -> vector<1x8xf32>
    %cst_255 = arith.constant dense<0.000000e+00> : vector<16x8xf32>
    %388 = tpu.matmul %386, %387, %cst_255 {dimension_numbers = #tpu.dot_dimension_numbers<[1], [0], [0], [1], [0, 0, 1, 1], [], []>} : vector<16x1xf32>, vector<1x8xf32>, vector<16x8xf32> -> vector<16x8xf32>
    %c1_256 = arith.constant 1 : index
    %c0_257 = arith.constant 0 : index
    %c0_258 = arith.constant 0 : index
    %389 = vector.load %arg4[%c1_256, %c0_257, %c0_258] : memref<7x16x1xf32, #tpu.memory_space<vmem>>, vector<1x16x1xf32>
    %390 = vector.shape_cast %389 : vector<1x16x1xf32> to vector<16x1xf32>
    %cst_259 = arith.constant dense<0.000000e+00> : vector<1x8xf32>
    %391 = tpu.matmul %384, %29, %cst_259 {dimension_numbers = #tpu.dot_dimension_numbers<[1], [0], [0], [1], [0, 0, 1, 1], [], []>} : vector<1x16xf32>, vector<16x8xf32>, vector<1x8xf32> -> vector<1x8xf32>
    %cst_260 = arith.constant dense<0.000000e+00> : vector<16x8xf32>
    %392 = tpu.matmul %390, %391, %cst_260 {dimension_numbers = #tpu.dot_dimension_numbers<[1], [0], [0], [1], [0, 0, 1, 1], [], []>} : vector<16x1xf32>, vector<1x8xf32>, vector<16x8xf32> -> vector<16x8xf32>
    %393 = arith.addf %388, %392 : vector<16x8xf32>
    %c2_261 = arith.constant 2 : index
    %c0_262 = arith.constant 0 : index
    %c0_263 = arith.constant 0 : index
    %394 = vector.load %arg4[%c2_261, %c0_262, %c0_263] : memref<7x16x1xf32, #tpu.memory_space<vmem>>, vector<1x16x1xf32>
    %395 = vector.shape_cast %394 : vector<1x16x1xf32> to vector<16x1xf32>
    %cst_264 = arith.constant dense<0.000000e+00> : vector<1x8xf32>
    %396 = tpu.matmul %384, %44, %cst_264 {dimension_numbers = #tpu.dot_dimension_numbers<[1], [0], [0], [1], [0, 0, 1, 1], [], []>} : vector<1x16xf32>, vector<16x8xf32>, vector<1x8xf32> -> vector<1x8xf32>
    %cst_265 = arith.constant dense<0.000000e+00> : vector<16x8xf32>
    %397 = tpu.matmul %395, %396, %cst_265 {dimension_numbers = #tpu.dot_dimension_numbers<[1], [0], [0], [1], [0, 0, 1, 1], [], []>} : vector<16x1xf32>, vector<1x8xf32>, vector<16x8xf32> -> vector<16x8xf32>
    %398 = arith.addf %393, %397 : vector<16x8xf32>
    %c3_266 = arith.constant 3 : index
    %c0_267 = arith.constant 0 : index
    %c0_268 = arith.constant 0 : index
    %399 = vector.load %arg4[%c3_266, %c0_267, %c0_268] : memref<7x16x1xf32, #tpu.memory_space<vmem>>, vector<1x16x1xf32>
    %400 = vector.shape_cast %399 : vector<1x16x1xf32> to vector<16x1xf32>
    %cst_269 = arith.constant dense<0.000000e+00> : vector<1x8xf32>
    %401 = tpu.matmul %384, %59, %cst_269 {dimension_numbers = #tpu.dot_dimension_numbers<[1], [0], [0], [1], [0, 0, 1, 1], [], []>} : vector<1x16xf32>, vector<16x8xf32>, vector<1x8xf32> -> vector<1x8xf32>
    %cst_270 = arith.constant dense<0.000000e+00> : vector<16x8xf32>
    %402 = tpu.matmul %400, %401, %cst_270 {dimension_numbers = #tpu.dot_dimension_numbers<[1], [0], [0], [1], [0, 0, 1, 1], [], []>} : vector<16x1xf32>, vector<1x8xf32>, vector<16x8xf32> -> vector<16x8xf32>
    %403 = arith.addf %398, %402 : vector<16x8xf32>
    %c4_271 = arith.constant 4 : index
    %c0_272 = arith.constant 0 : index
    %c0_273 = arith.constant 0 : index
    %404 = vector.load %arg4[%c4_271, %c0_272, %c0_273] : memref<7x16x1xf32, #tpu.memory_space<vmem>>, vector<1x16x1xf32>
    %405 = vector.shape_cast %404 : vector<1x16x1xf32> to vector<16x1xf32>
    %cst_274 = arith.constant dense<0.000000e+00> : vector<1x8xf32>
    %406 = tpu.matmul %384, %74, %cst_274 {dimension_numbers = #tpu.dot_dimension_numbers<[1], [0], [0], [1], [0, 0, 1, 1], [], []>} : vector<1x16xf32>, vector<16x8xf32>, vector<1x8xf32> -> vector<1x8xf32>
    %cst_275 = arith.constant dense<0.000000e+00> : vector<16x8xf32>
    %407 = tpu.matmul %405, %406, %cst_275 {dimension_numbers = #tpu.dot_dimension_numbers<[1], [0], [0], [1], [0, 0, 1, 1], [], []>} : vector<16x1xf32>, vector<1x8xf32>, vector<16x8xf32> -> vector<16x8xf32>
    %408 = arith.addf %403, %407 : vector<16x8xf32>
    %c5_276 = arith.constant 5 : index
    %c0_277 = arith.constant 0 : index
    %c0_278 = arith.constant 0 : index
    %409 = vector.load %arg4[%c5_276, %c0_277, %c0_278] : memref<7x16x1xf32, #tpu.memory_space<vmem>>, vector<1x16x1xf32>
    %410 = vector.shape_cast %409 : vector<1x16x1xf32> to vector<16x1xf32>
    %cst_279 = arith.constant dense<0.000000e+00> : vector<1x8xf32>
    %411 = tpu.matmul %384, %89, %cst_279 {dimension_numbers = #tpu.dot_dimension_numbers<[1], [0], [0], [1], [0, 0, 1, 1], [], []>} : vector<1x16xf32>, vector<16x8xf32>, vector<1x8xf32> -> vector<1x8xf32>
    %cst_280 = arith.constant dense<0.000000e+00> : vector<16x8xf32>
    %412 = tpu.matmul %410, %411, %cst_280 {dimension_numbers = #tpu.dot_dimension_numbers<[1], [0], [0], [1], [0, 0, 1, 1], [], []>} : vector<16x1xf32>, vector<1x8xf32>, vector<16x8xf32> -> vector<16x8xf32>
    %413 = arith.addf %408, %412 : vector<16x8xf32>
    %c6_281 = arith.constant 6 : index
    %c0_282 = arith.constant 0 : index
    %c0_283 = arith.constant 0 : index
    %414 = vector.load %arg4[%c6_281, %c0_282, %c0_283] : memref<7x16x1xf32, #tpu.memory_space<vmem>>, vector<1x16x1xf32>
    %415 = vector.shape_cast %414 : vector<1x16x1xf32> to vector<16x1xf32>
    %cst_284 = arith.constant dense<0.000000e+00> : vector<1x8xf32>
    %416 = tpu.matmul %384, %104, %cst_284 {dimension_numbers = #tpu.dot_dimension_numbers<[1], [0], [0], [1], [0, 0, 1, 1], [], []>} : vector<1x16xf32>, vector<16x8xf32>, vector<1x8xf32> -> vector<1x8xf32>
    %cst_285 = arith.constant dense<0.000000e+00> : vector<16x8xf32>
    %417 = tpu.matmul %415, %416, %cst_285 {dimension_numbers = #tpu.dot_dimension_numbers<[1], [0], [0], [1], [0, 0, 1, 1], [], []>} : vector<16x1xf32>, vector<1x8xf32>, vector<16x8xf32> -> vector<16x8xf32>
    %418 = arith.addf %413, %417 : vector<16x8xf32>
    %c0_286 = arith.constant 0 : index
    %c0_287 = arith.constant 0 : index
    %419 = vector.load %arg5[%c0_286, %c0_287] : memref<16x1xf32, #tpu.memory_space<vmem>>, vector<16x1xf32>
    %420 = vector.broadcast %419 : vector<16x1xf32> to vector<16x8xf32>
    %421 = arith.addf %418, %420 : vector<16x8xf32>
    %cst_288 = arith.constant 0.000000e+00 : f32
    %422 = vector.broadcast %cst_288 : f32 to vector<16x8xf32>
    %423 = arith.cmpf ogt, %421, %422 : vector<16x8xf32>
    %cst_289 = arith.constant 2.000000e-01 : f32
    %424 = vector.broadcast %cst_289 : f32 to vector<16x8xf32>
    %425 = arith.mulf %424, %421 : vector<16x8xf32>
    %426 = arith.select %423, %421, %425 : vector<16x8xi1>, vector<16x8xf32>
    %c0_290 = arith.constant 0 : index
    %c0_291 = arith.constant 0 : index
    %c0_292 = arith.constant 0 : index
    %427 = vector.load %arg6[%c0_290, %c0_291, %c0_292] : memref<3x32x16xf32, #tpu.memory_space<vmem>>, vector<1x32x16xf32>
    %428 = vector.shape_cast %427 : vector<1x32x16xf32> to vector<32x16xf32>
    %cst_293 = arith.constant dense<0.000000e+00> : vector<16x8xf32>
    %429 = tpu.matmul %426, %127, %cst_293 {dimension_numbers = #tpu.dot_dimension_numbers<[1], [0], [0], [1], [0, 0, 1, 1], [], []>} : vector<16x8xf32>, vector<8x8xf32>, vector<16x8xf32> -> vector<16x8xf32>
    %cst_294 = arith.constant dense<0.000000e+00> : vector<32x8xf32>
    %430 = tpu.matmul %428, %429, %cst_294 {dimension_numbers = #tpu.dot_dimension_numbers<[1], [0], [0], [1], [0, 0, 1, 1], [], []>} : vector<32x16xf32>, vector<16x8xf32>, vector<32x8xf32> -> vector<32x8xf32>
    %c1_295 = arith.constant 1 : index
    %c0_296 = arith.constant 0 : index
    %c0_297 = arith.constant 0 : index
    %431 = vector.load %arg6[%c1_295, %c0_296, %c0_297] : memref<3x32x16xf32, #tpu.memory_space<vmem>>, vector<1x32x16xf32>
    %432 = vector.shape_cast %431 : vector<1x32x16xf32> to vector<32x16xf32>
    %cst_298 = arith.constant dense<0.000000e+00> : vector<32x8xf32>
    %433 = tpu.matmul %432, %426, %cst_298 {dimension_numbers = #tpu.dot_dimension_numbers<[1], [0], [0], [1], [0, 0, 1, 1], [], []>} : vector<32x16xf32>, vector<16x8xf32>, vector<32x8xf32> -> vector<32x8xf32>
    %434 = arith.addf %430, %433 : vector<32x8xf32>
    %c2_299 = arith.constant 2 : index
    %c0_300 = arith.constant 0 : index
    %c0_301 = arith.constant 0 : index
    %435 = vector.load %arg6[%c2_299, %c0_300, %c0_301] : memref<3x32x16xf32, #tpu.memory_space<vmem>>, vector<1x32x16xf32>
    %436 = vector.shape_cast %435 : vector<1x32x16xf32> to vector<32x16xf32>
    %cst_302 = arith.constant dense<0.000000e+00> : vector<16x8xf32>
    %437 = tpu.matmul %426, %145, %cst_302 {dimension_numbers = #tpu.dot_dimension_numbers<[1], [0], [0], [1], [0, 0, 1, 1], [], []>} : vector<16x8xf32>, vector<8x8xf32>, vector<16x8xf32> -> vector<16x8xf32>
    %cst_303 = arith.constant dense<0.000000e+00> : vector<32x8xf32>
    %438 = tpu.matmul %436, %437, %cst_303 {dimension_numbers = #tpu.dot_dimension_numbers<[1], [0], [0], [1], [0, 0, 1, 1], [], []>} : vector<32x16xf32>, vector<16x8xf32>, vector<32x8xf32> -> vector<32x8xf32>
    %439 = arith.addf %434, %438 : vector<32x8xf32>
    %c0_304 = arith.constant 0 : index
    %c0_305 = arith.constant 0 : index
    %440 = vector.load %arg7[%c0_304, %c0_305] : memref<32x1xf32, #tpu.memory_space<vmem>>, vector<32x1xf32>
    %441 = vector.broadcast %440 : vector<32x1xf32> to vector<32x8xf32>
    %442 = arith.addf %439, %441 : vector<32x8xf32>
    %cst_306 = arith.constant 0.000000e+00 : f32
    %443 = vector.broadcast %cst_306 : f32 to vector<32x8xf32>
    %444 = arith.cmpf ogt, %442, %443 : vector<32x8xf32>
    %cst_307 = arith.constant 2.000000e-01 : f32
    %445 = vector.broadcast %cst_307 : f32 to vector<32x8xf32>
    %446 = arith.mulf %445, %442 : vector<32x8xf32>
    %447 = arith.select %444, %442, %446 : vector<32x8xi1>, vector<32x8xf32>
    %c0_308 = arith.constant 0 : index
    %c0_309 = arith.constant 0 : index
    %448 = vector.load %arg8[%c0_308, %c0_309] : memref<32x16xf32, #tpu.memory_space<vmem>>, vector<32x16xf32>
    %cst_310 = arith.constant dense<0.000000e+00> : vector<32x8xf32>
    %449 = tpu.matmul %448, %426, %cst_310 {dimension_numbers = #tpu.dot_dimension_numbers<[1], [0], [0], [1], [0, 0, 1, 1], [], []>} : vector<32x16xf32>, vector<16x8xf32>, vector<32x8xf32> -> vector<32x8xf32>
    %c0_311 = arith.constant 0 : index
    %c0_312 = arith.constant 0 : index
    %450 = vector.load %arg9[%c0_311, %c0_312] : memref<32x1xf32, #tpu.memory_space<vmem>>, vector<32x1xf32>
    %451 = vector.broadcast %450 : vector<32x1xf32> to vector<32x8xf32>
    %452 = arith.addf %449, %451 : vector<32x8xf32>
    %453 = arith.addf %447, %452 : vector<32x8xf32>
    %c0_313 = arith.constant 0 : index
    %c0_314 = arith.constant 0 : index
    %c0_315 = arith.constant 0 : index
    %454 = vector.load %arg10[%c0_313, %c0_314, %c0_315] : memref<3x64x32xf32, #tpu.memory_space<vmem>>, vector<1x64x32xf32>
    %455 = vector.shape_cast %454 : vector<1x64x32xf32> to vector<64x32xf32>
    %cst_316 = arith.constant dense<0.000000e+00> : vector<32x6xf32>
    %456 = tpu.matmul %453, %174, %cst_316 {dimension_numbers = #tpu.dot_dimension_numbers<[1], [0], [0], [1], [0, 0, 1, 1], [], []>} : vector<32x8xf32>, vector<8x6xf32>, vector<32x6xf32> -> vector<32x6xf32>
    %cst_317 = arith.constant dense<0.000000e+00> : vector<64x6xf32>
    %457 = tpu.matmul %455, %456, %cst_317 {dimension_numbers = #tpu.dot_dimension_numbers<[1], [0], [0], [1], [0, 0, 1, 1], [], []>} : vector<64x32xf32>, vector<32x6xf32>, vector<64x6xf32> -> vector<64x6xf32>
    %c1_318 = arith.constant 1 : index
    %c0_319 = arith.constant 0 : index
    %c0_320 = arith.constant 0 : index
    %458 = vector.load %arg10[%c1_318, %c0_319, %c0_320] : memref<3x64x32xf32, #tpu.memory_space<vmem>>, vector<1x64x32xf32>
    %459 = vector.shape_cast %458 : vector<1x64x32xf32> to vector<64x32xf32>
    %cst_321 = arith.constant dense<0.000000e+00> : vector<32x6xf32>
    %460 = tpu.matmul %453, %188, %cst_321 {dimension_numbers = #tpu.dot_dimension_numbers<[1], [0], [0], [1], [0, 0, 1, 1], [], []>} : vector<32x8xf32>, vector<8x6xf32>, vector<32x6xf32> -> vector<32x6xf32>
    %cst_322 = arith.constant dense<0.000000e+00> : vector<64x6xf32>
    %461 = tpu.matmul %459, %460, %cst_322 {dimension_numbers = #tpu.dot_dimension_numbers<[1], [0], [0], [1], [0, 0, 1, 1], [], []>} : vector<64x32xf32>, vector<32x6xf32>, vector<64x6xf32> -> vector<64x6xf32>
    %462 = arith.addf %457, %461 : vector<64x6xf32>
    %c2_323 = arith.constant 2 : index
    %c0_324 = arith.constant 0 : index
    %c0_325 = arith.constant 0 : index
    %463 = vector.load %arg10[%c2_323, %c0_324, %c0_325] : memref<3x64x32xf32, #tpu.memory_space<vmem>>, vector<1x64x32xf32>
    %464 = vector.shape_cast %463 : vector<1x64x32xf32> to vector<64x32xf32>
    %cst_326 = arith.constant dense<0.000000e+00> : vector<32x6xf32>
    %465 = tpu.matmul %453, %203, %cst_326 {dimension_numbers = #tpu.dot_dimension_numbers<[1], [0], [0], [1], [0, 0, 1, 1], [], []>} : vector<32x8xf32>, vector<8x6xf32>, vector<32x6xf32> -> vector<32x6xf32>
    %cst_327 = arith.constant dense<0.000000e+00> : vector<64x6xf32>
    %466 = tpu.matmul %464, %465, %cst_327 {dimension_numbers = #tpu.dot_dimension_numbers<[1], [0], [0], [1], [0, 0, 1, 1], [], []>} : vector<64x32xf32>, vector<32x6xf32>, vector<64x6xf32> -> vector<64x6xf32>
    %467 = arith.addf %462, %466 : vector<64x6xf32>
    %c0_328 = arith.constant 0 : index
    %c0_329 = arith.constant 0 : index
    %468 = vector.load %arg11[%c0_328, %c0_329] : memref<64x1xf32, #tpu.memory_space<vmem>>, vector<64x1xf32>
    %469 = vector.broadcast %468 : vector<64x1xf32> to vector<64x6xf32>
    %470 = arith.addf %467, %469 : vector<64x6xf32>
    %cst_330 = arith.constant 0.000000e+00 : f32
    %471 = vector.broadcast %cst_330 : f32 to vector<64x6xf32>
    %472 = arith.cmpf ogt, %470, %471 : vector<64x6xf32>
    %cst_331 = arith.constant 2.000000e-01 : f32
    %473 = vector.broadcast %cst_331 : f32 to vector<64x6xf32>
    %474 = arith.mulf %473, %470 : vector<64x6xf32>
    %475 = arith.select %472, %470, %474 : vector<64x6xi1>, vector<64x6xf32>
    %c0_332 = arith.constant 0 : index
    %c0_333 = arith.constant 0 : index
    %c0_334 = arith.constant 0 : index
    %476 = vector.load %arg12[%c0_332, %c0_333, %c0_334] : memref<3x32x64xf32, #tpu.memory_space<vmem>>, vector<1x32x64xf32>
    %477 = vector.shape_cast %476 : vector<1x32x64xf32> to vector<32x64xf32>
    %cst_335 = arith.constant dense<0.000000e+00> : vector<64x6xf32>
    %478 = tpu.matmul %475, %226, %cst_335 {dimension_numbers = #tpu.dot_dimension_numbers<[1], [0], [0], [1], [0, 0, 1, 1], [], []>} : vector<64x6xf32>, vector<6x6xf32>, vector<64x6xf32> -> vector<64x6xf32>
    %cst_336 = arith.constant dense<0.000000e+00> : vector<32x6xf32>
    %479 = tpu.matmul %477, %478, %cst_336 {dimension_numbers = #tpu.dot_dimension_numbers<[1], [0], [0], [1], [0, 0, 1, 1], [], []>} : vector<32x64xf32>, vector<64x6xf32>, vector<32x6xf32> -> vector<32x6xf32>
    %c1_337 = arith.constant 1 : index
    %c0_338 = arith.constant 0 : index
    %c0_339 = arith.constant 0 : index
    %480 = vector.load %arg12[%c1_337, %c0_338, %c0_339] : memref<3x32x64xf32, #tpu.memory_space<vmem>>, vector<1x32x64xf32>
    %481 = vector.shape_cast %480 : vector<1x32x64xf32> to vector<32x64xf32>
    %cst_340 = arith.constant dense<0.000000e+00> : vector<32x6xf32>
    %482 = tpu.matmul %481, %475, %cst_340 {dimension_numbers = #tpu.dot_dimension_numbers<[1], [0], [0], [1], [0, 0, 1, 1], [], []>} : vector<32x64xf32>, vector<64x6xf32>, vector<32x6xf32> -> vector<32x6xf32>
    %483 = arith.addf %479, %482 : vector<32x6xf32>
    %c2_341 = arith.constant 2 : index
    %c0_342 = arith.constant 0 : index
    %c0_343 = arith.constant 0 : index
    %484 = vector.load %arg12[%c2_341, %c0_342, %c0_343] : memref<3x32x64xf32, #tpu.memory_space<vmem>>, vector<1x32x64xf32>
    %485 = vector.shape_cast %484 : vector<1x32x64xf32> to vector<32x64xf32>
    %cst_344 = arith.constant dense<0.000000e+00> : vector<64x6xf32>
    %486 = tpu.matmul %475, %244, %cst_344 {dimension_numbers = #tpu.dot_dimension_numbers<[1], [0], [0], [1], [0, 0, 1, 1], [], []>} : vector<64x6xf32>, vector<6x6xf32>, vector<64x6xf32> -> vector<64x6xf32>
    %cst_345 = arith.constant dense<0.000000e+00> : vector<32x6xf32>
    %487 = tpu.matmul %485, %486, %cst_345 {dimension_numbers = #tpu.dot_dimension_numbers<[1], [0], [0], [1], [0, 0, 1, 1], [], []>} : vector<32x64xf32>, vector<64x6xf32>, vector<32x6xf32> -> vector<32x6xf32>
    %488 = arith.addf %483, %487 : vector<32x6xf32>
    %c0_346 = arith.constant 0 : index
    %c0_347 = arith.constant 0 : index
    %489 = vector.load %arg13[%c0_346, %c0_347] : memref<32x1xf32, #tpu.memory_space<vmem>>, vector<32x1xf32>
    %490 = vector.broadcast %489 : vector<32x1xf32> to vector<32x6xf32>
    %491 = arith.addf %488, %490 : vector<32x6xf32>
    %cst_348 = arith.constant 0.000000e+00 : f32
    %492 = vector.broadcast %cst_348 : f32 to vector<32x6xf32>
    %493 = arith.cmpf ogt, %491, %492 : vector<32x6xf32>
    %cst_349 = arith.constant 2.000000e-01 : f32
    %494 = vector.broadcast %cst_349 : f32 to vector<32x6xf32>
    %495 = arith.mulf %494, %491 : vector<32x6xf32>
    %496 = arith.select %493, %491, %495 : vector<32x6xi1>, vector<32x6xf32>
    %c0_350 = arith.constant 0 : index
    %c0_351 = arith.constant 0 : index
    %497 = vector.load %arg14[%c0_350, %c0_351] : memref<32x64xf32, #tpu.memory_space<vmem>>, vector<32x64xf32>
    %cst_352 = arith.constant dense<0.000000e+00> : vector<32x6xf32>
    %498 = tpu.matmul %497, %475, %cst_352 {dimension_numbers = #tpu.dot_dimension_numbers<[1], [0], [0], [1], [0, 0, 1, 1], [], []>} : vector<32x64xf32>, vector<64x6xf32>, vector<32x6xf32> -> vector<32x6xf32>
    %c0_353 = arith.constant 0 : index
    %c0_354 = arith.constant 0 : index
    %499 = vector.load %arg15[%c0_353, %c0_354] : memref<32x1xf32, #tpu.memory_space<vmem>>, vector<32x1xf32>
    %500 = vector.broadcast %499 : vector<32x1xf32> to vector<32x6xf32>
    %501 = arith.addf %498, %500 : vector<32x6xf32>
    %502 = arith.addf %496, %501 : vector<32x6xf32>
    %c0_355 = arith.constant 0 : index
    %c0_356 = arith.constant 0 : index
    %c0_357 = arith.constant 0 : index
    %503 = vector.load %arg16[%c0_355, %c0_356, %c0_357] : memref<3x16x32xf32, #tpu.memory_space<vmem>>, vector<1x16x32xf32>
    %504 = vector.shape_cast %503 : vector<1x16x32xf32> to vector<16x32xf32>
    %cst_358 = arith.constant dense<0.000000e+00> : vector<32x6xf32>
    %505 = tpu.matmul %502, %226, %cst_358 {dimension_numbers = #tpu.dot_dimension_numbers<[1], [0], [0], [1], [0, 0, 1, 1], [], []>} : vector<32x6xf32>, vector<6x6xf32>, vector<32x6xf32> -> vector<32x6xf32>
    %cst_359 = arith.constant dense<0.000000e+00> : vector<16x6xf32>
    %506 = tpu.matmul %504, %505, %cst_359 {dimension_numbers = #tpu.dot_dimension_numbers<[1], [0], [0], [1], [0, 0, 1, 1], [], []>} : vector<16x32xf32>, vector<32x6xf32>, vector<16x6xf32> -> vector<16x6xf32>
    %c1_360 = arith.constant 1 : index
    %c0_361 = arith.constant 0 : index
    %c0_362 = arith.constant 0 : index
    %507 = vector.load %arg16[%c1_360, %c0_361, %c0_362] : memref<3x16x32xf32, #tpu.memory_space<vmem>>, vector<1x16x32xf32>
    %508 = vector.shape_cast %507 : vector<1x16x32xf32> to vector<16x32xf32>
    %cst_363 = arith.constant dense<0.000000e+00> : vector<16x6xf32>
    %509 = tpu.matmul %508, %502, %cst_363 {dimension_numbers = #tpu.dot_dimension_numbers<[1], [0], [0], [1], [0, 0, 1, 1], [], []>} : vector<16x32xf32>, vector<32x6xf32>, vector<16x6xf32> -> vector<16x6xf32>
    %510 = arith.addf %506, %509 : vector<16x6xf32>
    %c2_364 = arith.constant 2 : index
    %c0_365 = arith.constant 0 : index
    %c0_366 = arith.constant 0 : index
    %511 = vector.load %arg16[%c2_364, %c0_365, %c0_366] : memref<3x16x32xf32, #tpu.memory_space<vmem>>, vector<1x16x32xf32>
    %512 = vector.shape_cast %511 : vector<1x16x32xf32> to vector<16x32xf32>
    %cst_367 = arith.constant dense<0.000000e+00> : vector<32x6xf32>
    %513 = tpu.matmul %502, %244, %cst_367 {dimension_numbers = #tpu.dot_dimension_numbers<[1], [0], [0], [1], [0, 0, 1, 1], [], []>} : vector<32x6xf32>, vector<6x6xf32>, vector<32x6xf32> -> vector<32x6xf32>
    %cst_368 = arith.constant dense<0.000000e+00> : vector<16x6xf32>
    %514 = tpu.matmul %512, %513, %cst_368 {dimension_numbers = #tpu.dot_dimension_numbers<[1], [0], [0], [1], [0, 0, 1, 1], [], []>} : vector<16x32xf32>, vector<32x6xf32>, vector<16x6xf32> -> vector<16x6xf32>
    %515 = arith.addf %510, %514 : vector<16x6xf32>
    %c0_369 = arith.constant 0 : index
    %c0_370 = arith.constant 0 : index
    %516 = vector.load %arg17[%c0_369, %c0_370] : memref<16x1xf32, #tpu.memory_space<vmem>>, vector<16x1xf32>
    %517 = vector.broadcast %516 : vector<16x1xf32> to vector<16x6xf32>
    %518 = arith.addf %515, %517 : vector<16x6xf32>
    %cst_371 = arith.constant 0.000000e+00 : f32
    %519 = vector.broadcast %cst_371 : f32 to vector<16x6xf32>
    %520 = arith.cmpf ogt, %518, %519 : vector<16x6xf32>
    %cst_372 = arith.constant 2.000000e-01 : f32
    %521 = vector.broadcast %cst_372 : f32 to vector<16x6xf32>
    %522 = arith.mulf %521, %518 : vector<16x6xf32>
    %523 = arith.select %520, %518, %522 : vector<16x6xi1>, vector<16x6xf32>
    %c0_373 = arith.constant 0 : index
    %c0_374 = arith.constant 0 : index
    %c0_375 = arith.constant 0 : index
    %524 = vector.load %arg18[%c0_373, %c0_374, %c0_375] : memref<3x8x16xf32, #tpu.memory_space<vmem>>, vector<1x8x16xf32>
    %525 = vector.shape_cast %524 : vector<1x8x16xf32> to vector<8x16xf32>
    %cst_376 = arith.constant dense<0.000000e+00> : vector<16x6xf32>
    %526 = tpu.matmul %523, %226, %cst_376 {dimension_numbers = #tpu.dot_dimension_numbers<[1], [0], [0], [1], [0, 0, 1, 1], [], []>} : vector<16x6xf32>, vector<6x6xf32>, vector<16x6xf32> -> vector<16x6xf32>
    %cst_377 = arith.constant dense<0.000000e+00> : vector<8x6xf32>
    %527 = tpu.matmul %525, %526, %cst_377 {dimension_numbers = #tpu.dot_dimension_numbers<[1], [0], [0], [1], [0, 0, 1, 1], [], []>} : vector<8x16xf32>, vector<16x6xf32>, vector<8x6xf32> -> vector<8x6xf32>
    %c1_378 = arith.constant 1 : index
    %c0_379 = arith.constant 0 : index
    %c0_380 = arith.constant 0 : index
    %528 = vector.load %arg18[%c1_378, %c0_379, %c0_380] : memref<3x8x16xf32, #tpu.memory_space<vmem>>, vector<1x8x16xf32>
    %529 = vector.shape_cast %528 : vector<1x8x16xf32> to vector<8x16xf32>
    %cst_381 = arith.constant dense<0.000000e+00> : vector<8x6xf32>
    %530 = tpu.matmul %529, %523, %cst_381 {dimension_numbers = #tpu.dot_dimension_numbers<[1], [0], [0], [1], [0, 0, 1, 1], [], []>} : vector<8x16xf32>, vector<16x6xf32>, vector<8x6xf32> -> vector<8x6xf32>
    %531 = arith.addf %527, %530 : vector<8x6xf32>
    %c2_382 = arith.constant 2 : index
    %c0_383 = arith.constant 0 : index
    %c0_384 = arith.constant 0 : index
    %532 = vector.load %arg18[%c2_382, %c0_383, %c0_384] : memref<3x8x16xf32, #tpu.memory_space<vmem>>, vector<1x8x16xf32>
    %533 = vector.shape_cast %532 : vector<1x8x16xf32> to vector<8x16xf32>
    %cst_385 = arith.constant dense<0.000000e+00> : vector<16x6xf32>
    %534 = tpu.matmul %523, %244, %cst_385 {dimension_numbers = #tpu.dot_dimension_numbers<[1], [0], [0], [1], [0, 0, 1, 1], [], []>} : vector<16x6xf32>, vector<6x6xf32>, vector<16x6xf32> -> vector<16x6xf32>
    %cst_386 = arith.constant dense<0.000000e+00> : vector<8x6xf32>
    %535 = tpu.matmul %533, %534, %cst_386 {dimension_numbers = #tpu.dot_dimension_numbers<[1], [0], [0], [1], [0, 0, 1, 1], [], []>} : vector<8x16xf32>, vector<16x6xf32>, vector<8x6xf32> -> vector<8x6xf32>
    %536 = arith.addf %531, %535 : vector<8x6xf32>
    %c0_387 = arith.constant 0 : index
    %c0_388 = arith.constant 0 : index
    %537 = vector.load %arg19[%c0_387, %c0_388] : memref<8x1xf32, #tpu.memory_space<vmem>>, vector<8x1xf32>
    %538 = vector.broadcast %537 : vector<8x1xf32> to vector<8x6xf32>
    %539 = arith.addf %536, %538 : vector<8x6xf32>
    %cst_389 = arith.constant 0.000000e+00 : f32
    %540 = vector.broadcast %cst_389 : f32 to vector<8x6xf32>
    %541 = arith.cmpf ogt, %539, %540 : vector<8x6xf32>
    %cst_390 = arith.constant 2.000000e-01 : f32
    %542 = vector.broadcast %cst_390 : f32 to vector<8x6xf32>
    %543 = arith.mulf %542, %539 : vector<8x6xf32>
    %544 = arith.select %541, %539, %543 : vector<8x6xi1>, vector<8x6xf32>
    %c0_391 = arith.constant 0 : index
    %c0_392 = arith.constant 0 : index
    %545 = vector.load %arg20[%c0_391, %c0_392] : memref<1x8xf32, #tpu.memory_space<vmem>>, vector<1x8xf32>
    %cst_393 = arith.constant dense<0.000000e+00> : vector<1x6xf32>
    %546 = tpu.matmul %545, %544, %cst_393 {dimension_numbers = #tpu.dot_dimension_numbers<[1], [0], [0], [1], [0, 0, 1, 1], [], []>} : vector<1x8xf32>, vector<8x6xf32>, vector<1x6xf32> -> vector<1x6xf32>
    %547 = vector.broadcast %1 : f32 to vector<1x6xf32>
    %548 = arith.addf %546, %547 : vector<1x6xf32>
    %c0_394 = arith.constant 0 : index
    %c0_395 = arith.constant 0 : index
    %549 = vector.load %arg21[%c0_394, %c0_395] : memref<1x8xf32, #tpu.memory_space<vmem>>, vector<1x8xf32>
    %cst_396 = arith.constant dense<0.000000e+00> : vector<1x6xf32>
    %550 = tpu.matmul %549, %544, %cst_396 {dimension_numbers = #tpu.dot_dimension_numbers<[1], [0], [0], [1], [0, 0, 1, 1], [], []>} : vector<1x8xf32>, vector<8x6xf32>, vector<1x6xf32> -> vector<1x6xf32>
    %551 = vector.broadcast %2 : f32 to vector<1x6xf32>
    %552 = arith.addf %550, %551 : vector<1x6xf32>
    %c0_397 = arith.constant 0 : index
    %c0_398 = arith.constant 0 : index
    %553 = vector.load %arg22[%c0_397, %c0_398] : memref<8x8xf32, #tpu.memory_space<vmem>>, vector<8x8xf32>
    %cst_399 = arith.constant dense<0.000000e+00> : vector<8x6xf32>
    %554 = tpu.matmul %553, %544, %cst_399 {dimension_numbers = #tpu.dot_dimension_numbers<[1], [0], [0], [1], [0, 0, 1, 1], [], []>} : vector<8x8xf32>, vector<8x6xf32>, vector<8x6xf32> -> vector<8x6xf32>
    %c0_400 = arith.constant 0 : index
    %c0_401 = arith.constant 0 : index
    %555 = vector.load %arg23[%c0_400, %c0_401] : memref<8x1xf32, #tpu.memory_space<vmem>>, vector<8x1xf32>
    %556 = vector.broadcast %555 : vector<8x1xf32> to vector<8x6xf32>
    %557 = arith.addf %554, %556 : vector<8x6xf32>
    %cst_402 = arith.constant dense<0.000000e+00> : vector<6x6xf32>
    %558 = tpu.matmul %548, %552, %cst_402 {dimension_numbers = #tpu.dot_dimension_numbers<[0], [0], [1], [1], [0, 1, 1, 1], [], []>} : vector<1x6xf32>, vector<1x6xf32>, vector<6x6xf32> -> vector<6x6xf32>
    %cst_403 = arith.constant dense<0xFF800000> : vector<6xf32>
    %559 = vector.multi_reduction <maximumf>, %558, %cst_403 [1] : vector<6x6xf32> to vector<6xf32>
    %560 = vector.shape_cast %559 : vector<6xf32> to vector<6x1xf32>
    %561 = vector.broadcast %560 : vector<6x1xf32> to vector<6x6xf32>
    %562 = arith.subf %558, %561 : vector<6x6xf32>
    %563 = math.exp %562 : vector<6x6xf32>
    %cst_404 = arith.constant dense<0.000000e+00> : vector<6xf32>
    %564 = vector.multi_reduction <add>, %563, %cst_404 [1] : vector<6x6xf32> to vector<6xf32>
    %565 = vector.shape_cast %564 : vector<6xf32> to vector<6x1xf32>
    %566 = tpu.reciprocal %565 {approx = true} : vector<6x1xf32> -> vector<6x1xf32>
    %567 = vector.broadcast %566 : vector<6x1xf32> to vector<6x6xf32>
    %568 = arith.mulf %563, %567 : vector<6x6xf32>
    %cst_405 = arith.constant dense<0.000000e+00> : vector<8x6xf32>
    %569 = tpu.matmul %557, %568, %cst_405 {dimension_numbers = #tpu.dot_dimension_numbers<[1], [1], [0], [0], [0, 0, 1, 0], [], []>} : vector<8x6xf32>, vector<6x6xf32>, vector<8x6xf32> -> vector<8x6xf32>
    %570 = vector.broadcast %0 : f32 to vector<8x6xf32>
    %571 = arith.mulf %570, %569 : vector<8x6xf32>
    %572 = arith.addf %571, %544 : vector<8x6xf32>
    %c0_406 = arith.constant 0 : index
    %c0_407 = arith.constant 0 : index
    %c0_408 = arith.constant 0 : index
    %573 = vector.load %arg24[%c0_406, %c0_407, %c0_408] : memref<3x1x8xf32, #tpu.memory_space<vmem>>, vector<1x1x8xf32>
    %574 = vector.shape_cast %573 : vector<1x1x8xf32> to vector<1x8xf32>
    %cst_409 = arith.constant dense<0.000000e+00> : vector<8x6xf32>
    %575 = tpu.matmul %572, %226, %cst_409 {dimension_numbers = #tpu.dot_dimension_numbers<[1], [0], [0], [1], [0, 0, 1, 1], [], []>} : vector<8x6xf32>, vector<6x6xf32>, vector<8x6xf32> -> vector<8x6xf32>
    %cst_410 = arith.constant dense<0.000000e+00> : vector<1x6xf32>
    %576 = tpu.matmul %574, %575, %cst_410 {dimension_numbers = #tpu.dot_dimension_numbers<[1], [0], [0], [1], [0, 0, 1, 1], [], []>} : vector<1x8xf32>, vector<8x6xf32>, vector<1x6xf32> -> vector<1x6xf32>
    %c1_411 = arith.constant 1 : index
    %c0_412 = arith.constant 0 : index
    %c0_413 = arith.constant 0 : index
    %577 = vector.load %arg24[%c1_411, %c0_412, %c0_413] : memref<3x1x8xf32, #tpu.memory_space<vmem>>, vector<1x1x8xf32>
    %578 = vector.shape_cast %577 : vector<1x1x8xf32> to vector<1x8xf32>
    %cst_414 = arith.constant dense<0.000000e+00> : vector<1x6xf32>
    %579 = tpu.matmul %578, %572, %cst_414 {dimension_numbers = #tpu.dot_dimension_numbers<[1], [0], [0], [1], [0, 0, 1, 1], [], []>} : vector<1x8xf32>, vector<8x6xf32>, vector<1x6xf32> -> vector<1x6xf32>
    %580 = arith.addf %576, %579 : vector<1x6xf32>
    %c2_415 = arith.constant 2 : index
    %c0_416 = arith.constant 0 : index
    %c0_417 = arith.constant 0 : index
    %581 = vector.load %arg24[%c2_415, %c0_416, %c0_417] : memref<3x1x8xf32, #tpu.memory_space<vmem>>, vector<1x1x8xf32>
    %582 = vector.shape_cast %581 : vector<1x1x8xf32> to vector<1x8xf32>
    %cst_418 = arith.constant dense<0.000000e+00> : vector<8x6xf32>
    %583 = tpu.matmul %572, %244, %cst_418 {dimension_numbers = #tpu.dot_dimension_numbers<[1], [0], [0], [1], [0, 0, 1, 1], [], []>} : vector<8x6xf32>, vector<6x6xf32>, vector<8x6xf32> -> vector<8x6xf32>
    %cst_419 = arith.constant dense<0.000000e+00> : vector<1x6xf32>
    %584 = tpu.matmul %582, %583, %cst_419 {dimension_numbers = #tpu.dot_dimension_numbers<[1], [0], [0], [1], [0, 0, 1, 1], [], []>} : vector<1x8xf32>, vector<8x6xf32>, vector<1x6xf32> -> vector<1x6xf32>
    %585 = arith.addf %580, %584 : vector<1x6xf32>
    %c0_420 = arith.constant 0 : index
    %c0_421 = arith.constant 0 : index
    %586 = vector.load %arg25[%c0_420, %c0_421] : memref<1x1xf32, #tpu.memory_space<vmem>>, vector<1x1xf32>
    %587 = vector.broadcast %586 : vector<1x1xf32> to vector<1x6xf32>
    %588 = arith.addf %585, %587 : vector<1x6xf32>
    %cst_422 = arith.constant dense<0.000000e+00> : vector<1xf32>
    %589 = vector.multi_reduction <add>, %588, %cst_422 [1] : vector<1x6xf32> to vector<1xf32>
    %590 = vector.shape_cast %589 : vector<1xf32> to vector<1x1xf32>
    %cst_423 = arith.constant 6.000000e+00 : f32
    %591 = vector.broadcast %cst_423 : f32 to vector<1x1xf32>
    %592 = arith.divf %590, %591 : vector<1x1xf32>
    %c1_424 = arith.constant 1 : index
    %c0_425 = arith.constant 0 : index
    %593 = vector.load %arg2[%c1_424, %c0_425] : memref<2x3xf32, #tpu.memory_space<vmem>>, vector<1x3xf32>
    %c1_426 = arith.constant 1 : index
    %c0_427 = arith.constant 0 : index
    %594 = vector.load %arg3[%c1_426, %c0_427] : memref<2x3xf32, #tpu.memory_space<vmem>>, vector<1x3xf32>
    %c0_428 = arith.constant 0 : index
    %c0_429 = arith.constant 0 : index
    %595 = vector.load %arg26[%c0_428, %c0_429] : memref<1x128xf32, #tpu.memory_space<vmem>>, vector<1x128xf32>
    %596 = vector.broadcast %592 : vector<1x1xf32> to vector<1x128xf32>
    %597 = arith.mulf %596, %595 : vector<1x128xf32>
    %c0_430 = arith.constant 0 : index
    %c0_431 = arith.constant 0 : index
    %598 = vector.load %arg27[%c0_430, %c0_431] : memref<3x128xf32, #tpu.memory_space<vmem>>, vector<3x128xf32>
    %cst_432 = arith.constant dense<0.000000e+00> : vector<1x128xf32>
    %599 = tpu.matmul %593, %598, %cst_432 {dimension_numbers = #tpu.dot_dimension_numbers<[1], [0], [0], [1], [0, 0, 1, 1], [], []>} : vector<1x3xf32>, vector<3x128xf32>, vector<1x128xf32> -> vector<1x128xf32>
    %600 = arith.addf %597, %599 : vector<1x128xf32>
    %c0_433 = arith.constant 0 : index
    %c0_434 = arith.constant 0 : index
    %601 = vector.load %arg28[%c0_433, %c0_434] : memref<3x128xf32, #tpu.memory_space<vmem>>, vector<3x128xf32>
    %cst_435 = arith.constant dense<0.000000e+00> : vector<1x128xf32>
    %602 = tpu.matmul %594, %601, %cst_435 {dimension_numbers = #tpu.dot_dimension_numbers<[1], [0], [0], [1], [0, 0, 1, 1], [], []>} : vector<1x3xf32>, vector<3x128xf32>, vector<1x128xf32> -> vector<1x128xf32>
    %603 = arith.addf %600, %602 : vector<1x128xf32>
    %c0_436 = arith.constant 0 : index
    %c0_437 = arith.constant 0 : index
    %604 = vector.load %arg29[%c0_436, %c0_437] : memref<1x128xf32, #tpu.memory_space<vmem>>, vector<1x128xf32>
    %605 = arith.addf %603, %604 : vector<1x128xf32>
    %cst_438 = arith.constant 0.000000e+00 : f32
    %606 = vector.broadcast %cst_438 : f32 to vector<1x128xf32>
    %607 = arith.cmpf ogt, %605, %606 : vector<1x128xf32>
    %cst_439 = arith.constant 2.000000e-01 : f32
    %608 = vector.broadcast %cst_439 : f32 to vector<1x128xf32>
    %609 = arith.mulf %608, %605 : vector<1x128xf32>
    %610 = arith.select %607, %605, %609 : vector<1x128xi1>, vector<1x128xf32>
    %c0_440 = arith.constant 0 : index
    %c0_441 = arith.constant 0 : index
    %611 = vector.load %arg30[%c0_440, %c0_441] : memref<128x64xf32, #tpu.memory_space<vmem>>, vector<128x64xf32>
    %cst_442 = arith.constant dense<0.000000e+00> : vector<1x64xf32>
    %612 = tpu.matmul %610, %611, %cst_442 {dimension_numbers = #tpu.dot_dimension_numbers<[1], [0], [0], [1], [0, 0, 1, 1], [], []>} : vector<1x128xf32>, vector<128x64xf32>, vector<1x64xf32> -> vector<1x64xf32>
    %c0_443 = arith.constant 0 : index
    %c0_444 = arith.constant 0 : index
    %613 = vector.load %arg31[%c0_443, %c0_444] : memref<1x64xf32, #tpu.memory_space<vmem>>, vector<1x64xf32>
    %614 = arith.addf %612, %613 : vector<1x64xf32>
    %cst_445 = arith.constant 0.000000e+00 : f32
    %615 = vector.broadcast %cst_445 : f32 to vector<1x64xf32>
    %616 = arith.cmpf ogt, %614, %615 : vector<1x64xf32>
    %cst_446 = arith.constant 2.000000e-01 : f32
    %617 = vector.broadcast %cst_446 : f32 to vector<1x64xf32>
    %618 = arith.mulf %617, %614 : vector<1x64xf32>
    %619 = arith.select %616, %614, %618 : vector<1x64xi1>, vector<1x64xf32>
    %c0_447 = arith.constant 0 : index
    %c0_448 = arith.constant 0 : index
    %620 = vector.load %arg32[%c0_447, %c0_448] : memref<64x1xf32, #tpu.memory_space<vmem>>, vector<64x1xf32>
    %cst_449 = arith.constant dense<0.000000e+00> : vector<1x1xf32>
    %621 = tpu.matmul %619, %620, %cst_449 {dimension_numbers = #tpu.dot_dimension_numbers<[1], [0], [0], [1], [0, 0, 1, 1], [], []>} : vector<1x64xf32>, vector<64x1xf32>, vector<1x1xf32> -> vector<1x1xf32>
    %c0_450 = arith.constant 0 : index
    %c0_451 = arith.constant 0 : index
    %622 = vector.load %arg33[%c0_450, %c0_451] : memref<1x1xf32, #tpu.memory_space<vmem>>, vector<1x1xf32>
    %623 = arith.addf %621, %622 : vector<1x1xf32>
    %c1_452 = arith.constant 1 : index
    %c0_453 = arith.constant 0 : index
    %624 = vector.load %arg34[%c1_452, %c0_453] : memref<2x1xf32, #tpu.memory_space<vmem>>, vector<1x1xf32>
    tpu.vector_store %arg34[%c1_452, %c0_453], %623 {strides = array<i32>} : memref<2x1xf32, #tpu.memory_space<vmem>>, vector<1x1xf32>,
    return
  }
}

</mosaic_0001>

<llo_original>
// kernel: discriminator_forward.1
$region0: #{discriminator_forward.1}
  #allocation0 [shape = 'u32[]', space=smem, size = 0x4, offset = 0x4, fixed_abs, tag = 'smem constant byte address 0x4 - core index']
  #allocation1 [shape = 'u32[72,128]{1,0:T(1,128)}', space=vmem, size = 0x9000, scoped, tag = 'internal scratch']
  #allocation2 [shape = 'f32[1,1]{1,0:T(1,128)S(1)}', space=vmem, size = 0x200, scoped, tag = 'scoped memory for discriminator_forward.1']
  #allocation3 [shape = 'f32[1,1]{1,0:T(1,128)S(1)}', space=vmem, size = 0x200, scoped, tag = 'scoped memory for discriminator_forward.1']
  %s0 = inlined_call_operand.smem [shape: u32[35], index: -1, kind: input, shape index: {}]
  %s1 = sld [smem:[%s0]]
  %s2 = scalar_lea.smem %s0, 1
  %s3 = sld [smem:[%s2]]
  %s4 = scalar_lea.smem %s0, 2
  %s5 = sld [smem:[%s4]]
  %s6 = scalar_lea.smem %s0, 3
  %s7 = sld [smem:[%s6]]
  %s8 = scalar_lea.smem %s0, 4
  %s9 = sld [smem:[%s8]]
  %s10 = scalar_lea.smem %s0, 5
  %s11 = sld [smem:[%s10]]
  %s12 = scalar_lea.smem %s0, 6
  %s13 = sld [smem:[%s12]]
  %s14 = scalar_lea.smem %s0, 7
  %s15 = sld [smem:[%s14]]
  %s16 = scalar_lea.smem %s0, 8
  %s17 = sld [smem:[%s16]]
  %s18 = scalar_lea.smem %s0, 9
  %s19 = sld [smem:[%s18]]
  %s20 = scalar_lea.smem %s0, 10
  %s21 = sld [smem:[%s20]]
  %s22 = scalar_lea.smem %s0, 11
  %s23 = sld [smem:[%s22]]
  %s24 = scalar_lea.smem %s0, 12
  %s25 = sld [smem:[%s24]]
  %s26 = scalar_lea.smem %s0, 13
  %s27 = sld [smem:[%s26]]
  %s28 = scalar_lea.smem %s0, 14
  %s29 = sld [smem:[%s28]]
  %s30 = scalar_lea.smem %s0, 15
  %s31 = sld [smem:[%s30]]
  %s32 = scalar_lea.smem %s0, 16
  %s33 = sld [smem:[%s32]]
  %s34 = scalar_lea.smem %s0, 17
  %s35 = sld [smem:[%s34]]
  %s36 = scalar_lea.smem %s0, 18
  %s37 = sld [smem:[%s36]]
  %s38 = scalar_lea.smem %s0, 19
  %s39 = sld [smem:[%s38]]
  %s40 = scalar_lea.smem %s0, 20
  %s41 = sld [smem:[%s40]]
  %s42 = scalar_lea.smem %s0, 21
  %s43 = sld [smem:[%s42]]
  %s44 = scalar_lea.smem %s0, 22
  %s45 = sld [smem:[%s44]]
  %s46 = scalar_lea.smem %s0, 23
  %s47 = sld [smem:[%s46]]
  %s48 = scalar_lea.smem %s0, 24
  %s49 = sld [smem:[%s48]]
  %s50 = scalar_lea.smem %s0, 25
  %s51 = sld [smem:[%s50]]
  %s52 = scalar_lea.smem %s0, 26
  %s53 = sld [smem:[%s52]]
  %s54 = scalar_lea.smem %s0, 27
  %s55 = sld [smem:[%s54]]
  %s56 = scalar_lea.smem %s0, 28
  %s57 = sld [smem:[%s56]]
  %s58 = scalar_lea.smem %s0, 29
  %s59 = sld [smem:[%s58]]
  %s60 = scalar_lea.smem %s0, 30
  %s61 = sld [smem:[%s60]]
  %s62 = scalar_lea.smem %s0, 31
  %s63 = sld [smem:[%s62]]
  %s64 = scalar_lea.smem %s0, 32
  %s65 = sld [smem:[%s64]]
  %s66 = scalar_lea.smem %s0, 33
  %s67 = sld [smem:[%s66]]
  %s68 = scalar_lea.smem %s0, 34
  %s69 = sld [smem:[%s68]]
  %s70 = sld [smem:[#allocation0]]
  $region150: #{discriminator_forward.1} parent=0
    _
  %s72 = ssub.s32 1, %s70
  %s73 = scalar_select 0, %s72, %s70
  %v74 = vstv %s51
  %75 = vst [vmem:[#allocation2] sm:$0x1] %v74
  %v76 = vstv %s67
  %77 = vst [vmem:[#allocation3] sm:$0x1] %v76
  $region1: #{discriminator_forward.1} parent=0
    #allocation4 [shape = 'u8[512]{0}', space=smem, size = 0x200, scoped, tag = 'input window, operand 0, single buffered']
    #allocation5 [shape = 's32[1]{0}', space=sflag, size = 0x4, scoped, tag = 'scoped memory for discriminator_forward.1']
    %78 = vsyncpa [#allocation5], 0
    // Predicated region
    $region2: #{discriminator_forward.1} parent=1 // pred_check
      _
    $region3: #{discriminator_forward.1} parent=1 // pred_check_branch
      %80 = sbr.rel (0) target = $region5
    $region4: #{discriminator_forward.1} parent=1 // pred_region
      %82 = vsyncadd [#allocation5], 0
      %s84 = sshll.u32 %s1, 4
      %s85 = int_to_ptr.vmem [resolvable:$true] %s84
      %87 = dma.vmem_to_smem %s85, 16, [#allocation4], [#allocation5]
    $region5: #{discriminator_forward.1} parent=1 // pred_fallthru
      _
    // Predicated region
    $region6: #{discriminator_forward.1} parent=1 // pred_check
      _
    $region7: #{discriminator_forward.1} parent=1 // pred_check_branch
      %89 = sbr.rel (0) target = $region9
    $region8: #{discriminator_forward.1} parent=1 // pred_region
      _
    $region9: #{discriminator_forward.1} parent=1 // pred_fallthru
      _
    // Predicated region
    $region10: #{discriminator_forward.1} parent=1 // pred_check
      _
    $region11: #{discriminator_forward.1} parent=1 // pred_check_branch
      %91 = sbr.rel (0) target = $region13
    $region12: #{discriminator_forward.1} parent=1 // pred_region
      _
    $region13: #{discriminator_forward.1} parent=1 // pred_fallthru
      _
    // Predicated region
    $region14: #{discriminator_forward.1} parent=1 // pred_check
      _
    $region15: #{discriminator_forward.1} parent=1 // pred_check_branch
      %93 = sbr.rel (0) target = $region17
    $region16: #{discriminator_forward.1} parent=1 // pred_region
      _
    $region17: #{discriminator_forward.1} parent=1 // pred_fallthru
      _
    // Predicated region
    $region18: #{discriminator_forward.1} parent=1 // pred_check
      _
    $region19: #{discriminator_forward.1} parent=1 // pred_check_branch
      %95 = sbr.rel (0) target = $region21
    $region20: #{discriminator_forward.1} parent=1 // pred_region
      _
    $region21: #{discriminator_forward.1} parent=1 // pred_fallthru
      _
    // Predicated region
    $region22: #{discriminator_forward.1} parent=1 // pred_check
      _
    $region23: #{discriminator_forward.1} parent=1 // pred_check_branch
      %97 = sbr.rel (0) target = $region25
    $region24: #{discriminator_forward.1} parent=1 // pred_region
      _
    $region25: #{discriminator_forward.1} parent=1 // pred_fallthru
      _
    // Predicated region
    $region26: #{discriminator_forward.1} parent=1 // pred_check
      _
    $region27: #{discriminator_forward.1} parent=1 // pred_check_branch
      %99 = sbr.rel (0) target = $region29
    $region28: #{discriminator_forward.1} parent=1 // pred_region
      _
    $region29: #{discriminator_forward.1} parent=1 // pred_fallthru
      _
    // Predicated region
    $region30: #{discriminator_forward.1} parent=1 // pred_check
      _
    $region31: #{discriminator_forward.1} parent=1 // pred_check_branch
      %101 = sbr.rel (0) target = $region33
    $region32: #{discriminator_forward.1} parent=1 // pred_region
      _
    $region33: #{discriminator_forward.1} parent=1 // pred_fallthru
      _
    // Predicated region
    $region34: #{discriminator_forward.1} parent=1 // pred_check
      _
    $region35: #{discriminator_forward.1} parent=1 // pred_check_branch
      %103 = sbr.rel (0) target = $region37
    $region36: #{discriminator_forward.1} parent=1 // pred_region
      _
    $region37: #{discriminator_forward.1} parent=1 // pred_fallthru
      _
    // Predicated region
    $region38: #{discriminator_forward.1} parent=1 // pred_check
      _
    $region39: #{discriminator_forward.1} parent=1 // pred_check_branch
      %105 = sbr.rel (0) target = $region41
    $region40: #{discriminator_forward.1} parent=1 // pred_region
      _
    $region41: #{discriminator_forward.1} parent=1 // pred_fallthru
      _
    // Predicated region
    $region42: #{discriminator_forward.1} parent=1 // pred_check
      _
    $region43: #{discriminator_forward.1} parent=1 // pred_check_branch
      %107 = sbr.rel (0) target = $region45
    $region44: #{discriminator_forward.1} parent=1 // pred_region
      _
    $region45: #{discriminator_forward.1} parent=1 // pred_fallthru
      _
    // Predicated region
    $region46: #{discriminator_forward.1} parent=1 // pred_check
      _
    $region47: #{discriminator_forward.1} parent=1 // pred_check_branch
      %109 = sbr.rel (0) target = $region49
    $region48: #{discriminator_forward.1} parent=1 // pred_region
      _
    $region49: #{discriminator_forward.1} parent=1 // pred_fallthru
      _
    // Predicated region
    $region50: #{discriminator_forward.1} parent=1 // pred_check
      _
    $region51: #{discriminator_forward.1} parent=1 // pred_check_branch
      %111 = sbr.rel (0) target = $region53
    $region52: #{discriminator_forward.1} parent=1 // pred_region
      _
    $region53: #{discriminator_forward.1} parent=1 // pred_fallthru
      _
    // Predicated region
    $region54: #{discriminator_forward.1} parent=1 // pred_check
      _
    $region55: #{discriminator_forward.1} parent=1 // pred_check_branch
      %113 = sbr.rel (0) target = $region57
    $region56: #{discriminator_forward.1} parent=1 // pred_region
      _
    $region57: #{discriminator_forward.1} parent=1 // pred_fallthru
      _
    // Predicated region
    $region58: #{discriminator_forward.1} parent=1 // pred_check
      _
    $region59: #{discriminator_forward.1} parent=1 // pred_check_branch
      %115 = sbr.rel (0) target = $region61
    $region60: #{discriminator_forward.1} parent=1 // pred_region
      _
    $region61: #{discriminator_forward.1} parent=1 // pred_fallthru
      _
    // Predicated region
    $region62: #{discriminator_forward.1} parent=1 // pred_check
      _
    $region63: #{discriminator_forward.1} parent=1 // pred_check_branch
      %117 = sbr.rel (0) target = $region65
    $region64: #{discriminator_forward.1} parent=1 // pred_region
      _
    $region65: #{discriminator_forward.1} parent=1 // pred_fallthru
      _
    // Predicated region
    $region66: #{discriminator_forward.1} parent=1 // pred_check
      _
    $region67: #{discriminator_forward.1} parent=1 // pred_check_branch
      %119 = sbr.rel (0) target = $region69
    $region68: #{discriminator_forward.1} parent=1 // pred_region
      _
    $region69: #{discriminator_forward.1} parent=1 // pred_fallthru
      _
    // Predicated region
    $region70: #{discriminator_forward.1} parent=1 // pred_check
      _
    $region71: #{discriminator_forward.1} parent=1 // pred_check_branch
      %121 = sbr.rel (0) target = $region73
    $region72: #{discriminator_forward.1} parent=1 // pred_region
      _
    $region73: #{discriminator_forward.1} parent=1 // pred_fallthru
      _
    // Predicated region
    $region74: #{discriminator_forward.1} parent=1 // pred_check
      _
    $region75: #{discriminator_forward.1} parent=1 // pred_check_branch
      %123 = sbr.rel (0) target = $region77
    $region76: #{discriminator_forward.1} parent=1 // pred_region
      _
    $region77: #{discriminator_forward.1} parent=1 // pred_fallthru
      _
    // Predicated region
    $region78: #{discriminator_forward.1} parent=1 // pred_check
      _
    $region79: #{discriminator_forward.1} parent=1 // pred_check_branch
      %125 = sbr.rel (0) target = $region81
    $region80: #{discriminator_forward.1} parent=1 // pred_region
      _
    $region81: #{discriminator_forward.1} parent=1 // pred_fallthru
      _
    // Predicated region
    $region82: #{discriminator_forward.1} parent=1 // pred_check
      _
    $region83: #{discriminator_forward.1} parent=1 // pred_check_branch
      %127 = sbr.rel (0) target = $region85
    $region84: #{discriminator_forward.1} parent=1 // pred_region
      _
    $region85: #{discriminator_forward.1} parent=1 // pred_fallthru
      _
    // Predicated region
    $region86: #{discriminator_forward.1} parent=1 // pred_check
      _
    $region87: #{discriminator_forward.1} parent=1 // pred_check_branch
      %129 = sbr.rel (0) target = $region89
    $region88: #{discriminator_forward.1} parent=1 // pred_region
      _
    $region89: #{discriminator_forward.1} parent=1 // pred_fallthru
      _
    // Predicated region
    $region90: #{discriminator_forward.1} parent=1 // pred_check
      _
    $region91: #{discriminator_forward.1} parent=1 // pred_check_branch
      %131 = sbr.rel (0) target = $region93
    $region92: #{discriminator_forward.1} parent=1 // pred_region
      _
    $region93: #{discriminator_forward.1} parent=1 // pred_fallthru
      _
    // Predicated region
    $region94: #{discriminator_forward.1} parent=1 // pred_check
      _
    $region95: #{discriminator_forward.1} parent=1 // pred_check_branch
      %133 = sbr.rel (0) target = $region97
    $region96: #{discriminator_forward.1} parent=1 // pred_region
      _
    $region97: #{discriminator_forward.1} parent=1 // pred_fallthru
      _
    // Predicated region
    $region98: #{discriminator_forward.1} parent=1 // pred_check
      _
    $region99: #{discriminator_forward.1} parent=1 // pred_check_branch
      %135 = sbr.rel (0) target = $region101
    $region100: #{discriminator_forward.1} parent=1 // pred_region
      _
    $region101: #{discriminator_forward.1} parent=1 // pred_fallthru
      _
    // Predicated region
    $region102: #{discriminator_forward.1} parent=1 // pred_check
      _
    $region103: #{discriminator_forward.1} parent=1 // pred_check_branch
      %137 = sbr.rel (0) target = $region105
    $region104: #{discriminator_forward.1} parent=1 // pred_region
      _
    $region105: #{discriminator_forward.1} parent=1 // pred_fallthru
      _
    // Predicated region
    $region106: #{discriminator_forward.1} parent=1 // pred_check
      _
    $region107: #{discriminator_forward.1} parent=1 // pred_check_branch
      %139 = sbr.rel (0) target = $region109
    $region108: #{discriminator_forward.1} parent=1 // pred_region
      _
    $region109: #{discriminator_forward.1} parent=1 // pred_fallthru
      _
    // Predicated region
    $region110: #{discriminator_forward.1} parent=1 // pred_check
      _
    $region111: #{discriminator_forward.1} parent=1 // pred_check_branch
      %141 = sbr.rel (0) target = $region113
    $region112: #{discriminator_forward.1} parent=1 // pred_region
      _
    $region113: #{discriminator_forward.1} parent=1 // pred_fallthru
      _
    // Predicated region
    $region114: #{discriminator_forward.1} parent=1 // pred_check
      _
    $region115: #{discriminator_forward.1} parent=1 // pred_check_branch
      %143 = sbr.rel (0) target = $region117
    $region116: #{discriminator_forward.1} parent=1 // pred_region
      _
    $region117: #{discriminator_forward.1} parent=1 // pred_fallthru
      _
    // Predicated region
    $region118: #{discriminator_forward.1} parent=1 // pred_check
      _
    $region119: #{discriminator_forward.1} parent=1 // pred_check_branch
      %145 = sbr.rel (0) target = $region121
    $region120: #{discriminator_forward.1} parent=1 // pred_region
      _
    $region121: #{discriminator_forward.1} parent=1 // pred_fallthru
      _
    // Predicated region
    $region122: #{discriminator_forward.1} parent=1 // pred_check
      _
    $region123: #{discriminator_forward.1} parent=1 // pred_check_branch
      %147 = sbr.rel (0) target = $region125
    $region124: #{discriminator_forward.1} parent=1 // pred_region
      _
    $region125: #{discriminator_forward.1} parent=1 // pred_fallthru
      _
    // Predicated region
    $region126: #{discriminator_forward.1} parent=1 // pred_check
      _
    $region127: #{discriminator_forward.1} parent=1 // pred_check_branch
      %149 = sbr.rel (0) target = $region129
    $region128: #{discriminator_forward.1} parent=1 // pred_region
      _
    $region129: #{discriminator_forward.1} parent=1 // pred_fallthru
      _
    // Predicated region
    $region130: #{discriminator_forward.1} parent=1 // pred_check
      _
    $region131: #{discriminator_forward.1} parent=1 // pred_check_branch
      %151 = sbr.rel (0) target = $region133
    $region132: #{discriminator_forward.1} parent=1 // pred_region
      _
    $region133: #{discriminator_forward.1} parent=1 // pred_fallthru
      _
    // Predicated region
    $region134: #{discriminator_forward.1} parent=1 // pred_check
      _
    $region135: #{discriminator_forward.1} parent=1 // pred_check_branch
      %153 = sbr.rel (0) target = $region137
    $region136: #{discriminator_forward.1} parent=1 // pred_region
      _
    $region137: #{discriminator_forward.1} parent=1 // pred_fallthru
      _
    // Predicated region
    $region138: #{discriminator_forward.1} parent=1 // pred_check
      _
    $region139: #{discriminator_forward.1} parent=1 // pred_check_branch
      %155 = sbr.rel (0) target = $region141
    $region140: #{discriminator_forward.1} parent=1 // pred_region
      %157 = dma.done [#allocation5], 16
    $region141: #{discriminator_forward.1} parent=1 // pred_fallthru
      _
    %158 = sfence
    %s159 = sld [smem:[#allocation4]]
    %s160 = sld [smem:[#allocation4 + $0x1]]
    %s161 = sld [smem:[#allocation4 + $0x2]]
    %v162 = vld [vmem:[%s3] sm:$0x1]
    %v163 = vld [vmem:[%s9] sm:$0xff]
    %v164 = vld [vmem:[%s9 + $0x8] sm:$0xff]
    %v165 = vlaneseq
    %v166 = vshrl.u32 %v165, 7
    %v167 = vadd.s32 %v166, 8
    %v168 = vlaneseq
    %v169 = vand.u32 %v168, 127
    %v170 = vmul.u32 %v169, 2
    %v171 = vadd.s32 %v170, 4294967293
    %vm172 = vcmp.eq.s32.totalorder %v166, %v171
    %vm173 = vcmp.eq.s32.totalorder %v167, %v171
    %v174 = vsel %vm172, 1.0, 0.0
    %v175 = vsel %vm173, 1.0, 0.0
    %vm176 = vcmask 130048
    %v178 = vsel %vm176, %v162, 0
    %180 = vmatpush.msra.mxu0 0.0
    %181 = vmatpush.msra.mxu0 0.0
    %182 = vmatpush.msra.mxu0 0.0
    %183 = vmatpush.msra.mxu0 0.0
    %184 = vmatpush.msra.mxu0 0.0
    %185 = vmatpush.msra.mxu0 0.0
    %186 = vmatpush.msra.mxu0 0.0
    %187 = vmatpush.msra.mxu0 0.0
    %188 = vmatpush.msra.mxu0 0.0
    %189 = vmatpush.msra.mxu0 0.0
    %190 = vmatpush.msra.mxu0 0.0
    %191 = vmatpush.msra.mxu0 0.0
    %192 = vmatpush.msra.mxu0 0.0
    %193 = vmatpush.msra.mxu0 0.0
    %194 = vmatpush.msra.mxu0 %v175
    %195 = vmatpush.msra.mxu0 %v174
    %196 = vmatmul.f32.gmra.mxu0 %v178
    %v197 = vpop.f32.mrf.mxu0
    %v198 = vadd.f32 0.0, %v197
    %199 = vdwg.mxu0
    %s200 = scalar_lea.vmem %s9, 16
    %v201 = vld [vmem:[%s200] sm:$0xff]
    %v202 = vld [vmem:[%s200 + $0x8] sm:$0xff]
    %v203 = vadd.s32 %v170, 4294967294
    %vm204 = vcmp.eq.s32.totalorder %v166, %v203
    %vm205 = vcmp.eq.s32.totalorder %v167, %v203
    %v206 = vsel %vm204, 1.0, 0.0
    %v207 = vsel %vm205, 1.0, 0.0
    %208 = vmatpush.msra.mxu0 0.0
    %209 = vmatpush.msra.mxu0 0.0
    %210 = vmatpush.msra.mxu0 0.0
    %211 = vmatpush.msra.mxu0 0.0
    %212 = vmatpush.msra.mxu0 0.0
    %213 = vmatpush.msra.mxu0 0.0
    %214 = vmatpush.msra.mxu0 0.0
    %215 = vmatpush.msra.mxu0 0.0
    %216 = vmatpush.msra.mxu0 0.0
    %217 = vmatpush.msra.mxu0 0.0
    %218 = vmatpush.msra.mxu0 0.0
    %219 = vmatpush.msra.mxu0 0.0
    %220 = vmatpush.msra.mxu0 0.0
    %221 = vmatpush.msra.mxu0 0.0
    %222 = vmatpush.msra.mxu0 %v207
    %223 = vmatpush.msra.mxu0 %v206
    %224 = vmatmul.f32.gmra.mxu0 %v178
    %v225 = vpop.f32.mrf.mxu0
    %v226 = vadd.f32 0.0, %v225
    %227 = vdwg.mxu0
    %vm228 = vcmask 7168
    %v230 = vsel %vm228, %v201, 0
    %v233 = vsel %vm228, %v202, 0
    %vm235 = vcmask 1040384
    %v237 = vsel %vm235, %v226, 0
    %239 = vmatpush.msra.mxu0 0.0
    %240 = vmatpush.msra.mxu0 0.0
    %241 = vmatpush.msra.mxu0 0.0
    %242 = vmatpush.msra.mxu0 0.0
    %243 = vmatpush.msra.mxu0 0.0
    %244 = vmatpush.msra.mxu0 0.0
    %245 = vmatpush.msra.mxu0 0.0
    %246 = vmatpush.msra.mxu0 0.0
    %247 = vmatpush.msra.mxu0 0.0
    %248 = vmatpush.msra.mxu0 0.0
    %249 = vmatpush.msra.mxu0 0.0
    %250 = vmatpush.msra.mxu0 0.0
    %251 = vmatpush.msra.mxu0 0.0
    %252 = vmatpush.msra.mxu0 0.0
    %253 = vmatpush.msra.mxu0 0.0
    %254 = vmatpush.msra.mxu0 %v237
    %255 = vmatmul.f32.gmra.mxu0 %v230
    %v256 = vpop.f32.mrf.mxu0
    %v257 = vadd.f32 0.0, %v256
    %258 = vmatmul.f32.gmra.mxu0 %v233
    %v259 = vpop.f32.mrf.mxu0
    %v260 = vadd.f32 0.0, %v259
    %261 = vdwg.mxu0
    %v263 = vsel %vm228, %v163, 0
    %v266 = vsel %vm228, %v164, 0
    %v269 = vsel %vm235, %v198, 0
    %271 = vmatpush.msra.mxu0 0.0
    %272 = vmatpush.msra.mxu0 0.0
    %273 = vmatpush.msra.mxu0 0.0
    %274 = vmatpush.msra.mxu0 0.0
    %275 = vmatpush.msra.mxu0 0.0
    %276 = vmatpush.msra.mxu0 0.0
    %277 = vmatpush.msra.mxu0 0.0
    %278 = vmatpush.msra.mxu0 0.0
    %279 = vmatpush.msra.mxu0 0.0
    %280 = vmatpush.msra.mxu0 0.0
    %281 = vmatpush.msra.mxu0 0.0
    %282 = vmatpush.msra.mxu0 0.0
    %283 = vmatpush.msra.mxu0 0.0
    %284 = vmatpush.msra.mxu0 0.0
    %285 = vmatpush.msra.mxu0 0.0
    %286 = vmatpush.msra.mxu0 %v269
    %287 = vmatmul.f32.gmra.mxu0 %v263
    %v288 = vpop.f32.mrf.mxu0
    %v289 = vadd.f32 %v257, %v288
    %290 = vmatmul.f32.gmra.mxu0 %v266
    %v291 = vpop.f32.mrf.mxu0
    %v292 = vadd.f32 %v260, %v291
    %293 = vdwg.mxu0
    %s294 = scalar_lea.vmem %s9, 32
    %v295 = vld [vmem:[%s294] sm:$0xff]
    %v296 = vld [vmem:[%s294 + $0x8] sm:$0xff]
    %v297 = vadd.s32 %v170, 4294967295
    %vm298 = vcmp.eq.s32.totalorder %v166, %v297
    %vm299 = vcmp.eq.s32.totalorder %v167, %v297
    %v300 = vsel %vm298, 1.0, 0.0
    %v301 = vsel %vm299, 1.0, 0.0
    %302 = vmatpush.msra.mxu0 0.0
    %303 = vmatpush.msra.mxu0 0.0
    %304 = vmatpush.msra.mxu0 0.0
    %305 = vmatpush.msra.mxu0 0.0
    %306 = vmatpush.msra.mxu0 0.0
    %307 = vmatpush.msra.mxu0 0.0
    %308 = vmatpush.msra.mxu0 0.0
    %309 = vmatpush.msra.mxu0 0.0
    %310 = vmatpush.msra.mxu0 0.0
    %311 = vmatpush.msra.mxu0 0.0
    %312 = vmatpush.msra.mxu0 0.0
    %313 = vmatpush.msra.mxu0 0.0
    %314 = vmatpush.msra.mxu0 0.0
    %315 = vmatpush.msra.mxu0 0.0
    %316 = vmatpush.msra.mxu0 %v301
    %317 = vmatpush.msra.mxu0 %v300
    %318 = vmatmul.f32.gmra.mxu0 %v178
    %v319 = vpop.f32.mrf.mxu0
    %v320 = vadd.f32 0.0, %v319
    %321 = vdwg.mxu0
    %v323 = vsel %vm228, %v295, 0
    %v326 = vsel %vm228, %v296, 0
    %v329 = vsel %vm235, %v320, 0
    %331 = vmatpush.msra.mxu0 0.0
    %332 = vmatpush.msra.mxu0 0.0
    %333 = vmatpush.msra.mxu0 0.0
    %334 = vmatpush.msra.mxu0 0.0
    %335 = vmatpush.msra.mxu0 0.0
    %336 = vmatpush.msra.mxu0 0.0
    %337 = vmatpush.msra.mxu0 0.0
    %338 = vmatpush.msra.mxu0 0.0
    %339 = vmatpush.msra.mxu0 0.0
    %340 = vmatpush.msra.mxu0 0.0
    %341 = vmatpush.msra.mxu0 0.0
    %342 = vmatpush.msra.mxu0 0.0
    %343 = vmatpush.msra.mxu0 0.0
    %344 = vmatpush.msra.mxu0 0.0
    %345 = vmatpush.msra.mxu0 0.0
    %346 = vmatpush.msra.mxu0 %v329
    %347 = vmatmul.f32.gmra.mxu0 %v323
    %v348 = vpop.f32.mrf.mxu0
    %v349 = vadd.f32 0.0, %v348
    %350 = vmatmul.f32.gmra.mxu0 %v326
    %v351 = vpop.f32.mrf.mxu0
    %v352 = vadd.f32 0.0, %v351
    %353 = vdwg.mxu0
    %v354 = vadd.f32 %v289, %v349
    %v355 = vadd.f32 %v292, %v352
    %s356 = scalar_lea.vmem %s9, 48
    %v357 = vld [vmem:[%s356] sm:$0xff]
    %v358 = vld [vmem:[%s356 + $0x8] sm:$0xff]
    %vm359 = vcmp.eq.s32.totalorder %v166, %v170
    %vm360 = vcmp.eq.s32.totalorder %v167, %v170
    %v361 = vsel %vm359, 1.0, 0.0
    %v362 = vsel %vm360, 1.0, 0.0
    %363 = vmatpush.msra.mxu0 0.0
    %364 = vmatpush.msra.mxu0 0.0
    %365 = vmatpush.msra.mxu0 0.0
    %366 = vmatpush.msra.mxu0 0.0
    %367 = vmatpush.msra.mxu0 0.0
    %368 = vmatpush.msra.mxu0 0.0
    %369 = vmatpush.msra.mxu0 0.0
    %370 = vmatpush.msra.mxu0 0.0
    %371 = vmatpush.msra.mxu0 0.0
    %372 = vmatpush.msra.mxu0 0.0
    %373 = vmatpush.msra.mxu0 0.0
    %374 = vmatpush.msra.mxu0 0.0
    %375 = vmatpush.msra.mxu0 0.0
    %376 = vmatpush.msra.mxu0 0.0
    %377 = vmatpush.msra.mxu0 %v362
    %378 = vmatpush.msra.mxu0 %v361
    %379 = vmatmul.f32.gmra.mxu0 %v178
    %v380 = vpop.f32.mrf.mxu0
    %v381 = vadd.f32 0.0, %v380
    %382 = vdwg.mxu0
    %v384 = vsel %vm228, %v357, 0
    %v387 = vsel %vm228, %v358, 0
    %v390 = vsel %vm235, %v381, 0
    %392 = vmatpush.msra.mxu0 0.0
    %393 = vmatpush.msra.mxu0 0.0
    %394 = vmatpush.msra.mxu0 0.0
    %395 = vmatpush.msra.mxu0 0.0
    %396 = vmatpush.msra.mxu0 0.0
    %397 = vmatpush.msra.mxu0 0.0
    %398 = vmatpush.msra.mxu0 0.0
    %399 = vmatpush.msra.mxu0 0.0
    %400 = vmatpush.msra.mxu0 0.0
    %401 = vmatpush.msra.mxu0 0.0
    %402 = vmatpush.msra.mxu0 0.0
    %403 = vmatpush.msra.mxu0 0.0
    %404 = vmatpush.msra.mxu0 0.0
    %405 = vmatpush.msra.mxu0 0.0
    %406 = vmatpush.msra.mxu0 0.0
    %407 = vmatpush.msra.mxu0 %v390
    %408 = vmatmul.f32.gmra.mxu0 %v384
    %v409 = vpop.f32.mrf.mxu0
    %v410 = vadd.f32 0.0, %v409
    %411 = vmatmul.f32.gmra.mxu0 %v387
    %v412 = vpop.f32.mrf.mxu0
    %v413 = vadd.f32 0.0, %v412
    %414 = vdwg.mxu0
    %v415 = vadd.f32 %v354, %v410
    %v416 = vadd.f32 %v355, %v413
    %s417 = scalar_lea.vmem %s9, 64
    %v418 = vld [vmem:[%s417] sm:$0xff]
    %v419 = vld [vmem:[%s417 + $0x8] sm:$0xff]
    %v420 = vadd.s32 %v170, 1
    %vm421 = vcmp.eq.s32.totalorder %v166, %v420
    %vm422 = vcmp.eq.s32.totalorder %v167, %v420
    %v423 = vsel %vm421, 1.0, 0.0
    %v424 = vsel %vm422, 1.0, 0.0
    %425 = vmatpush.msra.mxu0 0.0
    %426 = vmatpush.msra.mxu0 0.0
    %427 = vmatpush.msra.mxu0 0.0
    %428 = vmatpush.msra.mxu0 0.0
    %429 = vmatpush.msra.mxu0 0.0
    %430 = vmatpush.msra.mxu0 0.0
    %431 = vmatpush.msra.mxu0 0.0
    %432 = vmatpush.msra.mxu0 0.0
    %433 = vmatpush.msra.mxu0 0.0
    %434 = vmatpush.msra.mxu0 0.0
    %435 = vmatpush.msra.mxu0 0.0
    %436 = vmatpush.msra.mxu0 0.0
    %437 = vmatpush.msra.mxu0 0.0
    %438 = vmatpush.msra.mxu0 0.0
    %439 = vmatpush.msra.mxu0 %v424
    %440 = vmatpush.msra.mxu0 %v423
    %441 = vmatmul.f32.gmra.mxu0 %v178
    %v442 = vpop.f32.mrf.mxu0
    %v443 = vadd.f32 0.0, %v442
    %444 = vdwg.mxu0
    %v446 = vsel %vm228, %v418, 0
    %v449 = vsel %vm228, %v419, 0
    %v452 = vsel %vm235, %v443, 0
    %454 = vmatpush.msra.mxu0 0.0
    %455 = vmatpush.msra.mxu0 0.0
    %456 = vmatpush.msra.mxu0 0.0
    %457 = vmatpush.msra.mxu0 0.0
    %458 = vmatpush.msra.mxu0 0.0
    %459 = vmatpush.msra.mxu0 0.0
    %460 = vmatpush.msra.mxu0 0.0
    %461 = vmatpush.msra.mxu0 0.0
    %462 = vmatpush.msra.mxu0 0.0
    %463 = vmatpush.msra.mxu0 0.0
    %464 = vmatpush.msra.mxu0 0.0
    %465 = vmatpush.msra.mxu0 0.0
    %466 = vmatpush.msra.mxu0 0.0
    %467 = vmatpush.msra.mxu0 0.0
    %468 = vmatpush.msra.mxu0 0.0
    %469 = vmatpush.msra.mxu0 %v452
    %470 = vmatmul.f32.gmra.mxu0 %v446
    %v471 = vpop.f32.mrf.mxu0
    %v472 = vadd.f32 0.0, %v471
    %473 = vmatmul.f32.gmra.mxu0 %v449
    %v474 = vpop.f32.mrf.mxu0
    %v475 = vadd.f32 0.0, %v474
    %476 = vdwg.mxu0
    %v477 = vadd.f32 %v415, %v472
    %v478 = vadd.f32 %v416, %v475
    %s479 = scalar_lea.vmem %s9, 80
    %v480 = vld [vmem:[%s479] sm:$0xff]
    %v481 = vld [vmem:[%s479 + $0x8] sm:$0xff]
    %v482 = vadd.s32 %v170, 2
    %vm483 = vcmp.eq.s32.totalorder %v166, %v482
    %vm484 = vcmp.eq.s32.totalorder %v167, %v482
    %v485 = vsel %vm483, 1.0, 0.0
    %v486 = vsel %vm484, 1.0, 0.0
    %487 = vmatpush.msra.mxu0 0.0
    %488 = vmatpush.msra.mxu0 0.0
    %489 = vmatpush.msra.mxu0 0.0
    %490 = vmatpush.msra.mxu0 0.0
    %491 = vmatpush.msra.mxu0 0.0
    %492 = vmatpush.msra.mxu0 0.0
    %493 = vmatpush.msra.mxu0 0.0
    %494 = vmatpush.msra.mxu0 0.0
    %495 = vmatpush.msra.mxu0 0.0
    %496 = vmatpush.msra.mxu0 0.0
    %497 = vmatpush.msra.mxu0 0.0
    %498 = vmatpush.msra.mxu0 0.0
    %499 = vmatpush.msra.mxu0 0.0
    %500 = vmatpush.msra.mxu0 0.0
    %501 = vmatpush.msra.mxu0 %v486
    %502 = vmatpush.msra.mxu0 %v485
    %503 = vmatmul.f32.gmra.mxu0 %v178
    %v504 = vpop.f32.mrf.mxu0
    %v505 = vadd.f32 0.0, %v504
    %506 = vdwg.mxu0
    %v508 = vsel %vm228, %v480, 0
    %v511 = vsel %vm228, %v481, 0
    %v514 = vsel %vm235, %v505, 0
    %516 = vmatpush.msra.mxu0 0.0
    %517 = vmatpush.msra.mxu0 0.0
    %518 = vmatpush.msra.mxu0 0.0
    %519 = vmatpush.msra.mxu0 0.0
    %520 = vmatpush.msra.mxu0 0.0
    %521 = vmatpush.msra.mxu0 0.0
    %522 = vmatpush.msra.mxu0 0.0
    %523 = vmatpush.msra.mxu0 0.0
    %524 = vmatpush.msra.mxu0 0.0
    %525 = vmatpush.msra.mxu0 0.0
    %526 = vmatpush.msra.mxu0 0.0
    %527 = vmatpush.msra.mxu0 0.0
    %528 = vmatpush.msra.mxu0 0.0
    %529 = vmatpush.msra.mxu0 0.0
    %530 = vmatpush.msra.mxu0 0.0
    %531 = vmatpush.msra.mxu0 %v514
    %532 = vmatmul.f32.gmra.mxu0 %v508
    %v533 = vpop.f32.mrf.mxu0
    %v534 = vadd.f32 0.0, %v533
    %535 = vmatmul.f32.gmra.mxu0 %v511
    %v536 = vpop.f32.mrf.mxu0
    %v537 = vadd.f32 0.0, %v536
    %538 = vdwg.mxu0
    %v539 = vadd.f32 %v477, %v534
    %v540 = vadd.f32 %v478, %v537
    %s541 = scalar_lea.vmem %s9, 96
    %v542 = vld [vmem:[%s541] sm:$0xff]
    %v543 = vld [vmem:[%s541 + $0x8] sm:$0xff]
    %v544 = vadd.s32 %v170, 3
    %vm545 = vcmp.eq.s32.totalorder %v166, %v544
    %vm546 = vcmp.eq.s32.totalorder %v167, %v544
    %v547 = vsel %vm545, 1.0, 0.0
    %v548 = vsel %vm546, 1.0, 0.0
    %549 = vmatpush.msra.mxu0 0.0
    %550 = vmatpush.msra.mxu0 0.0
    %551 = vmatpush.msra.mxu0 0.0
    %552 = vmatpush.msra.mxu0 0.0
    %553 = vmatpush.msra.mxu0 0.0
    %554 = vmatpush.msra.mxu0 0.0
    %555 = vmatpush.msra.mxu0 0.0
    %556 = vmatpush.msra.mxu0 0.0
    %557 = vmatpush.msra.mxu0 0.0
    %558 = vmatpush.msra.mxu0 0.0
    %559 = vmatpush.msra.mxu0 0.0
    %560 = vmatpush.msra.mxu0 0.0
    %561 = vmatpush.msra.mxu0 0.0
    %562 = vmatpush.msra.mxu0 0.0
    %563 = vmatpush.msra.mxu0 %v548
    %564 = vmatpush.msra.mxu0 %v547
    %565 = vmatmul.f32.gmra.mxu0 %v178
    %v566 = vpop.f32.mrf.mxu0
    %v567 = vadd.f32 0.0, %v566
    %568 = vdwg.mxu0
    %v570 = vsel %vm228, %v542, 0
    %v573 = vsel %vm228, %v543, 0
    %v576 = vsel %vm235, %v567, 0
    %578 = vmatpush.msra.mxu0 0.0
    %579 = vmatpush.msra.mxu0 0.0
    %580 = vmatpush.msra.mxu0 0.0
    %581 = vmatpush.msra.mxu0 0.0
    %582 = vmatpush.msra.mxu0 0.0
    %583 = vmatpush.msra.mxu0 0.0
    %584 = vmatpush.msra.mxu0 0.0
    %585 = vmatpush.msra.mxu0 0.0
    %586 = vmatpush.msra.mxu0 0.0
    %587 = vmatpush.msra.mxu0 0.0
    %588 = vmatpush.msra.mxu0 0.0
    %589 = vmatpush.msra.mxu0 0.0
    %590 = vmatpush.msra.mxu0 0.0
    %591 = vmatpush.msra.mxu0 0.0
    %592 = vmatpush.msra.mxu0 0.0
    %593 = vmatpush.msra.mxu0 %v576
    %594 = vmatmul.f32.gmra.mxu0 %v570
    %v595 = vpop.f32.mrf.mxu0
    %v596 = vadd.f32 0.0, %v595
    %597 = vmatmul.f32.gmra.mxu0 %v573
    %v598 = vpop.f32.mrf.mxu0
    %v599 = vadd.f32 0.0, %v598
    %600 = vdwg.mxu0
    %v601 = vadd.f32 %v539, %v596
    %v602 = vadd.f32 %v540, %v599
    %v603 = vld [vmem:[%s11] sm:$0xff]
    %v604 = vld [vmem:[%s11 + $0x8] sm:$0xff]
    %606 = vset.pattern.permute.xlu0 0
    %607 = vperm.xlu0 %606, %v603
    %v608 = vpop.permute.xlu0 %607
    %611 = vset.pattern.permute.xlu0 0
    %612 = vperm.xlu0 %611, %v604
    %v613 = vpop.permute.xlu0 %612
    %v615 = vadd.f32 %v601, %v608
    %v616 = vadd.f32 %v602, %v613
    %vm617 = vcmp.gt.f32.partialorder %v615, 0.0
    %vm618 = vcmp.gt.f32.partialorder %v616, 0.0
    %v619 = vmul.f32 %v615, 0.2
    %v620 = vmul.f32 %v616, 0.2
    %v621 = vsel %vm617, %v615, %v619
    %v622 = vsel %vm618, %v616, %v620
    %v623 = vld [vmem:[%s13] sm:$0xff]
    %v624 = vld [vmem:[%s13 + $0x8] sm:$0xff]
    %v625 = vld [vmem:[%s13 + $0x10] sm:$0xff]
    %v626 = vld [vmem:[%s13 + $0x18] sm:$0xff]
    %v627 = vadd.s32 %v169, 4294967295
    %vm628 = vcmp.eq.s32.totalorder %v166, %v627
    %v629 = vsel %vm628, 1.0, 0.0
    %vm630 = vcmask 64512
    %v632 = vsel %vm630, %v621, 0
    %v635 = vsel %vm630, %v622, 0
    %637 = vmatpush.msra.mxu0 0.0
    %638 = vmatpush.msra.mxu0 0.0
    %639 = vmatpush.msra.mxu0 0.0
    %640 = vmatpush.msra.mxu0 0.0
    %641 = vmatpush.msra.mxu0 0.0
    %642 = vmatpush.msra.mxu0 0.0
    %643 = vmatpush.msra.mxu0 0.0
    %644 = vmatpush.msra.mxu0 0.0
    %645 = vmatpush.msra.mxu0 0.0
    %646 = vmatpush.msra.mxu0 0.0
    %647 = vmatpush.msra.mxu0 0.0
    %648 = vmatpush.msra.mxu0 0.0
    %649 = vmatpush.msra.mxu0 0.0
    %650 = vmatpush.msra.mxu0 0.0
    %651 = vmatpush.msra.mxu0 0.0
    %652 = vmatpush.msra.mxu0 %v629
    %653 = vmatmul.f32.gmra.mxu0 %v632
    %v654 = vpop.f32.mrf.mxu0
    %v655 = vadd.f32 0.0, %v654
    %656 = vmatmul.f32.gmra.mxu0 %v635
    %v657 = vpop.f32.mrf.mxu0
    %v658 = vadd.f32 0.0, %v657
    %659 = vdwg.mxu0
    %s660 = scalar_lea.vmem %s13, 32
    %v661 = vld [vmem:[%s660] sm:$0xff]
    %v662 = vld [vmem:[%s660 + $0x8] sm:$0xff]
    %v663 = vld [vmem:[%s660 + $0x10] sm:$0xff]
    %v664 = vld [vmem:[%s660 + $0x18] sm:$0xff]
    %v666 = vsel %vm176, %v661, 0
    %v669 = vsel %vm176, %v662, 0
    %v672 = vsel %vm176, %v663, 0
    %v675 = vsel %vm176, %v664, 0
    %677 = vmatpush.msra.mxu0 0.0
    %678 = vmatpush.msra.mxu0 0.0
    %679 = vmatpush.msra.mxu0 0.0
    %680 = vmatpush.msra.mxu0 0.0
    %681 = vmatpush.msra.mxu0 0.0
    %682 = vmatpush.msra.mxu0 0.0
    %683 = vmatpush.msra.mxu0 0.0
    %684 = vmatpush.msra.mxu0 0.0
    %685 = vmatpush.msra.mxu0 0.0
    %686 = vmatpush.msra.mxu0 0.0
    %687 = vmatpush.msra.mxu0 0.0
    %688 = vmatpush.msra.mxu0 0.0
    %689 = vmatpush.msra.mxu0 0.0
    %690 = vmatpush.msra.mxu0 0.0
    %691 = vmatpush.msra.mxu0 %v622
    %692 = vmatpush.msra.mxu0 %v621
    %693 = vmatmul.f32.gmra.mxu0 %v666
    %v694 = vpop.f32.mrf.mxu0
    %v695 = vadd.f32 0.0, %v694
    %696 = vmatmul.f32.gmra.mxu0 %v669
    %v697 = vpop.f32.mrf.mxu0
    %v698 = vadd.f32 0.0, %v697
    %699 = vmatmul.f32.gmra.mxu0 %v672
    %v700 = vpop.f32.mrf.mxu0
    %v701 = vadd.f32 0.0, %v700
    %702 = vmatmul.f32.gmra.mxu0 %v675
    %v703 = vpop.f32.mrf.mxu0
    %v704 = vadd.f32 0.0, %v703
    %705 = vdwg.mxu0
    %v707 = vsel %vm176, %v623, 0
    %v710 = vsel %vm176, %v624, 0
    %v713 = vsel %vm176, %v625, 0
    %v716 = vsel %vm176, %v626, 0
    %718 = vmatpush.msra.mxu0 0.0
    %719 = vmatpush.msra.mxu0 0.0
    %720 = vmatpush.msra.mxu0 0.0
    %721 = vmatpush.msra.mxu0 0.0
    %722 = vmatpush.msra.mxu0 0.0
    %723 = vmatpush.msra.mxu0 0.0
    %724 = vmatpush.msra.mxu0 0.0
    %725 = vmatpush.msra.mxu0 0.0
    %726 = vmatpush.msra.mxu0 0.0
    %727 = vmatpush.msra.mxu0 0.0
    %728 = vmatpush.msra.mxu0 0.0
    %729 = vmatpush.msra.mxu0 0.0
    %730 = vmatpush.msra.mxu0 0.0
    %731 = vmatpush.msra.mxu0 0.0
    %732 = vmatpush.msra.mxu0 %v658
    %733 = vmatpush.msra.mxu0 %v655
    %734 = vmatmul.f32.gmra.mxu0 %v707
    %v735 = vpop.f32.mrf.mxu0
    %v736 = vadd.f32 %v695, %v735
    %737 = vmatmul.f32.gmra.mxu0 %v710
    %v738 = vpop.f32.mrf.mxu0
    %v739 = vadd.f32 %v698, %v738
    %740 = vmatmul.f32.gmra.mxu0 %v713
    %v741 = vpop.f32.mrf.mxu0
    %v742 = vadd.f32 %v701, %v741
    %743 = vmatmul.f32.gmra.mxu0 %v716
    %v744 = vpop.f32.mrf.mxu0
    %v745 = vadd.f32 %v704, %v744
    %746 = vdwg.mxu0
    %s747 = scalar_lea.vmem %s13, 64
    %v748 = vld [vmem:[%s747] sm:$0xff]
    %v749 = vld [vmem:[%s747 + $0x8] sm:$0xff]
    %v750 = vld [vmem:[%s747 + $0x10] sm:$0xff]
    %v751 = vld [vmem:[%s747 + $0x18] sm:$0xff]
    %v752 = vadd.s32 %v169, 1
    %vm753 = vcmp.eq.s32.totalorder %v166, %v752
    %v754 = vsel %vm753, 1.0, 0.0
    %755 = vmatpush.msra.mxu0 0.0
    %756 = vmatpush.msra.mxu0 0.0
    %757 = vmatpush.msra.mxu0 0.0
    %758 = vmatpush.msra.mxu0 0.0
    %759 = vmatpush.msra.mxu0 0.0
    %760 = vmatpush.msra.mxu0 0.0
    %761 = vmatpush.msra.mxu0 0.0
    %762 = vmatpush.msra.mxu0 0.0
    %763 = vmatpush.msra.mxu0 0.0
    %764 = vmatpush.msra.mxu0 0.0
    %765 = vmatpush.msra.mxu0 0.0
    %766 = vmatpush.msra.mxu0 0.0
    %767 = vmatpush.msra.mxu0 0.0
    %768 = vmatpush.msra.mxu0 0.0
    %769 = vmatpush.msra.mxu0 0.0
    %770 = vmatpush.msra.mxu0 %v754
    %771 = vmatmul.f32.gmra.mxu0 %v632
    %v772 = vpop.f32.mrf.mxu0
    %v773 = vadd.f32 0.0, %v772
    %774 = vmatmul.f32.gmra.mxu0 %v635
    %v775 = vpop.f32.mrf.mxu0
    %v776 = vadd.f32 0.0, %v775
    %777 = vdwg.mxu0
    %v779 = vsel %vm176, %v748, 0
    %v782 = vsel %vm176, %v749, 0
    %v785 = vsel %vm176, %v750, 0
    %v788 = vsel %vm176, %v751, 0
    %790 = vmatpush.msra.mxu0 0.0
    %791 = vmatpush.msra.mxu0 0.0
    %792 = vmatpush.msra.mxu0 0.0
    %793 = vmatpush.msra.mxu0 0.0
    %794 = vmatpush.msra.mxu0 0.0
    %795 = vmatpush.msra.mxu0 0.0
    %796 = vmatpush.msra.mxu0 0.0
    %797 = vmatpush.msra.mxu0 0.0
    %798 = vmatpush.msra.mxu0 0.0
    %799 = vmatpush.msra.mxu0 0.0
    %800 = vmatpush.msra.mxu0 0.0
    %801 = vmatpush.msra.mxu0 0.0
    %802 = vmatpush.msra.mxu0 0.0
    %803 = vmatpush.msra.mxu0 0.0
    %804 = vmatpush.msra.mxu0 %v776
    %805 = vmatpush.msra.mxu0 %v773
    %806 = vmatmul.f32.gmra.mxu0 %v779
    %v807 = vpop.f32.mrf.mxu0
    %v808 = vadd.f32 0.0, %v807
    %809 = vmatmul.f32.gmra.mxu0 %v782
    %v810 = vpop.f32.mrf.mxu0
    %v811 = vadd.f32 0.0, %v810
    %812 = vmatmul.f32.gmra.mxu0 %v785
    %v813 = vpop.f32.mrf.mxu0
    %v814 = vadd.f32 0.0, %v813
    %815 = vmatmul.f32.gmra.mxu0 %v788
    %v816 = vpop.f32.mrf.mxu0
    %v817 = vadd.f32 0.0, %v816
    %818 = vdwg.mxu0
    %v819 = vadd.f32 %v736, %v808
    %v820 = vadd.f32 %v739, %v811
    %v821 = vadd.f32 %v742, %v814
    %v822 = vadd.f32 %v745, %v817
    %v823 = vld [vmem:[%s15] sm:$0xff]
    %v824 = vld [vmem:[%s15 + $0x8] sm:$0xff]
    %v825 = vld [vmem:[%s15 + $0x10] sm:$0xff]
    %v826 = vld [vmem:[%s15 + $0x18] sm:$0xff]
    %828 = vset.pattern.permute.xlu0 0
    %829 = vperm.xlu0 %828, %v823
    %v830 = vpop.permute.xlu0 %829
    %833 = vset.pattern.permute.xlu0 0
    %834 = vperm.xlu0 %833, %v824
    %v835 = vpop.permute.xlu0 %834
    %838 = vset.pattern.permute.xlu0 0
    %839 = vperm.xlu0 %838, %v825
    %v840 = vpop.permute.xlu0 %839
    %843 = vset.pattern.permute.xlu0 0
    %844 = vperm.xlu0 %843, %v826
    %v845 = vpop.permute.xlu0 %844
    %v847 = vadd.f32 %v819, %v830
    %v848 = vadd.f32 %v820, %v835
    %v849 = vadd.f32 %v821, %v840
    %v850 = vadd.f32 %v822, %v845
    %vm851 = vcmp.gt.f32.partialorder %v847, 0.0
    %vm852 = vcmp.gt.f32.partialorder %v848, 0.0
    %vm853 = vcmp.gt.f32.partialorder %v849, 0.0
    %vm854 = vcmp.gt.f32.partialorder %v850, 0.0
    %v855 = vmul.f32 %v847, 0.2
    %v856 = vmul.f32 %v848, 0.2
    %v857 = vmul.f32 %v849, 0.2
    %v858 = vmul.f32 %v850, 0.2
    %v859 = vsel %vm851, %v847, %v855
    %v860 = vsel %vm852, %v848, %v856
    %v861 = vsel %vm853, %v849, %v857
    %v862 = vsel %vm854, %v850, %v858
    %v863 = vld [vmem:[%s17] sm:$0xff]
    %v864 = vld [vmem:[%s17 + $0x8] sm:$0xff]
    %v865 = vld [vmem:[%s17 + $0x10] sm:$0xff]
    %v866 = vld [vmem:[%s17 + $0x18] sm:$0xff]
    %v867 = vld [vmem:[%s19] sm:$0xff]
    %v868 = vld [vmem:[%s19 + $0x8] sm:$0xff]
    %v869 = vld [vmem:[%s19 + $0x10] sm:$0xff]
    %v870 = vld [vmem:[%s19 + $0x18] sm:$0xff]
    %872 = vset.pattern.permute.xlu0 0
    %873 = vperm.xlu0 %872, %v867
    %v874 = vpop.permute.xlu0 %873
    %877 = vset.pattern.permute.xlu0 0
    %878 = vperm.xlu0 %877, %v868
    %v879 = vpop.permute.xlu0 %878
    %882 = vset.pattern.permute.xlu0 0
    %883 = vperm.xlu0 %882, %v869
    %v884 = vpop.permute.xlu0 %883
    %887 = vset.pattern.permute.xlu0 0
    %888 = vperm.xlu0 %887, %v870
    %v889 = vpop.permute.xlu0 %888
    %v892 = vsel %vm176, %v863, 0
    %v895 = vsel %vm176, %v864, 0
    %v898 = vsel %vm176, %v865, 0
    %v901 = vsel %vm176, %v866, 0
    %903 = vmatpush.msra.mxu0 0.0
    %904 = vmatpush.msra.mxu0 0.0
    %905 = vmatpush.msra.mxu0 0.0
    %906 = vmatpush.msra.mxu0 0.0
    %907 = vmatpush.msra.mxu0 0.0
    %908 = vmatpush.msra.mxu0 0.0
    %909 = vmatpush.msra.mxu0 0.0
    %910 = vmatpush.msra.mxu0 0.0
    %911 = vmatpush.msra.mxu0 0.0
    %912 = vmatpush.msra.mxu0 0.0
    %913 = vmatpush.msra.mxu0 0.0
    %914 = vmatpush.msra.mxu0 0.0
    %915 = vmatpush.msra.mxu0 0.0
    %916 = vmatpush.msra.mxu0 0.0
    %917 = vmatpush.msra.mxu0 %v622
    %918 = vmatpush.msra.mxu0 %v621
    %919 = vmatmul.f32.gmra.mxu0 %v892
    %v920 = vpop.f32.mrf.mxu0
    %v921 = vadd.f32 %v874, %v920
    %922 = vmatmul.f32.gmra.mxu0 %v895
    %v923 = vpop.f32.mrf.mxu0
    %v924 = vadd.f32 %v879, %v923
    %925 = vmatmul.f32.gmra.mxu0 %v898
    %v926 = vpop.f32.mrf.mxu0
    %v927 = vadd.f32 %v884, %v926
    %928 = vmatmul.f32.gmra.mxu0 %v901
    %v929 = vpop.f32.mrf.mxu0
    %v930 = vadd.f32 %v889, %v929
    %931 = vdwg.mxu0
    %v932 = vadd.f32 %v859, %v921
    %v933 = vadd.f32 %v860, %v924
    %v934 = vadd.f32 %v861, %v927
    %v935 = vadd.f32 %v862, %v930
    %v936 = vld [vmem:[%s21] sm:$0xff]
    %v937 = vld [vmem:[%s21 + $0x8] sm:$0xff]
    %v938 = vld [vmem:[%s21 + $0x10] sm:$0xff]
    %v939 = vld [vmem:[%s21 + $0x18] sm:$0xff]
    %v940 = vld [vmem:[%s21 + $0x20] sm:$0xff]
    %v941 = vld [vmem:[%s21 + $0x28] sm:$0xff]
    %v942 = vld [vmem:[%s21 + $0x30] sm:$0xff]
    %v943 = vld [vmem:[%s21 + $0x38] sm:$0xff]
    %v945 = vsel %vm630, %v932, 0
    %v948 = vsel %vm630, %v933, 0
    %v951 = vsel %vm630, %v934, 0
    %v954 = vsel %vm630, %v935, 0
    %956 = vmatpush.msra.mxu0 0.0
    %957 = vmatpush.msra.mxu0 0.0
    %958 = vmatpush.msra.mxu0 0.0
    %959 = vmatpush.msra.mxu0 0.0
    %960 = vmatpush.msra.mxu0 0.0
    %961 = vmatpush.msra.mxu0 0.0
    %962 = vmatpush.msra.mxu0 0.0
    %963 = vmatpush.msra.mxu0 0.0
    %964 = vmatpush.msra.mxu0 0.0
    %965 = vmatpush.msra.mxu0 0.0
    %966 = vmatpush.msra.mxu0 0.0
    %967 = vmatpush.msra.mxu0 0.0
    %968 = vmatpush.msra.mxu0 0.0
    %969 = vmatpush.msra.mxu0 0.0
    %970 = vmatpush.msra.mxu0 0.0
    %971 = vmatpush.msra.mxu0 %v629
    %972 = vmatmul.f32.gmra.mxu0 %v945
    %v973 = vpop.f32.mrf.mxu0
    %v974 = vadd.f32 0.0, %v973
    %975 = vmatmul.f32.gmra.mxu0 %v948
    %v976 = vpop.f32.mrf.mxu0
    %v977 = vadd.f32 0.0, %v976
    %978 = vmatmul.f32.gmra.mxu0 %v951
    %v979 = vpop.f32.mrf.mxu0
    %v980 = vadd.f32 0.0, %v979
    %981 = vmatmul.f32.gmra.mxu0 %v954
    %v982 = vpop.f32.mrf.mxu0
    %v983 = vadd.f32 0.0, %v982
    %984 = vdwg.mxu0
    %s985 = scalar_lea.vmem %s21, 64
    %v986 = vld [vmem:[%s985] sm:$0xff]
    %v987 = vld [vmem:[%s985 + $0x8] sm:$0xff]
    %v988 = vld [vmem:[%s985 + $0x10] sm:$0xff]
    %v989 = vld [vmem:[%s985 + $0x18] sm:$0xff]
    %v990 = vld [vmem:[%s985 + $0x20] sm:$0xff]
    %v991 = vld [vmem:[%s985 + $0x28] sm:$0xff]
    %v992 = vld [vmem:[%s985 + $0x30] sm:$0xff]
    %v993 = vld [vmem:[%s985 + $0x38] sm:$0xff]
    %994 = vmatpush.msra.mxu0 0.0
    %995 = vmatpush.msra.mxu0 0.0
    %996 = vmatpush.msra.mxu0 0.0
    %997 = vmatpush.msra.mxu0 0.0
    %998 = vmatpush.msra.mxu0 0.0
    %999 = vmatpush.msra.mxu0 0.0
    %1000 = vmatpush.msra.mxu0 0.0
    %1001 = vmatpush.msra.mxu0 0.0
    %1002 = vmatpush.msra.mxu0 0.0
    %1003 = vmatpush.msra.mxu0 0.0
    %1004 = vmatpush.msra.mxu0 0.0
    %1005 = vmatpush.msra.mxu0 0.0
    %1006 = vmatpush.msra.mxu0 0.0
    %1007 = vmatpush.msra.mxu0 0.0
    %1008 = vmatpush.msra.mxu0 0.0
    %1009 = vmatpush.msra.mxu0 %v754
    %1010 = vmatmul.f32.gmra.mxu0 %v945
    %v1011 = vpop.f32.mrf.mxu0
    %v1012 = vadd.f32 0.0, %v1011
    %1013 = vmatmul.f32.gmra.mxu0 %v948
    %v1014 = vpop.f32.mrf.mxu0
    %v1015 = vadd.f32 0.0, %v1014
    %1016 = vmatmul.f32.gmra.mxu0 %v951
    %v1017 = vpop.f32.mrf.mxu0
    %v1018 = vadd.f32 0.0, %v1017
    %1019 = vmatmul.f32.gmra.mxu0 %v954
    %v1020 = vpop.f32.mrf.mxu0
    %v1021 = vadd.f32 0.0, %v1020
    %1022 = vdwg.mxu0
    %vm1023 = vcmask 261120
    %v1025 = vsel %vm1023, %v986, 0
    %v1028 = vsel %vm1023, %v987, 0
    %v1031 = vsel %vm1023, %v988, 0
    %v1034 = vsel %vm1023, %v989, 0
    %v1037 = vsel %vm1023, %v990, 0
    %v1040 = vsel %vm1023, %v991, 0
    %v1043 = vsel %vm1023, %v992, 0
    %v1046 = vsel %vm1023, %v993, 0
    %1048 = vmatpush.msra.mxu0 0.0
    %1049 = vmatpush.msra.mxu0 0.0
    %1050 = vmatpush.msra.mxu0 0.0
    %1051 = vmatpush.msra.mxu0 0.0
    %1052 = vmatpush.msra.mxu0 0.0
    %1053 = vmatpush.msra.mxu0 0.0
    %1054 = vmatpush.msra.mxu0 0.0
    %1055 = vmatpush.msra.mxu0 0.0
    %1056 = vmatpush.msra.mxu0 0.0
    %1057 = vmatpush.msra.mxu0 0.0
    %1058 = vmatpush.msra.mxu0 0.0
    %1059 = vmatpush.msra.mxu0 0.0
    %1060 = vmatpush.msra.mxu0 %v1021
    %1061 = vmatpush.msra.mxu0 %v1018
    %1062 = vmatpush.msra.mxu0 %v1015
    %1063 = vmatpush.msra.mxu0 %v1012
    %1064 = vmatmul.f32.gmra.mxu0 %v1025
    %v1065 = vpop.f32.mrf.mxu0
    %v1066 = vadd.f32 0.0, %v1065
    %1067 = vmatmul.f32.gmra.mxu0 %v1028
    %v1068 = vpop.f32.mrf.mxu0
    %v1069 = vadd.f32 0.0, %v1068
    %1070 = vmatmul.f32.gmra.mxu0 %v1031
    %v1071 = vpop.f32.mrf.mxu0
    %v1072 = vadd.f32 0.0, %v1071
    %1073 = vmatmul.f32.gmra.mxu0 %v1034
    %v1074 = vpop.f32.mrf.mxu0
    %v1075 = vadd.f32 0.0, %v1074
    %1076 = vmatmul.f32.gmra.mxu0 %v1037
    %v1077 = vpop.f32.mrf.mxu0
    %v1078 = vadd.f32 0.0, %v1077
    %1079 = vmatmul.f32.gmra.mxu0 %v1040
    %v1080 = vpop.f32.mrf.mxu0
    %v1081 = vadd.f32 0.0, %v1080
    %1082 = vmatmul.f32.gmra.mxu0 %v1043
    %v1083 = vpop.f32.mrf.mxu0
    %v1084 = vadd.f32 0.0, %v1083
    %1085 = vmatmul.f32.gmra.mxu0 %v1046
    %v1086 = vpop.f32.mrf.mxu0
    %v1087 = vadd.f32 0.0, %v1086
    %1088 = vdwg.mxu0
    %v1090 = vsel %vm1023, %v936, 0
    %v1093 = vsel %vm1023, %v937, 0
    %v1096 = vsel %vm1023, %v938, 0
    %v1099 = vsel %vm1023, %v939, 0
    %v1102 = vsel %vm1023, %v940, 0
    %v1105 = vsel %vm1023, %v941, 0
    %v1108 = vsel %vm1023, %v942, 0
    %v1111 = vsel %vm1023, %v943, 0
    %1113 = vmatpush.msra.mxu0 0.0
    %1114 = vmatpush.msra.mxu0 0.0
    %1115 = vmatpush.msra.mxu0 0.0
    %1116 = vmatpush.msra.mxu0 0.0
    %1117 = vmatpush.msra.mxu0 0.0
    %1118 = vmatpush.msra.mxu0 0.0
    %1119 = vmatpush.msra.mxu0 0.0
    %1120 = vmatpush.msra.mxu0 0.0
    %1121 = vmatpush.msra.mxu0 0.0
    %1122 = vmatpush.msra.mxu0 0.0
    %1123 = vmatpush.msra.mxu0 0.0
    %1124 = vmatpush.msra.mxu0 0.0
    %1125 = vmatpush.msra.mxu0 %v983
    %1126 = vmatpush.msra.mxu0 %v980
    %1127 = vmatpush.msra.mxu0 %v977
    %1128 = vmatpush.msra.mxu0 %v974
    %1129 = vmatmul.f32.gmra.mxu0 %v1090
    %v1130 = vpop.f32.mrf.mxu0
    %v1131 = vadd.f32 %v1066, %v1130
    %1132 = vmatmul.f32.gmra.mxu0 %v1093
    %v1133 = vpop.f32.mrf.mxu0
    %v1134 = vadd.f32 %v1069, %v1133
    %1135 = vmatmul.f32.gmra.mxu0 %v1096
    %v1136 = vpop.f32.mrf.mxu0
    %v1137 = vadd.f32 %v1072, %v1136
    %1138 = vmatmul.f32.gmra.mxu0 %v1099
    %v1139 = vpop.f32.mrf.mxu0
    %v1140 = vadd.f32 %v1075, %v1139
    %1141 = vmatmul.f32.gmra.mxu0 %v1102
    %v1142 = vpop.f32.mrf.mxu0
    %v1143 = vadd.f32 %v1078, %v1142
    %1144 = vmatmul.f32.gmra.mxu0 %v1105
    %v1145 = vpop.f32.mrf.mxu0
    %v1146 = vadd.f32 %v1081, %v1145
    %1147 = vmatmul.f32.gmra.mxu0 %v1108
    %v1148 = vpop.f32.mrf.mxu0
    %v1149 = vadd.f32 %v1084, %v1148
    %1150 = vmatmul.f32.gmra.mxu0 %v1111
    %v1151 = vpop.f32.mrf.mxu0
    %v1152 = vadd.f32 %v1087, %v1151
    %1153 = vdwg.mxu0
    %s1154 = scalar_lea.vmem %s21, 128
    %v1155 = vld [vmem:[%s1154] sm:$0xff]
    %v1156 = vld [vmem:[%s1154 + $0x8] sm:$0xff]
    %v1157 = vld [vmem:[%s1154 + $0x10] sm:$0xff]
    %v1158 = vld [vmem:[%s1154 + $0x18] sm:$0xff]
    %v1159 = vld [vmem:[%s1154 + $0x20] sm:$0xff]
    %v1160 = vld [vmem:[%s1154 + $0x28] sm:$0xff]
    %v1161 = vld [vmem:[%s1154 + $0x30] sm:$0xff]
    %v1162 = vld [vmem:[%s1154 + $0x38] sm:$0xff]
    %v1163 = vadd.s32 %v169, 3
    %vm1164 = vcmp.eq.s32.totalorder %v166, %v1163
    %v1165 = vsel %vm1164, 1.0, 0.0
    %1166 = vmatpush.msra.mxu0 0.0
    %1167 = vmatpush.msra.mxu0 0.0
    %1168 = vmatpush.msra.mxu0 0.0
    %1169 = vmatpush.msra.mxu0 0.0
    %1170 = vmatpush.msra.mxu0 0.0
    %1171 = vmatpush.msra.mxu0 0.0
    %1172 = vmatpush.msra.mxu0 0.0
    %1173 = vmatpush.msra.mxu0 0.0
    %1174 = vmatpush.msra.mxu0 0.0
    %1175 = vmatpush.msra.mxu0 0.0
    %1176 = vmatpush.msra.mxu0 0.0
    %1177 = vmatpush.msra.mxu0 0.0
    %1178 = vmatpush.msra.mxu0 0.0
    %1179 = vmatpush.msra.mxu0 0.0
    %1180 = vmatpush.msra.mxu0 0.0
    %1181 = vmatpush.msra.mxu0 %v1165
    %1182 = vmatmul.f32.gmra.mxu0 %v945
    %v1183 = vpop.f32.mrf.mxu0
    %v1184 = vadd.f32 0.0, %v1183
    %1185 = vmatmul.f32.gmra.mxu0 %v948
    %v1186 = vpop.f32.mrf.mxu0
    %v1187 = vadd.f32 0.0, %v1186
    %1188 = vmatmul.f32.gmra.mxu0 %v951
    %v1189 = vpop.f32.mrf.mxu0
    %v1190 = vadd.f32 0.0, %v1189
    %1191 = vmatmul.f32.gmra.mxu0 %v954
    %v1192 = vpop.f32.mrf.mxu0
    %v1193 = vadd.f32 0.0, %v1192
    %1194 = vdwg.mxu0
    %v1196 = vsel %vm1023, %v1155, 0
    %v1199 = vsel %vm1023, %v1156, 0
    %v1202 = vsel %vm1023, %v1157, 0
    %v1205 = vsel %vm1023, %v1158, 0
    %v1208 = vsel %vm1023, %v1159, 0
    %v1211 = vsel %vm1023, %v1160, 0
    %v1214 = vsel %vm1023, %v1161, 0
    %v1217 = vsel %vm1023, %v1162, 0
    %1219 = vmatpush.msra.mxu0 0.0
    %1220 = vmatpush.msra.mxu0 0.0
    %1221 = vmatpush.msra.mxu0 0.0
    %1222 = vmatpush.msra.mxu0 0.0
    %1223 = vmatpush.msra.mxu0 0.0
    %1224 = vmatpush.msra.mxu0 0.0
    %1225 = vmatpush.msra.mxu0 0.0
    %1226 = vmatpush.msra.mxu0 0.0
    %1227 = vmatpush.msra.mxu0 0.0
    %1228 = vmatpush.msra.mxu0 0.0
    %1229 = vmatpush.msra.mxu0 0.0
    %1230 = vmatpush.msra.mxu0 0.0
    %1231 = vmatpush.msra.mxu0 %v1193
    %1232 = vmatpush.msra.mxu0 %v1190
    %1233 = vmatpush.msra.mxu0 %v1187
    %1234 = vmatpush.msra.mxu0 %v1184
    %1235 = vmatmul.f32.gmra.mxu0 %v1196
    %v1236 = vpop.f32.mrf.mxu0
    %v1237 = vadd.f32 0.0, %v1236
    %1238 = vmatmul.f32.gmra.mxu0 %v1199
    %v1239 = vpop.f32.mrf.mxu0
    %v1240 = vadd.f32 0.0, %v1239
    %1241 = vmatmul.f32.gmra.mxu0 %v1202
    %v1242 = vpop.f32.mrf.mxu0
    %v1243 = vadd.f32 0.0, %v1242
    %1244 = vmatmul.f32.gmra.mxu0 %v1205
    %v1245 = vpop.f32.mrf.mxu0
    %v1246 = vadd.f32 0.0, %v1245
    %1247 = vmatmul.f32.gmra.mxu0 %v1208
    %v1248 = vpop.f32.mrf.mxu0
    %v1249 = vadd.f32 0.0, %v1248
    %1250 = vmatmul.f32.gmra.mxu0 %v1211
    %v1251 = vpop.f32.mrf.mxu0
    %v1252 = vadd.f32 0.0, %v1251
    %1253 = vmatmul.f32.gmra.mxu0 %v1214
    %v1254 = vpop.f32.mrf.mxu0
    %v1255 = vadd.f32 0.0, %v1254
    %1256 = vmatmul.f32.gmra.mxu0 %v1217
    %v1257 = vpop.f32.mrf.mxu0
    %v1258 = vadd.f32 0.0, %v1257
    %1259 = vdwg.mxu0
    %v1260 = vadd.f32 %v1131, %v1237
    %v1261 = vadd.f32 %v1134, %v1240
    %v1262 = vadd.f32 %v1137, %v1243
    %v1263 = vadd.f32 %v1140, %v1246
    %v1264 = vadd.f32 %v1143, %v1249
    %v1265 = vadd.f32 %v1146, %v1252
    %v1266 = vadd.f32 %v1149, %v1255
    %v1267 = vadd.f32 %v1152, %v1258
    %v1268 = vld [vmem:[%s23] sm:$0xff]
    %v1269 = vld [vmem:[%s23 + $0x8] sm:$0xff]
    %v1270 = vld [vmem:[%s23 + $0x10] sm:$0xff]
    %v1271 = vld [vmem:[%s23 + $0x18] sm:$0xff]
    %v1272 = vld [vmem:[%s23 + $0x20] sm:$0xff]
    %v1273 = vld [vmem:[%s23 + $0x28] sm:$0xff]
    %v1274 = vld [vmem:[%s23 + $0x30] sm:$0xff]
    %v1275 = vld [vmem:[%s23 + $0x38] sm:$0xff]
    %1277 = vset.pattern.permute.xlu0 0
    %1278 = vperm.xlu0 %1277, %v1268
    %v1279 = vpop.permute.xlu0 %1278
    %1282 = vset.pattern.permute.xlu0 0
    %1283 = vperm.xlu0 %1282, %v1269
    %v1284 = vpop.permute.xlu0 %1283
    %1287 = vset.pattern.permute.xlu0 0
    %1288 = vperm.xlu0 %1287, %v1270
    %v1289 = vpop.permute.xlu0 %1288
    %1292 = vset.pattern.permute.xlu0 0
    %1293 = vperm.xlu0 %1292, %v1271
    %v1294 = vpop.permute.xlu0 %1293
    %1297 = vset.pattern.permute.xlu0 0
    %1298 = vperm.xlu0 %1297, %v1272
    %v1299 = vpop.permute.xlu0 %1298
    %1302 = vset.pattern.permute.xlu0 0
    %1303 = vperm.xlu0 %1302, %v1273
    %v1304 = vpop.permute.xlu0 %1303
    %1307 = vset.pattern.permute.xlu0 0
    %1308 = vperm.xlu0 %1307, %v1274
    %v1309 = vpop.permute.xlu0 %1308
    %1312 = vset.pattern.permute.xlu0 0
    %1313 = vperm.xlu0 %1312, %v1275
    %v1314 = vpop.permute.xlu0 %1313
    %v1316 = vadd.f32 %v1260, %v1279
    %v1317 = vadd.f32 %v1261, %v1284
    %v1318 = vadd.f32 %v1262, %v1289
    %v1319 = vadd.f32 %v1263, %v1294
    %v1320 = vadd.f32 %v1264, %v1299
    %v1321 = vadd.f32 %v1265, %v1304
    %v1322 = vadd.f32 %v1266, %v1309
    %v1323 = vadd.f32 %v1267, %v1314
    %vm1324 = vcmp.gt.f32.partialorder %v1316, 0.0
    %vm1325 = vcmp.gt.f32.partialorder %v1317, 0.0
    %vm1326 = vcmp.gt.f32.partialorder %v1318, 0.0
    %vm1327 = vcmp.gt.f32.partialorder %v1319, 0.0
    %vm1328 = vcmp.gt.f32.partialorder %v1320, 0.0
    %vm1329 = vcmp.gt.f32.partialorder %v1321, 0.0
    %vm1330 = vcmp.gt.f32.partialorder %v1322, 0.0
    %vm1331 = vcmp.gt.f32.partialorder %v1323, 0.0
    %v1332 = vmul.f32 %v1316, 0.2
    %v1333 = vmul.f32 %v1317, 0.2
    %v1334 = vmul.f32 %v1318, 0.2
    %v1335 = vmul.f32 %v1319, 0.2
    %v1336 = vmul.f32 %v1320, 0.2
    %v1337 = vmul.f32 %v1321, 0.2
    %v1338 = vmul.f32 %v1322, 0.2
    %v1339 = vmul.f32 %v1323, 0.2
    %v1340 = vsel %vm1324, %v1316, %v1332
    %v1341 = vsel %vm1325, %v1317, %v1333
    %v1342 = vsel %vm1326, %v1318, %v1334
    %v1343 = vsel %vm1327, %v1319, %v1335
    %v1344 = vsel %vm1328, %v1320, %v1336
    %v1345 = vsel %vm1329, %v1321, %v1337
    %v1346 = vsel %vm1330, %v1322, %v1338
    %v1347 = vsel %vm1331, %v1323, %v1339
    %v1348 = vld [vmem:[%s25] sm:$0xff]
    %v1349 = vld [vmem:[%s25 + $0x8] sm:$0xff]
    %v1350 = vld [vmem:[%s25 + $0x10] sm:$0xff]
    %v1351 = vld [vmem:[%s25 + $0x18] sm:$0xff]
    %vm1352 = vcmask 48128
    %v1354 = vsel %vm1352, %v1340, 0
    %v1357 = vsel %vm1352, %v1341, 0
    %v1360 = vsel %vm1352, %v1342, 0
    %v1363 = vsel %vm1352, %v1343, 0
    %v1366 = vsel %vm1352, %v1344, 0
    %v1369 = vsel %vm1352, %v1345, 0
    %v1372 = vsel %vm1352, %v1346, 0
    %v1375 = vsel %vm1352, %v1347, 0
    %vm1377 = vcmask 1045504
    %v1379 = vsel %vm1377, %v629, 0
    %1381 = vmatpush.msra.mxu0 0.0
    %1382 = vmatpush.msra.mxu0 0.0
    %1383 = vmatpush.msra.mxu0 0.0
    %1384 = vmatpush.msra.mxu0 0.0
    %1385 = vmatpush.msra.mxu0 0.0
    %1386 = vmatpush.msra.mxu0 0.0
    %1387 = vmatpush.msra.mxu0 0.0
    %1388 = vmatpush.msra.mxu0 0.0
    %1389 = vmatpush.msra.mxu0 0.0
    %1390 = vmatpush.msra.mxu0 0.0
    %1391 = vmatpush.msra.mxu0 0.0
    %1392 = vmatpush.msra.mxu0 0.0
    %1393 = vmatpush.msra.mxu0 0.0
    %1394 = vmatpush.msra.mxu0 0.0
    %1395 = vmatpush.msra.mxu0 0.0
    %1396 = vmatpush.msra.mxu0 %v1379
    %1397 = vmatmul.f32.gmra.mxu0 %v1354
    %v1398 = vpop.f32.mrf.mxu0
    %v1399 = vadd.f32 0.0, %v1398
    %1400 = vmatmul.f32.gmra.mxu0 %v1357
    %v1401 = vpop.f32.mrf.mxu0
    %v1402 = vadd.f32 0.0, %v1401
    %1403 = vmatmul.f32.gmra.mxu0 %v1360
    %v1404 = vpop.f32.mrf.mxu0
    %v1405 = vadd.f32 0.0, %v1404
    %1406 = vmatmul.f32.gmra.mxu0 %v1363
    %v1407 = vpop.f32.mrf.mxu0
    %v1408 = vadd.f32 0.0, %v1407
    %1409 = vmatmul.f32.gmra.mxu0 %v1366
    %v1410 = vpop.f32.mrf.mxu0
    %v1411 = vadd.f32 0.0, %v1410
    %1412 = vmatmul.f32.gmra.mxu0 %v1369
    %v1413 = vpop.f32.mrf.mxu0
    %v1414 = vadd.f32 0.0, %v1413
    %1415 = vmatmul.f32.gmra.mxu0 %v1372
    %v1416 = vpop.f32.mrf.mxu0
    %v1417 = vadd.f32 0.0, %v1416
    %1418 = vmatmul.f32.gmra.mxu0 %v1375
    %v1419 = vpop.f32.mrf.mxu0
    %v1420 = vadd.f32 0.0, %v1419
    %1421 = vdwg.mxu0
    %s1422 = scalar_lea.vmem %s25, 32
    %v1423 = vld [vmem:[%s1422] sm:$0xff]
    %v1424 = vld [vmem:[%s1422 + $0x8] sm:$0xff]
    %v1425 = vld [vmem:[%s1422 + $0x10] sm:$0xff]
    %v1426 = vld [vmem:[%s1422 + $0x18] sm:$0xff]
    %vm1427 = vcmask 523264
    %v1429 = vsel %vm1427, %v1423, 0
    %v1432 = vsel %vm1427, %v1424, 0
    %v1435 = vsel %vm1427, %v1425, 0
    %v1438 = vsel %vm1427, %v1426, 0
    %1440 = vmatpush.msra.mxu0 0.0
    %1441 = vmatpush.msra.mxu0 0.0
    %1442 = vmatpush.msra.mxu0 0.0
    %1443 = vmatpush.msra.mxu0 0.0
    %1444 = vmatpush.msra.mxu0 0.0
    %1445 = vmatpush.msra.mxu0 0.0
    %1446 = vmatpush.msra.mxu0 0.0
    %1447 = vmatpush.msra.mxu0 0.0
    %1448 = vmatpush.msra.mxu0 %v1347
    %1449 = vmatpush.msra.mxu0 %v1346
    %1450 = vmatpush.msra.mxu0 %v1345
    %1451 = vmatpush.msra.mxu0 %v1344
    %1452 = vmatpush.msra.mxu0 %v1343
    %1453 = vmatpush.msra.mxu0 %v1342
    %1454 = vmatpush.msra.mxu0 %v1341
    %1455 = vmatpush.msra.mxu0 %v1340
    %1456 = vmatmul.f32.gmra.mxu0 %v1429
    %v1457 = vpop.f32.mrf.mxu0
    %v1458 = vadd.f32 0.0, %v1457
    %1459 = vmatmul.f32.gmra.mxu0 %v1432
    %v1460 = vpop.f32.mrf.mxu0
    %v1461 = vadd.f32 0.0, %v1460
    %1462 = vmatmul.f32.gmra.mxu0 %v1435
    %v1463 = vpop.f32.mrf.mxu0
    %v1464 = vadd.f32 0.0, %v1463
    %1465 = vmatmul.f32.gmra.mxu0 %v1438
    %v1466 = vpop.f32.mrf.mxu0
    %v1467 = vadd.f32 0.0, %v1466
    %1468 = vdwg.mxu0
    %v1470 = vsel %vm1427, %v1348, 0
    %v1473 = vsel %vm1427, %v1349, 0
    %v1476 = vsel %vm1427, %v1350, 0
    %v1479 = vsel %vm1427, %v1351, 0
    %1481 = vmatpush.msra.mxu0 0.0
    %1482 = vmatpush.msra.mxu0 0.0
    %1483 = vmatpush.msra.mxu0 0.0
    %1484 = vmatpush.msra.mxu0 0.0
    %1485 = vmatpush.msra.mxu0 0.0
    %1486 = vmatpush.msra.mxu0 0.0
    %1487 = vmatpush.msra.mxu0 0.0
    %1488 = vmatpush.msra.mxu0 0.0
    %1489 = vmatpush.msra.mxu0 %v1420
    %1490 = vmatpush.msra.mxu0 %v1417
    %1491 = vmatpush.msra.mxu0 %v1414
    %1492 = vmatpush.msra.mxu0 %v1411
    %1493 = vmatpush.msra.mxu0 %v1408
    %1494 = vmatpush.msra.mxu0 %v1405
    %1495 = vmatpush.msra.mxu0 %v1402
    %1496 = vmatpush.msra.mxu0 %v1399
    %1497 = vmatmul.f32.gmra.mxu0 %v1470
    %v1498 = vpop.f32.mrf.mxu0
    %v1499 = vadd.f32 %v1458, %v1498
    %1500 = vmatmul.f32.gmra.mxu0 %v1473
    %v1501 = vpop.f32.mrf.mxu0
    %v1502 = vadd.f32 %v1461, %v1501
    %1503 = vmatmul.f32.gmra.mxu0 %v1476
    %v1504 = vpop.f32.mrf.mxu0
    %v1505 = vadd.f32 %v1464, %v1504
    %1506 = vmatmul.f32.gmra.mxu0 %v1479
    %v1507 = vpop.f32.mrf.mxu0
    %v1508 = vadd.f32 %v1467, %v1507
    %1509 = vdwg.mxu0
    %s1510 = scalar_lea.vmem %s25, 64
    %v1511 = vld [vmem:[%s1510] sm:$0xff]
    %v1512 = vld [vmem:[%s1510 + $0x8] sm:$0xff]
    %v1513 = vld [vmem:[%s1510 + $0x10] sm:$0xff]
    %v1514 = vld [vmem:[%s1510 + $0x18] sm:$0xff]
    %v1516 = vsel %vm1377, %v754, 0
    %1518 = vmatpush.msra.mxu0 0.0
    %1519 = vmatpush.msra.mxu0 0.0
    %1520 = vmatpush.msra.mxu0 0.0
    %1521 = vmatpush.msra.mxu0 0.0
    %1522 = vmatpush.msra.mxu0 0.0
    %1523 = vmatpush.msra.mxu0 0.0
    %1524 = vmatpush.msra.mxu0 0.0
    %1525 = vmatpush.msra.mxu0 0.0
    %1526 = vmatpush.msra.mxu0 0.0
    %1527 = vmatpush.msra.mxu0 0.0
    %1528 = vmatpush.msra.mxu0 0.0
    %1529 = vmatpush.msra.mxu0 0.0
    %1530 = vmatpush.msra.mxu0 0.0
    %1531 = vmatpush.msra.mxu0 0.0
    %1532 = vmatpush.msra.mxu0 0.0
    %1533 = vmatpush.msra.mxu0 %v1516
    %1534 = vmatmul.f32.gmra.mxu0 %v1354
    %v1535 = vpop.f32.mrf.mxu0
    %v1536 = vadd.f32 0.0, %v1535
    %1537 = vmatmul.f32.gmra.mxu0 %v1357
    %v1538 = vpop.f32.mrf.mxu0
    %v1539 = vadd.f32 0.0, %v1538
    %1540 = vmatmul.f32.gmra.mxu0 %v1360
    %v1541 = vpop.f32.mrf.mxu0
    %v1542 = vadd.f32 0.0, %v1541
    %1543 = vmatmul.f32.gmra.mxu0 %v1363
    %v1544 = vpop.f32.mrf.mxu0
    %v1545 = vadd.f32 0.0, %v1544
    %1546 = vmatmul.f32.gmra.mxu0 %v1366
    %v1547 = vpop.f32.mrf.mxu0
    %v1548 = vadd.f32 0.0, %v1547
    %1549 = vmatmul.f32.gmra.mxu0 %v1369
    %v1550 = vpop.f32.mrf.mxu0
    %v1551 = vadd.f32 0.0, %v1550
    %1552 = vmatmul.f32.gmra.mxu0 %v1372
    %v1553 = vpop.f32.mrf.mxu0
    %v1554 = vadd.f32 0.0, %v1553
    %1555 = vmatmul.f32.gmra.mxu0 %v1375
    %v1556 = vpop.f32.mrf.mxu0
    %v1557 = vadd.f32 0.0, %v1556
    %1558 = vdwg.mxu0
    %v1560 = vsel %vm1427, %v1511, 0
    %v1563 = vsel %vm1427, %v1512, 0
    %v1566 = vsel %vm1427, %v1513, 0
    %v1569 = vsel %vm1427, %v1514, 0
    %1571 = vmatpush.msra.mxu0 0.0
    %1572 = vmatpush.msra.mxu0 0.0
    %1573 = vmatpush.msra.mxu0 0.0
    %1574 = vmatpush.msra.mxu0 0.0
    %1575 = vmatpush.msra.mxu0 0.0
    %1576 = vmatpush.msra.mxu0 0.0
    %1577 = vmatpush.msra.mxu0 0.0
    %1578 = vmatpush.msra.mxu0 0.0
    %1579 = vmatpush.msra.mxu0 %v1557
    %1580 = vmatpush.msra.mxu0 %v1554
    %1581 = vmatpush.msra.mxu0 %v1551
    %1582 = vmatpush.msra.mxu0 %v1548
    %1583 = vmatpush.msra.mxu0 %v1545
    %1584 = vmatpush.msra.mxu0 %v1542
    %1585 = vmatpush.msra.mxu0 %v1539
    %1586 = vmatpush.msra.mxu0 %v1536
    %1587 = vmatmul.f32.gmra.mxu0 %v1560
    %v1588 = vpop.f32.mrf.mxu0
    %v1589 = vadd.f32 0.0, %v1588
    %1590 = vmatmul.f32.gmra.mxu0 %v1563
    %v1591 = vpop.f32.mrf.mxu0
    %v1592 = vadd.f32 0.0, %v1591
    %1593 = vmatmul.f32.gmra.mxu0 %v1566
    %v1594 = vpop.f32.mrf.mxu0
    %v1595 = vadd.f32 0.0, %v1594
    %1596 = vmatmul.f32.gmra.mxu0 %v1569
    %v1597 = vpop.f32.mrf.mxu0
    %v1598 = vadd.f32 0.0, %v1597
    %1599 = vdwg.mxu0
    %v1600 = vadd.f32 %v1499, %v1589
    %v1601 = vadd.f32 %v1502, %v1592
    %v1602 = vadd.f32 %v1505, %v1595
    %v1603 = vadd.f32 %v1508, %v1598
    %v1604 = vld [vmem:[%s27] sm:$0xff]
    %v1605 = vld [vmem:[%s27 + $0x8] sm:$0xff]
    %v1606 = vld [vmem:[%s27 + $0x10] sm:$0xff]
    %v1607 = vld [vmem:[%s27 + $0x18] sm:$0xff]
    %1609 = vset.pattern.permute.xlu0 0
    %1610 = vperm.xlu0 %1609, %v1604
    %v1611 = vpop.permute.xlu0 %1610
    %1614 = vset.pattern.permute.xlu0 0
    %1615 = vperm.xlu0 %1614, %v1605
    %v1616 = vpop.permute.xlu0 %1615
    %1619 = vset.pattern.permute.xlu0 0
    %1620 = vperm.xlu0 %1619, %v1606
    %v1621 = vpop.permute.xlu0 %1620
    %1624 = vset.pattern.permute.xlu0 0
    %1625 = vperm.xlu0 %1624, %v1607
    %v1626 = vpop.permute.xlu0 %1625
    %v1628 = vadd.f32 %v1600, %v1611
    %v1629 = vadd.f32 %v1601, %v1616
    %v1630 = vadd.f32 %v1602, %v1621
    %v1631 = vadd.f32 %v1603, %v1626
    %vm1632 = vcmp.gt.f32.partialorder %v1628, 0.0
    %vm1633 = vcmp.gt.f32.partialorder %v1629, 0.0
    %vm1634 = vcmp.gt.f32.partialorder %v1630, 0.0
    %vm1635 = vcmp.gt.f32.partialorder %v1631, 0.0
    %v1636 = vmul.f32 %v1628, 0.2
    %v1637 = vmul.f32 %v1629, 0.2
    %v1638 = vmul.f32 %v1630, 0.2
    %v1639 = vmul.f32 %v1631, 0.2
    %v1640 = vsel %vm1632, %v1628, %v1636
    %v1641 = vsel %vm1633, %v1629, %v1637
    %v1642 = vsel %vm1634, %v1630, %v1638
    %v1643 = vsel %vm1635, %v1631, %v1639
    %v1644 = vld [vmem:[%s29] sm:$0xff]
    %v1645 = vld [vmem:[%s29 + $0x8] sm:$0xff]
    %v1646 = vld [vmem:[%s29 + $0x10] sm:$0xff]
    %v1647 = vld [vmem:[%s29 + $0x18] sm:$0xff]
    %v1648 = vld [vmem:[%s31] sm:$0xff]
    %v1649 = vld [vmem:[%s31 + $0x8] sm:$0xff]
    %v1650 = vld [vmem:[%s31 + $0x10] sm:$0xff]
    %v1651 = vld [vmem:[%s31 + $0x18] sm:$0xff]
    %1653 = vset.pattern.permute.xlu0 0
    %1654 = vperm.xlu0 %1653, %v1648
    %v1655 = vpop.permute.xlu0 %1654
    %1658 = vset.pattern.permute.xlu0 0
    %1659 = vperm.xlu0 %1658, %v1649
    %v1660 = vpop.permute.xlu0 %1659
    %1663 = vset.pattern.permute.xlu0 0
    %1664 = vperm.xlu0 %1663, %v1650
    %v1665 = vpop.permute.xlu0 %1664
    %1668 = vset.pattern.permute.xlu0 0
    %1669 = vperm.xlu0 %1668, %v1651
    %v1670 = vpop.permute.xlu0 %1669
    %v1673 = vsel %vm1427, %v1644, 0
    %v1676 = vsel %vm1427, %v1645, 0
    %v1679 = vsel %vm1427, %v1646, 0
    %v1682 = vsel %vm1427, %v1647, 0
    %1684 = vmatpush.msra.mxu0 0.0
    %1685 = vmatpush.msra.mxu0 0.0
    %1686 = vmatpush.msra.mxu0 0.0
    %1687 = vmatpush.msra.mxu0 0.0
    %1688 = vmatpush.msra.mxu0 0.0
    %1689 = vmatpush.msra.mxu0 0.0
    %1690 = vmatpush.msra.mxu0 0.0
    %1691 = vmatpush.msra.mxu0 0.0
    %1692 = vmatpush.msra.mxu0 %v1347
    %1693 = vmatpush.msra.mxu0 %v1346
    %1694 = vmatpush.msra.mxu0 %v1345
    %1695 = vmatpush.msra.mxu0 %v1344
    %1696 = vmatpush.msra.mxu0 %v1343
    %1697 = vmatpush.msra.mxu0 %v1342
    %1698 = vmatpush.msra.mxu0 %v1341
    %1699 = vmatpush.msra.mxu0 %v1340
    %1700 = vmatmul.f32.gmra.mxu0 %v1673
    %v1701 = vpop.f32.mrf.mxu0
    %v1702 = vadd.f32 %v1655, %v1701
    %1703 = vmatmul.f32.gmra.mxu0 %v1676
    %v1704 = vpop.f32.mrf.mxu0
    %v1705 = vadd.f32 %v1660, %v1704
    %1706 = vmatmul.f32.gmra.mxu0 %v1679
    %v1707 = vpop.f32.mrf.mxu0
    %v1708 = vadd.f32 %v1665, %v1707
    %1709 = vmatmul.f32.gmra.mxu0 %v1682
    %v1710 = vpop.f32.mrf.mxu0
    %v1711 = vadd.f32 %v1670, %v1710
    %1712 = vdwg.mxu0
    %v1713 = vadd.f32 %v1640, %v1702
    %v1714 = vadd.f32 %v1641, %v1705
    %v1715 = vadd.f32 %v1642, %v1708
    %v1716 = vadd.f32 %v1643, %v1711
    %v1717 = vld [vmem:[%s33] sm:$0xff]
    %v1718 = vld [vmem:[%s33 + $0x8] sm:$0xff]
    %v1720 = vsel %vm1352, %v1713, 0
    %v1723 = vsel %vm1352, %v1714, 0
    %v1726 = vsel %vm1352, %v1715, 0
    %v1729 = vsel %vm1352, %v1716, 0
    %1731 = vmatpush.msra.mxu0 0.0
    %1732 = vmatpush.msra.mxu0 0.0
    %1733 = vmatpush.msra.mxu0 0.0
    %1734 = vmatpush.msra.mxu0 0.0
    %1735 = vmatpush.msra.mxu0 0.0
    %1736 = vmatpush.msra.mxu0 0.0
    %1737 = vmatpush.msra.mxu0 0.0
    %1738 = vmatpush.msra.mxu0 0.0
    %1739 = vmatpush.msra.mxu0 0.0
    %1740 = vmatpush.msra.mxu0 0.0
    %1741 = vmatpush.msra.mxu0 0.0
    %1742 = vmatpush.msra.mxu0 0.0
    %1743 = vmatpush.msra.mxu0 0.0
    %1744 = vmatpush.msra.mxu0 0.0
    %1745 = vmatpush.msra.mxu0 0.0
    %1746 = vmatpush.msra.mxu0 %v1379
    %1747 = vmatmul.f32.gmra.mxu0 %v1720
    %v1748 = vpop.f32.mrf.mxu0
    %v1749 = vadd.f32 0.0, %v1748
    %1750 = vmatmul.f32.gmra.mxu0 %v1723
    %v1751 = vpop.f32.mrf.mxu0
    %v1752 = vadd.f32 0.0, %v1751
    %1753 = vmatmul.f32.gmra.mxu0 %v1726
    %v1754 = vpop.f32.mrf.mxu0
    %v1755 = vadd.f32 0.0, %v1754
    %1756 = vmatmul.f32.gmra.mxu0 %v1729
    %v1757 = vpop.f32.mrf.mxu0
    %v1758 = vadd.f32 0.0, %v1757
    %1759 = vdwg.mxu0
    %s1760 = scalar_lea.vmem %s33, 16
    %v1761 = vld [vmem:[%s1760] sm:$0xff]
    %v1762 = vld [vmem:[%s1760 + $0x8] sm:$0xff]
    %v1764 = vsel %vm1023, %v1761, 0
    %v1767 = vsel %vm1023, %v1762, 0
    %1769 = vmatpush.msra.mxu0 0.0
    %1770 = vmatpush.msra.mxu0 0.0
    %1771 = vmatpush.msra.mxu0 0.0
    %1772 = vmatpush.msra.mxu0 0.0
    %1773 = vmatpush.msra.mxu0 0.0
    %1774 = vmatpush.msra.mxu0 0.0
    %1775 = vmatpush.msra.mxu0 0.0
    %1776 = vmatpush.msra.mxu0 0.0
    %1777 = vmatpush.msra.mxu0 0.0
    %1778 = vmatpush.msra.mxu0 0.0
    %1779 = vmatpush.msra.mxu0 0.0
    %1780 = vmatpush.msra.mxu0 0.0
    %1781 = vmatpush.msra.mxu0 %v1716
    %1782 = vmatpush.msra.mxu0 %v1715
    %1783 = vmatpush.msra.mxu0 %v1714
    %1784 = vmatpush.msra.mxu0 %v1713
    %1785 = vmatmul.f32.gmra.mxu0 %v1764
    %v1786 = vpop.f32.mrf.mxu0
    %v1787 = vadd.f32 0.0, %v1786
    %1788 = vmatmul.f32.gmra.mxu0 %v1767
    %v1789 = vpop.f32.mrf.mxu0
    %v1790 = vadd.f32 0.0, %v1789
    %1791 = vdwg.mxu0
    %v1793 = vsel %vm1023, %v1717, 0
    %v1796 = vsel %vm1023, %v1718, 0
    %1798 = vmatpush.msra.mxu0 0.0
    %1799 = vmatpush.msra.mxu0 0.0
    %1800 = vmatpush.msra.mxu0 0.0
    %1801 = vmatpush.msra.mxu0 0.0
    %1802 = vmatpush.msra.mxu0 0.0
    %1803 = vmatpush.msra.mxu0 0.0
    %1804 = vmatpush.msra.mxu0 0.0
    %1805 = vmatpush.msra.mxu0 0.0
    %1806 = vmatpush.msra.mxu0 0.0
    %1807 = vmatpush.msra.mxu0 0.0
    %1808 = vmatpush.msra.mxu0 0.0
    %1809 = vmatpush.msra.mxu0 0.0
    %1810 = vmatpush.msra.mxu0 %v1758
    %1811 = vmatpush.msra.mxu0 %v1755
    %1812 = vmatpush.msra.mxu0 %v1752
    %1813 = vmatpush.msra.mxu0 %v1749
    %1814 = vmatmul.f32.gmra.mxu0 %v1793
    %v1815 = vpop.f32.mrf.mxu0
    %v1816 = vadd.f32 %v1787, %v1815
    %1817 = vmatmul.f32.gmra.mxu0 %v1796
    %v1818 = vpop.f32.mrf.mxu0
    %v1819 = vadd.f32 %v1790, %v1818
    %1820 = vdwg.mxu0
    %s1821 = scalar_lea.vmem %s33, 32
    %v1822 = vld [vmem:[%s1821] sm:$0xff]
    %v1823 = vld [vmem:[%s1821 + $0x8] sm:$0xff]
    %1824 = vmatpush.msra.mxu0 0.0
    %1825 = vmatpush.msra.mxu0 0.0
    %1826 = vmatpush.msra.mxu0 0.0
    %1827 = vmatpush.msra.mxu0 0.0
    %1828 = vmatpush.msra.mxu0 0.0
    %1829 = vmatpush.msra.mxu0 0.0
    %1830 = vmatpush.msra.mxu0 0.0
    %1831 = vmatpush.msra.mxu0 0.0
    %1832 = vmatpush.msra.mxu0 0.0
    %1833 = vmatpush.msra.mxu0 0.0
    %1834 = vmatpush.msra.mxu0 0.0
    %1835 = vmatpush.msra.mxu0 0.0
    %1836 = vmatpush.msra.mxu0 0.0
    %1837 = vmatpush.msra.mxu0 0.0
    %1838 = vmatpush.msra.mxu0 0.0
    %1839 = vmatpush.msra.mxu0 %v1516
    %1840 = vmatmul.f32.gmra.mxu0 %v1720
    %v1841 = vpop.f32.mrf.mxu0
    %v1842 = vadd.f32 0.0, %v1841
    %1843 = vmatmul.f32.gmra.mxu0 %v1723
    %v1844 = vpop.f32.mrf.mxu0
    %v1845 = vadd.f32 0.0, %v1844
    %1846 = vmatmul.f32.gmra.mxu0 %v1726
    %v1847 = vpop.f32.mrf.mxu0
    %v1848 = vadd.f32 0.0, %v1847
    %1849 = vmatmul.f32.gmra.mxu0 %v1729
    %v1850 = vpop.f32.mrf.mxu0
    %v1851 = vadd.f32 0.0, %v1850
    %1852 = vdwg.mxu0
    %v1854 = vsel %vm1023, %v1822, 0
    %v1857 = vsel %vm1023, %v1823, 0
    %1859 = vmatpush.msra.mxu0 0.0
    %1860 = vmatpush.msra.mxu0 0.0
    %1861 = vmatpush.msra.mxu0 0.0
    %1862 = vmatpush.msra.mxu0 0.0
    %1863 = vmatpush.msra.mxu0 0.0
    %1864 = vmatpush.msra.mxu0 0.0
    %1865 = vmatpush.msra.mxu0 0.0
    %1866 = vmatpush.msra.mxu0 0.0
    %1867 = vmatpush.msra.mxu0 0.0
    %1868 = vmatpush.msra.mxu0 0.0
    %1869 = vmatpush.msra.mxu0 0.0
    %1870 = vmatpush.msra.mxu0 0.0
    %1871 = vmatpush.msra.mxu0 %v1851
    %1872 = vmatpush.msra.mxu0 %v1848
    %1873 = vmatpush.msra.mxu0 %v1845
    %1874 = vmatpush.msra.mxu0 %v1842
    %1875 = vmatmul.f32.gmra.mxu0 %v1854
    %v1876 = vpop.f32.mrf.mxu0
    %v1877 = vadd.f32 0.0, %v1876
    %1878 = vmatmul.f32.gmra.mxu0 %v1857
    %v1879 = vpop.f32.mrf.mxu0
    %v1880 = vadd.f32 0.0, %v1879
    %1881 = vdwg.mxu0
    %v1882 = vadd.f32 %v1816, %v1877
    %v1883 = vadd.f32 %v1819, %v1880
    %v1884 = vld [vmem:[%s35] sm:$0xff]
    %v1885 = vld [vmem:[%s35 + $0x8] sm:$0xff]
    %1887 = vset.pattern.permute.xlu0 0
    %1888 = vperm.xlu0 %1887, %v1884
    %v1889 = vpop.permute.xlu0 %1888
    %1892 = vset.pattern.permute.xlu0 0
    %1893 = vperm.xlu0 %1892, %v1885
    %v1894 = vpop.permute.xlu0 %1893
    %v1896 = vadd.f32 %v1882, %v1889
    %v1897 = vadd.f32 %v1883, %v1894
    %vm1898 = vcmp.gt.f32.partialorder %v1896, 0.0
    %vm1899 = vcmp.gt.f32.partialorder %v1897, 0.0
    %v1900 = vmul.f32 %v1896, 0.2
    %v1901 = vmul.f32 %v1897, 0.2
    %v1902 = vsel %vm1898, %v1896, %v1900
    %v1903 = vsel %vm1899, %v1897, %v1901
    %v1904 = vld [vmem:[%s37] sm:$0xff]
    %v1906 = vsel %vm1352, %v1902, 0
    %v1909 = vsel %vm1352, %v1903, 0
    %1911 = vmatpush.msra.mxu0 0.0
    %1912 = vmatpush.msra.mxu0 0.0
    %1913 = vmatpush.msra.mxu0 0.0
    %1914 = vmatpush.msra.mxu0 0.0
    %1915 = vmatpush.msra.mxu0 0.0
    %1916 = vmatpush.msra.mxu0 0.0
    %1917 = vmatpush.msra.mxu0 0.0
    %1918 = vmatpush.msra.mxu0 0.0
    %1919 = vmatpush.msra.mxu0 0.0
    %1920 = vmatpush.msra.mxu0 0.0
    %1921 = vmatpush.msra.mxu0 0.0
    %1922 = vmatpush.msra.mxu0 0.0
    %1923 = vmatpush.msra.mxu0 0.0
    %1924 = vmatpush.msra.mxu0 0.0
    %1925 = vmatpush.msra.mxu0 0.0
    %1926 = vmatpush.msra.mxu0 %v1379
    %1927 = vmatmul.f32.gmra.mxu0 %v1906
    %v1928 = vpop.f32.mrf.mxu0
    %v1929 = vadd.f32 0.0, %v1928
    %1930 = vmatmul.f32.gmra.mxu0 %v1909
    %v1931 = vpop.f32.mrf.mxu0
    %v1932 = vadd.f32 0.0, %v1931
    %1933 = vdwg.mxu0
    %s1934 = scalar_lea.vmem %s37, 8
    %v1935 = vld [vmem:[%s1934] sm:$0xff]
    %v1937 = vsel %vm176, %v1935, 0
    %1939 = vmatpush.msra.mxu0 0.0
    %1940 = vmatpush.msra.mxu0 0.0
    %1941 = vmatpush.msra.mxu0 0.0
    %1942 = vmatpush.msra.mxu0 0.0
    %1943 = vmatpush.msra.mxu0 0.0
    %1944 = vmatpush.msra.mxu0 0.0
    %1945 = vmatpush.msra.mxu0 0.0
    %1946 = vmatpush.msra.mxu0 0.0
    %1947 = vmatpush.msra.mxu0 0.0
    %1948 = vmatpush.msra.mxu0 0.0
    %1949 = vmatpush.msra.mxu0 0.0
    %1950 = vmatpush.msra.mxu0 0.0
    %1951 = vmatpush.msra.mxu0 0.0
    %1952 = vmatpush.msra.mxu0 0.0
    %1953 = vmatpush.msra.mxu0 %v1903
    %1954 = vmatpush.msra.mxu0 %v1902
    %1955 = vmatmul.f32.gmra.mxu0 %v1937
    %v1956 = vpop.f32.mrf.mxu0
    %v1957 = vadd.f32 0.0, %v1956
    %1958 = vdwg.mxu0
    %v1960 = vsel %vm176, %v1904, 0
    %1962 = vmatpush.msra.mxu0 0.0
    %1963 = vmatpush.msra.mxu0 0.0
    %1964 = vmatpush.msra.mxu0 0.0
    %1965 = vmatpush.msra.mxu0 0.0
    %1966 = vmatpush.msra.mxu0 0.0
    %1967 = vmatpush.msra.mxu0 0.0
    %1968 = vmatpush.msra.mxu0 0.0
    %1969 = vmatpush.msra.mxu0 0.0
    %1970 = vmatpush.msra.mxu0 0.0
    %1971 = vmatpush.msra.mxu0 0.0
    %1972 = vmatpush.msra.mxu0 0.0
    %1973 = vmatpush.msra.mxu0 0.0
    %1974 = vmatpush.msra.mxu0 0.0
    %1975 = vmatpush.msra.mxu0 0.0
    %1976 = vmatpush.msra.mxu0 %v1932
    %1977 = vmatpush.msra.mxu0 %v1929
    %1978 = vmatmul.f32.gmra.mxu0 %v1960
    %v1979 = vpop.f32.mrf.mxu0
    %v1980 = vadd.f32 %v1957, %v1979
    %1981 = vdwg.mxu0
    %s1982 = scalar_lea.vmem %s37, 16
    %v1983 = vld [vmem:[%s1982] sm:$0xff]
    %1984 = vmatpush.msra.mxu0 0.0
    %1985 = vmatpush.msra.mxu0 0.0
    %1986 = vmatpush.msra.mxu0 0.0
    %1987 = vmatpush.msra.mxu0 0.0
    %1988 = vmatpush.msra.mxu0 0.0
    %1989 = vmatpush.msra.mxu0 0.0
    %1990 = vmatpush.msra.mxu0 0.0
    %1991 = vmatpush.msra.mxu0 0.0
    %1992 = vmatpush.msra.mxu0 0.0
    %1993 = vmatpush.msra.mxu0 0.0
    %1994 = vmatpush.msra.mxu0 0.0
    %1995 = vmatpush.msra.mxu0 0.0
    %1996 = vmatpush.msra.mxu0 0.0
    %1997 = vmatpush.msra.mxu0 0.0
    %1998 = vmatpush.msra.mxu0 0.0
    %1999 = vmatpush.msra.mxu0 %v1516
    %2000 = vmatmul.f32.gmra.mxu0 %v1906
    %v2001 = vpop.f32.mrf.mxu0
    %v2002 = vadd.f32 0.0, %v2001
    %2003 = vmatmul.f32.gmra.mxu0 %v1909
    %v2004 = vpop.f32.mrf.mxu0
    %v2005 = vadd.f32 0.0, %v2004
    %2006 = vdwg.mxu0
    %v2008 = vsel %vm176, %v1983, 0
    %2010 = vmatpush.msra.mxu0 0.0
    %2011 = vmatpush.msra.mxu0 0.0
    %2012 = vmatpush.msra.mxu0 0.0
    %2013 = vmatpush.msra.mxu0 0.0
    %2014 = vmatpush.msra.mxu0 0.0
    %2015 = vmatpush.msra.mxu0 0.0
    %2016 = vmatpush.msra.mxu0 0.0
    %2017 = vmatpush.msra.mxu0 0.0
    %2018 = vmatpush.msra.mxu0 0.0
    %2019 = vmatpush.msra.mxu0 0.0
    %2020 = vmatpush.msra.mxu0 0.0
    %2021 = vmatpush.msra.mxu0 0.0
    %2022 = vmatpush.msra.mxu0 0.0
    %2023 = vmatpush.msra.mxu0 0.0
    %2024 = vmatpush.msra.mxu0 %v2005
    %2025 = vmatpush.msra.mxu0 %v2002
    %2026 = vmatmul.f32.gmra.mxu0 %v2008
    %v2027 = vpop.f32.mrf.mxu0
    %v2028 = vadd.f32 0.0, %v2027
    %2029 = vdwg.mxu0
    %v2030 = vadd.f32 %v1980, %v2028
    %v2031 = vld [vmem:[%s39] sm:$0xff]
    %2033 = vset.pattern.permute.xlu0 0
    %2034 = vperm.xlu0 %2033, %v2031
    %v2035 = vpop.permute.xlu0 %2034
    %v2037 = vadd.f32 %v2030, %v2035
    %vm2038 = vcmp.gt.f32.partialorder %v2037, 0.0
    %v2039 = vmul.f32 %v2037, 0.2
    %v2040 = vsel %vm2038, %v2037, %v2039
    %v2041 = vld [vmem:[%s41] sm:$0x1]
    %v2042 = vstv %s160
    %v2044 = vsel %vm630, %v2041, 0
    %2046 = vmatpush.msra.mxu0 0.0
    %2047 = vmatpush.msra.mxu0 0.0
    %2048 = vmatpush.msra.mxu0 0.0
    %2049 = vmatpush.msra.mxu0 0.0
    %2050 = vmatpush.msra.mxu0 0.0
    %2051 = vmatpush.msra.mxu0 0.0
    %2052 = vmatpush.msra.mxu0 0.0
    %2053 = vmatpush.msra.mxu0 0.0
    %2054 = vmatpush.msra.mxu0 0.0
    %2055 = vmatpush.msra.mxu0 0.0
    %2056 = vmatpush.msra.mxu0 0.0
    %2057 = vmatpush.msra.mxu0 0.0
    %2058 = vmatpush.msra.mxu0 0.0
    %2059 = vmatpush.msra.mxu0 0.0
    %2060 = vmatpush.msra.mxu0 0.0
    %2061 = vmatpush.msra.mxu0 %v2040
    %2062 = vmatmul.f32.gmra.mxu0 %v2044
    %v2063 = vpop.f32.mrf.mxu0
    %v2064 = vadd.f32 %v2042, %v2063
    %2065 = vdwg.mxu0
    %v2066 = vld [vmem:[%s43] sm:$0x1]
    %v2067 = vstv %s161
    %v2069 = vsel %vm630, %v2066, 0
    %2071 = vmatpush.msra.mxu0 0.0
    %2072 = vmatpush.msra.mxu0 0.0
    %2073 = vmatpush.msra.mxu0 0.0
    %2074 = vmatpush.msra.mxu0 0.0
    %2075 = vmatpush.msra.mxu0 0.0
    %2076 = vmatpush.msra.mxu0 0.0
    %2077 = vmatpush.msra.mxu0 0.0
    %2078 = vmatpush.msra.mxu0 0.0
    %2079 = vmatpush.msra.mxu0 0.0
    %2080 = vmatpush.msra.mxu0 0.0
    %2081 = vmatpush.msra.mxu0 0.0
    %2082 = vmatpush.msra.mxu0 0.0
    %2083 = vmatpush.msra.mxu0 0.0
    %2084 = vmatpush.msra.mxu0 0.0
    %2085 = vmatpush.msra.mxu0 0.0
    %2086 = vmatpush.msra.mxu0 %v2040
    %2087 = vmatmul.f32.gmra.mxu0 %v2069
    %v2088 = vpop.f32.mrf.mxu0
    %v2089 = vadd.f32 %v2067, %v2088
    %2090 = vdwg.mxu0
    %v2091 = vld [vmem:[%s45] sm:$0xff]
    %v2092 = vld [vmem:[%s47] sm:$0xff]
    %2094 = vset.pattern.permute.xlu0 0
    %2095 = vperm.xlu0 %2094, %v2092
    %v2096 = vpop.permute.xlu0 %2095
    %v2099 = vsel %vm630, %v2091, 0
    %2101 = vmatpush.msra.mxu0 0.0
    %2102 = vmatpush.msra.mxu0 0.0
    %2103 = vmatpush.msra.mxu0 0.0
    %2104 = vmatpush.msra.mxu0 0.0
    %2105 = vmatpush.msra.mxu0 0.0
    %2106 = vmatpush.msra.mxu0 0.0
    %2107 = vmatpush.msra.mxu0 0.0
    %2108 = vmatpush.msra.mxu0 0.0
    %2109 = vmatpush.msra.mxu0 0.0
    %2110 = vmatpush.msra.mxu0 0.0
    %2111 = vmatpush.msra.mxu0 0.0
    %2112 = vmatpush.msra.mxu0 0.0
    %2113 = vmatpush.msra.mxu0 0.0
    %2114 = vmatpush.msra.mxu0 0.0
    %2115 = vmatpush.msra.mxu0 0.0
    %2116 = vmatpush.msra.mxu0 %v2040
    %2117 = vmatmul.f32.gmra.mxu0 %v2099
    %v2118 = vpop.f32.mrf.mxu0
    %v2119 = vadd.f32 %v2096, %v2118
    %2120 = vdwg.mxu0
    %2121 = vxpose.xlu0.b32.start [1/16] %v2064, 128
    %2122 = vxpose.xlu0.b32.cont [2/16] 0.0, 128
    %2123 = vxpose.xlu0.b32.cont [3/16] 0.0, 128
    %2124 = vxpose.xlu0.b32.cont [4/16] 0.0, 128
    %2125 = vxpose.xlu0.b32.cont [5/16] 0.0, 128
    %2126 = vxpose.xlu0.b32.cont [6/16] 0.0, 128
    %2127 = vxpose.xlu0.b32.cont [7/16] 0.0, 128
    %2128 = vxpose.xlu0.b32.cont [8/16] 0.0, 128
    %2129 = vxpose.xlu0.b32.cont [9/16] 0.0, 128
    %2130 = vxpose.xlu0.b32.cont [10/16] 0.0, 128
    %2131 = vxpose.xlu0.b32.cont [11/16] 0.0, 128
    %2132 = vxpose.xlu0.b32.cont [12/16] 0.0, 128
    %2133 = vxpose.xlu0.b32.cont [13/16] 0.0, 128
    %2134 = vxpose.xlu0.b32.cont [14/16] 0.0, 128
    %2135 = vxpose.xlu0.b32.cont [15/16] 0.0, 128
    %2136 = vxpose.xlu0.b32.end [16/16] 0.0, 128
    %v2137 = vpop.trf.xlu0
    %v2138 = vpop.trf.xlu0
    %v2139 = vpop.trf.xlu0
    %v2140 = vpop.trf.xlu0
    %v2141 = vpop.trf.xlu0
    %v2142 = vpop.trf.xlu0
    %v2143 = vpop.trf.xlu0
    %v2144 = vpop.trf.xlu0
    %v2145 = vpop.trf.xlu0
    %v2146 = vpop.trf.xlu0
    %v2147 = vpop.trf.xlu0
    %v2148 = vpop.trf.xlu0
    %v2149 = vpop.trf.xlu0
    %v2150 = vpop.trf.xlu0
    %v2151 = vpop.trf.xlu0
    %v2152 = vpop.trf.xlu0
    %v2154 = vsel %vm228, %v2137, 0
    %v2157 = vsel %vm235, %v2089, 0
    %2159 = vmatpush.msra.mxu0 0.0
    %2160 = vmatpush.msra.mxu0 0.0
    %2161 = vmatpush.msra.mxu0 0.0
    %2162 = vmatpush.msra.mxu0 0.0
    %2163 = vmatpush.msra.mxu0 0.0
    %2164 = vmatpush.msra.mxu0 0.0
    %2165 = vmatpush.msra.mxu0 0.0
    %2166 = vmatpush.msra.mxu0 0.0
    %2167 = vmatpush.msra.mxu0 0.0
    %2168 = vmatpush.msra.mxu0 0.0
    %2169 = vmatpush.msra.mxu0 0.0
    %2170 = vmatpush.msra.mxu0 0.0
    %2171 = vmatpush.msra.mxu0 0.0
    %2172 = vmatpush.msra.mxu0 0.0
    %2173 = vmatpush.msra.mxu0 0.0
    %2174 = vmatpush.msra.mxu0 %v2157
    %2175 = vmatmul.f32.gmra.mxu0 %v2154
    %v2176 = vpop.f32.mrf.mxu0
    %v2177 = vadd.f32 0.0, %v2176
    %2178 = vdwg.mxu0
    %vm2179 = vcmask 46080
    %v2180 = vsel %vm2179, %v2177, -inf
    %2181 = vmax.xlane.f32.xlu0 %v2180
    %v2182 = vpop.xlane.xlu0 %2181
    %v2183 = vsub.f32 %v2177, %v2182
    %v2184 = vmul.f32 %v2183, 1.442695
    %v2185 = vpow.pop %v2184
    %v2186 = vsel %vm2179, %v2185, 0.0
    %2187 = vadd.xlane.f32.xlu0 %v2186
    %v2188 = vpop.xlane.xlu0 %2187
    %v2189 = vrcp.pop %v2188
    %v2190 = vmul.f32 %v2185, %v2189
    %v2192 = vsel %vm1352, %v2119, 0
    %v2195 = vsel %vm1352, %v2190, 0
    %2197 = vmatpush.xpose.msra.mxu0 0.0
    %2198 = vmatpush.xpose.msra.mxu0 0.0
    %2199 = vmatpush.xpose.msra.mxu0 0.0
    %2200 = vmatpush.xpose.msra.mxu0 0.0
    %2201 = vmatpush.xpose.msra.mxu0 0.0
    %2202 = vmatpush.xpose.msra.mxu0 0.0
    %2203 = vmatpush.xpose.msra.mxu0 0.0
    %2204 = vmatpush.xpose.msra.mxu0 0.0
    %2205 = vmatpush.xpose.msra.mxu0 0.0
    %2206 = vmatpush.xpose.msra.mxu0 0.0
    %2207 = vmatpush.xpose.msra.mxu0 0.0
    %2208 = vmatpush.xpose.msra.mxu0 0.0
    %2209 = vmatpush.xpose.msra.mxu0 0.0
    %2210 = vmatpush.xpose.msra.mxu0 0.0
    %2211 = vmatpush.xpose.msra.mxu0 0.0
    %2212 = vmatpush.xpose.msra.mxu0 %v2195
    %2213 = vmatmul.f32.gmra.mxu0 %v2192
    %v2214 = vpop.f32.mrf.mxu0
    %v2215 = vadd.f32 0.0, %v2214
    %2216 = vdwg.mxu0
    %v2217 = vstv %s159
    %v2218 = vmul.f32 %v2217, %v2215
    %v2219 = vadd.f32 %v2218, %v2040
    %v2220 = vld [vmem:[%s49] sm:$0x1]
    %v2222 = vsel %vm1352, %v2219, 0
    %2224 = vmatpush.msra.mxu0 0.0
    %2225 = vmatpush.msra.mxu0 0.0
    %2226 = vmatpush.msra.mxu0 0.0
    %2227 = vmatpush.msra.mxu0 0.0
    %2228 = vmatpush.msra.mxu0 0.0
    %2229 = vmatpush.msra.mxu0 0.0
    %2230 = vmatpush.msra.mxu0 0.0
    %2231 = vmatpush.msra.mxu0 0.0
    %2232 = vmatpush.msra.mxu0 0.0
    %2233 = vmatpush.msra.mxu0 0.0
    %2234 = vmatpush.msra.mxu0 0.0
    %2235 = vmatpush.msra.mxu0 0.0
    %2236 = vmatpush.msra.mxu0 0.0
    %2237 = vmatpush.msra.mxu0 0.0
    %2238 = vmatpush.msra.mxu0 0.0
    %2239 = vmatpush.msra.mxu0 %v1379
    %2240 = vmatmul.f32.gmra.mxu0 %v2222
    %v2241 = vpop.f32.mrf.mxu0
    %v2242 = vadd.f32 0.0, %v2241
    %2243 = vdwg.mxu0
    %s2244 = scalar_lea.vmem %s49, 1
    %v2245 = vld [vmem:[%s2244] sm:$0x1]
    %v2247 = vsel %vm630, %v2245, 0
    %2249 = vmatpush.msra.mxu0 0.0
    %2250 = vmatpush.msra.mxu0 0.0
    %2251 = vmatpush.msra.mxu0 0.0
    %2252 = vmatpush.msra.mxu0 0.0
    %2253 = vmatpush.msra.mxu0 0.0
    %2254 = vmatpush.msra.mxu0 0.0
    %2255 = vmatpush.msra.mxu0 0.0
    %2256 = vmatpush.msra.mxu0 0.0
    %2257 = vmatpush.msra.mxu0 0.0
    %2258 = vmatpush.msra.mxu0 0.0
    %2259 = vmatpush.msra.mxu0 0.0
    %2260 = vmatpush.msra.mxu0 0.0
    %2261 = vmatpush.msra.mxu0 0.0
    %2262 = vmatpush.msra.mxu0 0.0
    %2263 = vmatpush.msra.mxu0 0.0
    %2264 = vmatpush.msra.mxu0 %v2219
    %2265 = vmatmul.f32.gmra.mxu0 %v2247
    %v2266 = vpop.f32.mrf.mxu0
    %v2267 = vadd.f32 0.0, %v2266
    %2268 = vdwg.mxu0
    %v2270 = vsel %vm630, %v2220, 0
    %2272 = vmatpush.msra.mxu0 0.0
    %2273 = vmatpush.msra.mxu0 0.0
    %2274 = vmatpush.msra.mxu0 0.0
    %2275 = vmatpush.msra.mxu0 0.0
    %2276 = vmatpush.msra.mxu0 0.0
    %2277 = vmatpush.msra.mxu0 0.0
    %2278 = vmatpush.msra.mxu0 0.0
    %2279 = vmatpush.msra.mxu0 0.0
    %2280 = vmatpush.msra.mxu0 0.0
    %2281 = vmatpush.msra.mxu0 0.0
    %2282 = vmatpush.msra.mxu0 0.0
    %2283 = vmatpush.msra.mxu0 0.0
    %2284 = vmatpush.msra.mxu0 0.0
    %2285 = vmatpush.msra.mxu0 0.0
    %2286 = vmatpush.msra.mxu0 0.0
    %2287 = vmatpush.msra.mxu0 %v2242
    %2288 = vmatmul.f32.gmra.mxu0 %v2270
    %v2289 = vpop.f32.mrf.mxu0
    %v2290 = vadd.f32 %v2267, %v2289
    %2291 = vdwg.mxu0
    %s2292 = scalar_lea.vmem %s49, 2
    %v2293 = vld [vmem:[%s2292] sm:$0x1]
    %2294 = vmatpush.msra.mxu0 0.0
    %2295 = vmatpush.msra.mxu0 0.0
    %2296 = vmatpush.msra.mxu0 0.0
    %2297 = vmatpush.msra.mxu0 0.0
    %2298 = vmatpush.msra.mxu0 0.0
    %2299 = vmatpush.msra.mxu0 0.0
    %2300 = vmatpush.msra.mxu0 0.0
    %2301 = vmatpush.msra.mxu0 0.0
    %2302 = vmatpush.msra.mxu0 0.0
    %2303 = vmatpush.msra.mxu0 0.0
    %2304 = vmatpush.msra.mxu0 0.0
    %2305 = vmatpush.msra.mxu0 0.0
    %2306 = vmatpush.msra.mxu0 0.0
    %2307 = vmatpush.msra.mxu0 0.0
    %2308 = vmatpush.msra.mxu0 0.0
    %2309 = vmatpush.msra.mxu0 %v1516
    %2310 = vmatmul.f32.gmra.mxu0 %v2222
    %v2311 = vpop.f32.mrf.mxu0
    %v2312 = vadd.f32 0.0, %v2311
    %2313 = vdwg.mxu0
    %v2315 = vsel %vm630, %v2293, 0
    %2317 = vmatpush.msra.mxu0 0.0
    %2318 = vmatpush.msra.mxu0 0.0
    %2319 = vmatpush.msra.mxu0 0.0
    %2320 = vmatpush.msra.mxu0 0.0
    %2321 = vmatpush.msra.mxu0 0.0
    %2322 = vmatpush.msra.mxu0 0.0
    %2323 = vmatpush.msra.mxu0 0.0
    %2324 = vmatpush.msra.mxu0 0.0
    %2325 = vmatpush.msra.mxu0 0.0
    %2326 = vmatpush.msra.mxu0 0.0
    %2327 = vmatpush.msra.mxu0 0.0
    %2328 = vmatpush.msra.mxu0 0.0
    %2329 = vmatpush.msra.mxu0 0.0
    %2330 = vmatpush.msra.mxu0 0.0
    %2331 = vmatpush.msra.mxu0 0.0
    %2332 = vmatpush.msra.mxu0 %v2312
    %2333 = vmatmul.f32.gmra.mxu0 %v2315
    %v2334 = vpop.f32.mrf.mxu0
    %v2335 = vadd.f32 0.0, %v2334
    %2336 = vdwg.mxu0
    %v2337 = vadd.f32 %v2290, %v2335
    %v2338 = vld [vmem:[#allocation2] sm:$0x1]
    %2340 = vset.pattern.permute.xlu0 0
    %2341 = vperm.xlu0 %2340, %v2338
    %v2342 = vpop.permute.xlu0 %2341
    %v2344 = vperm.slane %v2342, 0
    %v2345 = vadd.f32 %v2337, %v2344
    %vm2346 = vcmask 40960
    %v2347 = vsel %vm2346, %v2345, 0.0
    %2348 = vadd.xlane.f32.xlu0 %v2347
    %v2349 = vpop.xlane.xlu0 %2348
    %v2350 = vrcp.pop 6.0
    %v2351 = vmul.f32 6.0, %v2350
    %v2352 = vsub.f32 1.0, %v2351
    %v2353 = vmul.f32 %v2350, %v2352
    %v2354 = vadd.f32 %v2350, %v2353
    %vm2355 = vweird.f32 %v2350
    %v2356 = vsel %vm2355, %v2350, %v2354
    %v2357 = vmul.f32 %v2349, %v2356
    %v2358 = vld [vmem:[%s5] sm:$0x1]
    %v2359 = vld [vmem:[%s7] sm:$0x1]
    %v2360 = vld [vmem:[%s53] sm:$0x1]
    %v2361 = vmul.f32 %v2357, %v2360
    %v2362 = vld [vmem:[%s55] sm:$0x7]
    %vm2363 = vcmask 23552
    %v2365 = vsel %vm2363, %v2358, 0
    %vm2367 = vcmask 1042432
    %v2369 = vsel %vm2367, %v2362, 0
    %2371 = vmatpush.msra.mxu0 0.0
    %2372 = vmatpush.msra.mxu0 0.0
    %2373 = vmatpush.msra.mxu0 0.0
    %2374 = vmatpush.msra.mxu0 0.0
    %2375 = vmatpush.msra.mxu0 0.0
    %2376 = vmatpush.msra.mxu0 0.0
    %2377 = vmatpush.msra.mxu0 0.0
    %2378 = vmatpush.msra.mxu0 0.0
    %2379 = vmatpush.msra.mxu0 0.0
    %2380 = vmatpush.msra.mxu0 0.0
    %2381 = vmatpush.msra.mxu0 0.0
    %2382 = vmatpush.msra.mxu0 0.0
    %2383 = vmatpush.msra.mxu0 0.0
    %2384 = vmatpush.msra.mxu0 0.0
    %2385 = vmatpush.msra.mxu0 0.0
    %2386 = vmatpush.msra.mxu0 %v2369
    %2387 = vmatmul.f32.gmra.mxu0 %v2365
    %v2388 = vpop.f32.mrf.mxu0
    %v2389 = vadd.f32 0.0, %v2388
    %2390 = vdwg.mxu0
    %v2391 = vadd.f32 %v2361, %v2389
    %v2392 = vld [vmem:[%s57] sm:$0x7]
    %v2394 = vsel %vm2363, %v2359, 0
    %v2397 = vsel %vm2367, %v2392, 0
    %2399 = vmatpush.msra.mxu0 0.0
    %2400 = vmatpush.msra.mxu0 0.0
    %2401 = vmatpush.msra.mxu0 0.0
    %2402 = vmatpush.msra.mxu0 0.0
    %2403 = vmatpush.msra.mxu0 0.0
    %2404 = vmatpush.msra.mxu0 0.0
    %2405 = vmatpush.msra.mxu0 0.0
    %2406 = vmatpush.msra.mxu0 0.0
    %2407 = vmatpush.msra.mxu0 0.0
    %2408 = vmatpush.msra.mxu0 0.0
    %2409 = vmatpush.msra.mxu0 0.0
    %2410 = vmatpush.msra.mxu0 0.0
    %2411 = vmatpush.msra.mxu0 0.0
    %2412 = vmatpush.msra.mxu0 0.0
    %2413 = vmatpush.msra.mxu0 0.0
    %2414 = vmatpush.msra.mxu0 %v2397
    %2415 = vmatmul.f32.gmra.mxu0 %v2394
    %v2416 = vpop.f32.mrf.mxu0
    %v2417 = vadd.f32 0.0, %v2416
    %2418 = vdwg.mxu0
    %v2419 = vadd.f32 %v2391, %v2417
    %v2420 = vld [vmem:[%s59] sm:$0x1]
    %v2421 = vadd.f32 %v2419, %v2420
    %vm2422 = vcmp.gt.f32.partialorder %v2421, 0.0
    %v2423 = vmul.f32 %v2421, 0.2
    %v2424 = vsel %vm2422, %v2421, %v2423
    %v2425 = vld [vmem:[%s61] sm:$0xff]
    %v2426 = vld [vmem:[%s61 + $0x8] sm:$0xff]
    %v2427 = vld [vmem:[%s61 + $0x10] sm:$0xff]
    %v2428 = vld [vmem:[%s61 + $0x18] sm:$0xff]
    %v2429 = vld [vmem:[%s61 + $0x20] sm:$0xff]
    %v2430 = vld [vmem:[%s61 + $0x28] sm:$0xff]
    %v2431 = vld [vmem:[%s61 + $0x30] sm:$0xff]
    %v2432 = vld [vmem:[%s61 + $0x38] sm:$0xff]
    %v2433 = vld [vmem:[%s61 + $0x40] sm:$0xff]
    %v2434 = vld [vmem:[%s61 + $0x48] sm:$0xff]
    %v2435 = vld [vmem:[%s61 + $0x50] sm:$0xff]
    %v2436 = vld [vmem:[%s61 + $0x58] sm:$0xff]
    %v2437 = vld [vmem:[%s61 + $0x60] sm:$0xff]
    %v2438 = vld [vmem:[%s61 + $0x68] sm:$0xff]
    %v2439 = vld [vmem:[%s61 + $0x70] sm:$0xff]
    %v2440 = vld [vmem:[%s61 + $0x78] sm:$0xff]
    %v2441 = vld [vmem:[%s63] sm:$0x1]
    %2442 = vmatpush.msra.mxu0 %v2440
    %2443 = vmatpush.msra.mxu0 %v2439
    %2444 = vmatpush.msra.mxu0 %v2438
    %2445 = vmatpush.msra.mxu0 %v2437
    %2446 = vmatpush.msra.mxu0 %v2436
    %2447 = vmatpush.msra.mxu0 %v2435
    %2448 = vmatpush.msra.mxu0 %v2434
    %2449 = vmatpush.msra.mxu0 %v2433
    %2450 = vmatpush.msra.mxu0 %v2432
    %2451 = vmatpush.msra.mxu0 %v2431
    %2452 = vmatpush.msra.mxu0 %v2430
    %2453 = vmatpush.msra.mxu0 %v2429
    %2454 = vmatpush.msra.mxu0 %v2428
    %2455 = vmatpush.msra.mxu0 %v2427
    %2456 = vmatpush.msra.mxu0 %v2426
    %2457 = vmatpush.msra.mxu0 %v2425
    %2458 = vmatmul.f32.gmra.mxu0 %v2424
    %v2459 = vpop.f32.mrf.mxu0
    %v2460 = vadd.f32 %v2441, %v2459
    %2461 = vdwg.mxu0
    %vm2462 = vcmp.gt.f32.partialorder %v2460, 0.0
    %v2463 = vmul.f32 %v2460, 0.2
    %v2464 = vsel %vm2462, %v2460, %v2463
    %v2465 = vld [vmem:[%s65] sm:$0xff]
    %v2466 = vld [vmem:[%s65 + $0x8] sm:$0xff]
    %v2467 = vld [vmem:[%s65 + $0x10] sm:$0xff]
    %v2468 = vld [vmem:[%s65 + $0x18] sm:$0xff]
    %v2469 = vld [vmem:[%s65 + $0x20] sm:$0xff]
    %v2470 = vld [vmem:[%s65 + $0x28] sm:$0xff]
    %v2471 = vld [vmem:[%s65 + $0x30] sm:$0xff]
    %v2472 = vld [vmem:[%s65 + $0x38] sm:$0xff]
    %v2473 = vld [vmem:[#allocation3] sm:$0x1]
    %v2475 = vsel %vm1427, %v2464, 0
    %2477 = vmatpush.msra.mxu0 0.0
    %2478 = vmatpush.msra.mxu0 0.0
    %2479 = vmatpush.msra.mxu0 0.0
    %2480 = vmatpush.msra.mxu0 0.0
    %2481 = vmatpush.msra.mxu0 0.0
    %2482 = vmatpush.msra.mxu0 0.0
    %2483 = vmatpush.msra.mxu0 0.0
    %2484 = vmatpush.msra.mxu0 0.0
    %2485 = vmatpush.msra.mxu0 %v2472
    %2486 = vmatpush.msra.mxu0 %v2471
    %2487 = vmatpush.msra.mxu0 %v2470
    %2488 = vmatpush.msra.mxu0 %v2469
    %2489 = vmatpush.msra.mxu0 %v2468
    %2490 = vmatpush.msra.mxu0 %v2467
    %2491 = vmatpush.msra.mxu0 %v2466
    %2492 = vmatpush.msra.mxu0 %v2465
    %2493 = vmatmul.f32.gmra.mxu0 %v2475
    %v2494 = vpop.f32.mrf.mxu0
    %v2495 = vadd.f32 %v2473, %v2494
    %2496 = vdwg.mxu0
    %vm2497 = vcmask 0
    %2498 = vst.msk [vmem:[%s69] sm:$0x1] %vm2497, %v2495
    %v2499 = vld [vmem:[%s3 + $0x1] sm:$0x1]
    %v2500 = vld [vmem:[%s9] sm:$0xff]
    %v2501 = vld [vmem:[%s9 + $0x8] sm:$0xff]
    %v2503 = vsel %vm176, %v2499, 0
    %2505 = vmatpush.msra.mxu0 0.0
    %2506 = vmatpush.msra.mxu0 0.0
    %2507 = vmatpush.msra.mxu0 0.0
    %2508 = vmatpush.msra.mxu0 0.0
    %2509 = vmatpush.msra.mxu0 0.0
    %2510 = vmatpush.msra.mxu0 0.0
    %2511 = vmatpush.msra.mxu0 0.0
    %2512 = vmatpush.msra.mxu0 0.0
    %2513 = vmatpush.msra.mxu0 0.0
    %2514 = vmatpush.msra.mxu0 0.0
    %2515 = vmatpush.msra.mxu0 0.0
    %2516 = vmatpush.msra.mxu0 0.0
    %2517 = vmatpush.msra.mxu0 0.0
    %2518 = vmatpush.msra.mxu0 0.0
    %2519 = vmatpush.msra.mxu0 %v175
    %2520 = vmatpush.msra.mxu0 %v174
    %2521 = vmatmul.f32.gmra.mxu0 %v2503
    %v2522 = vpop.f32.mrf.mxu0
    %v2523 = vadd.f32 0.0, %v2522
    %2524 = vdwg.mxu0
    %v2525 = vld [vmem:[%s200] sm:$0xff]
    %v2526 = vld [vmem:[%s200 + $0x8] sm:$0xff]
    %2527 = vmatpush.msra.mxu0 0.0
    %2528 = vmatpush.msra.mxu0 0.0
    %2529 = vmatpush.msra.mxu0 0.0
    %2530 = vmatpush.msra.mxu0 0.0
    %2531 = vmatpush.msra.mxu0 0.0
    %2532 = vmatpush.msra.mxu0 0.0
    %2533 = vmatpush.msra.mxu0 0.0
    %2534 = vmatpush.msra.mxu0 0.0
    %2535 = vmatpush.msra.mxu0 0.0
    %2536 = vmatpush.msra.mxu0 0.0
    %2537 = vmatpush.msra.mxu0 0.0
    %2538 = vmatpush.msra.mxu0 0.0
    %2539 = vmatpush.msra.mxu0 0.0
    %2540 = vmatpush.msra.mxu0 0.0
    %2541 = vmatpush.msra.mxu0 %v207
    %2542 = vmatpush.msra.mxu0 %v206
    %2543 = vmatmul.f32.gmra.mxu0 %v2503
    %v2544 = vpop.f32.mrf.mxu0
    %v2545 = vadd.f32 0.0, %v2544
    %2546 = vdwg.mxu0
    %v2548 = vsel %vm228, %v2525, 0
    %v2551 = vsel %vm228, %v2526, 0
    %v2554 = vsel %vm235, %v2545, 0
    %2556 = vmatpush.msra.mxu0 0.0
    %2557 = vmatpush.msra.mxu0 0.0
    %2558 = vmatpush.msra.mxu0 0.0
    %2559 = vmatpush.msra.mxu0 0.0
    %2560 = vmatpush.msra.mxu0 0.0
    %2561 = vmatpush.msra.mxu0 0.0
    %2562 = vmatpush.msra.mxu0 0.0
    %2563 = vmatpush.msra.mxu0 0.0
    %2564 = vmatpush.msra.mxu0 0.0
    %2565 = vmatpush.msra.mxu0 0.0
    %2566 = vmatpush.msra.mxu0 0.0
    %2567 = vmatpush.msra.mxu0 0.0
    %2568 = vmatpush.msra.mxu0 0.0
    %2569 = vmatpush.msra.mxu0 0.0
    %2570 = vmatpush.msra.mxu0 0.0
    %2571 = vmatpush.msra.mxu0 %v2554
    %2572 = vmatmul.f32.gmra.mxu0 %v2548
    %v2573 = vpop.f32.mrf.mxu0
    %v2574 = vadd.f32 0.0, %v2573
    %2575 = vmatmul.f32.gmra.mxu0 %v2551
    %v2576 = vpop.f32.mrf.mxu0
    %v2577 = vadd.f32 0.0, %v2576
    %2578 = vdwg.mxu0
    %v2580 = vsel %vm228, %v2500, 0
    %v2583 = vsel %vm228, %v2501, 0
    %v2586 = vsel %vm235, %v2523, 0
    %2588 = vmatpush.msra.mxu0 0.0
    %2589 = vmatpush.msra.mxu0 0.0
    %2590 = vmatpush.msra.mxu0 0.0
    %2591 = vmatpush.msra.mxu0 0.0
    %2592 = vmatpush.msra.mxu0 0.0
    %2593 = vmatpush.msra.mxu0 0.0
    %2594 = vmatpush.msra.mxu0 0.0
    %2595 = vmatpush.msra.mxu0 0.0
    %2596 = vmatpush.msra.mxu0 0.0
    %2597 = vmatpush.msra.mxu0 0.0
    %2598 = vmatpush.msra.mxu0 0.0
    %2599 = vmatpush.msra.mxu0 0.0
    %2600 = vmatpush.msra.mxu0 0.0
    %2601 = vmatpush.msra.mxu0 0.0
    %2602 = vmatpush.msra.mxu0 0.0
    %2603 = vmatpush.msra.mxu0 %v2586
    %2604 = vmatmul.f32.gmra.mxu0 %v2580
    %v2605 = vpop.f32.mrf.mxu0
    %v2606 = vadd.f32 %v2574, %v2605
    %2607 = vmatmul.f32.gmra.mxu0 %v2583
    %v2608 = vpop.f32.mrf.mxu0
    %v2609 = vadd.f32 %v2577, %v2608
    %2610 = vdwg.mxu0
    %v2611 = vld [vmem:[%s294] sm:$0xff]
    %v2612 = vld [vmem:[%s294 + $0x8] sm:$0xff]
    %2613 = vmatpush.msra.mxu0 0.0
    %2614 = vmatpush.msra.mxu0 0.0
    %2615 = vmatpush.msra.mxu0 0.0
    %2616 = vmatpush.msra.mxu0 0.0
    %2617 = vmatpush.msra.mxu0 0.0
    %2618 = vmatpush.msra.mxu0 0.0
    %2619 = vmatpush.msra.mxu0 0.0
    %2620 = vmatpush.msra.mxu0 0.0
    %2621 = vmatpush.msra.mxu0 0.0
    %2622 = vmatpush.msra.mxu0 0.0
    %2623 = vmatpush.msra.mxu0 0.0
    %2624 = vmatpush.msra.mxu0 0.0
    %2625 = vmatpush.msra.mxu0 0.0
    %2626 = vmatpush.msra.mxu0 0.0
    %2627 = vmatpush.msra.mxu0 %v301
    %2628 = vmatpush.msra.mxu0 %v300
    %2629 = vmatmul.f32.gmra.mxu0 %v2503
    %v2630 = vpop.f32.mrf.mxu0
    %v2631 = vadd.f32 0.0, %v2630
    %2632 = vdwg.mxu0
    %v2634 = vsel %vm228, %v2611, 0
    %v2637 = vsel %vm228, %v2612, 0
    %v2640 = vsel %vm235, %v2631, 0
    %2642 = vmatpush.msra.mxu0 0.0
    %2643 = vmatpush.msra.mxu0 0.0
    %2644 = vmatpush.msra.mxu0 0.0
    %2645 = vmatpush.msra.mxu0 0.0
    %2646 = vmatpush.msra.mxu0 0.0
    %2647 = vmatpush.msra.mxu0 0.0
    %2648 = vmatpush.msra.mxu0 0.0
    %2649 = vmatpush.msra.mxu0 0.0
    %2650 = vmatpush.msra.mxu0 0.0
    %2651 = vmatpush.msra.mxu0 0.0
    %2652 = vmatpush.msra.mxu0 0.0
    %2653 = vmatpush.msra.mxu0 0.0
    %2654 = vmatpush.msra.mxu0 0.0
    %2655 = vmatpush.msra.mxu0 0.0
    %2656 = vmatpush.msra.mxu0 0.0
    %2657 = vmatpush.msra.mxu0 %v2640
    %2658 = vmatmul.f32.gmra.mxu0 %v2634
    %v2659 = vpop.f32.mrf.mxu0
    %v2660 = vadd.f32 0.0, %v2659
    %2661 = vmatmul.f32.gmra.mxu0 %v2637
    %v2662 = vpop.f32.mrf.mxu0
    %v2663 = vadd.f32 0.0, %v2662
    %2664 = vdwg.mxu0
    %v2665 = vadd.f32 %v2606, %v2660
    %v2666 = vadd.f32 %v2609, %v2663
    %v2667 = vld [vmem:[%s356] sm:$0xff]
    %v2668 = vld [vmem:[%s356 + $0x8] sm:$0xff]
    %2669 = vmatpush.msra.mxu0 0.0
    %2670 = vmatpush.msra.mxu0 0.0
    %2671 = vmatpush.msra.mxu0 0.0
    %2672 = vmatpush.msra.mxu0 0.0
    %2673 = vmatpush.msra.mxu0 0.0
    %2674 = vmatpush.msra.mxu0 0.0
    %2675 = vmatpush.msra.mxu0 0.0
    %2676 = vmatpush.msra.mxu0 0.0
    %2677 = vmatpush.msra.mxu0 0.0
    %2678 = vmatpush.msra.mxu0 0.0
    %2679 = vmatpush.msra.mxu0 0.0
    %2680 = vmatpush.msra.mxu0 0.0
    %2681 = vmatpush.msra.mxu0 0.0
    %2682 = vmatpush.msra.mxu0 0.0
    %2683 = vmatpush.msra.mxu0 %v362
    %2684 = vmatpush.msra.mxu0 %v361
    %2685 = vmatmul.f32.gmra.mxu0 %v2503
    %v2686 = vpop.f32.mrf.mxu0
    %v2687 = vadd.f32 0.0, %v2686
    %2688 = vdwg.mxu0
    %v2690 = vsel %vm228, %v2667, 0
    %v2693 = vsel %vm228, %v2668, 0
    %v2696 = vsel %vm235, %v2687, 0
    %2698 = vmatpush.msra.mxu0 0.0
    %2699 = vmatpush.msra.mxu0 0.0
    %2700 = vmatpush.msra.mxu0 0.0
    %2701 = vmatpush.msra.mxu0 0.0
    %2702 = vmatpush.msra.mxu0 0.0
    %2703 = vmatpush.msra.mxu0 0.0
    %2704 = vmatpush.msra.mxu0 0.0
    %2705 = vmatpush.msra.mxu0 0.0
    %2706 = vmatpush.msra.mxu0 0.0
    %2707 = vmatpush.msra.mxu0 0.0
    %2708 = vmatpush.msra.mxu0 0.0
    %2709 = vmatpush.msra.mxu0 0.0
    %2710 = vmatpush.msra.mxu0 0.0
    %2711 = vmatpush.msra.mxu0 0.0
    %2712 = vmatpush.msra.mxu0 0.0
    %2713 = vmatpush.msra.mxu0 %v2696
    %2714 = vmatmul.f32.gmra.mxu0 %v2690
    %v2715 = vpop.f32.mrf.mxu0
    %v2716 = vadd.f32 0.0, %v2715
    %2717 = vmatmul.f32.gmra.mxu0 %v2693
    %v2718 = vpop.f32.mrf.mxu0
    %v2719 = vadd.f32 0.0, %v2718
    %2720 = vdwg.mxu0
    %v2721 = vadd.f32 %v2665, %v2716
    %v2722 = vadd.f32 %v2666, %v2719
    %v2723 = vld [vmem:[%s417] sm:$0xff]
    %v2724 = vld [vmem:[%s417 + $0x8] sm:$0xff]
    %2725 = vmatpush.msra.mxu0 0.0
    %2726 = vmatpush.msra.mxu0 0.0
    %2727 = vmatpush.msra.mxu0 0.0
    %2728 = vmatpush.msra.mxu0 0.0
    %2729 = vmatpush.msra.mxu0 0.0
    %2730 = vmatpush.msra.mxu0 0.0
    %2731 = vmatpush.msra.mxu0 0.0
    %2732 = vmatpush.msra.mxu0 0.0
    %2733 = vmatpush.msra.mxu0 0.0
    %2734 = vmatpush.msra.mxu0 0.0
    %2735 = vmatpush.msra.mxu0 0.0
    %2736 = vmatpush.msra.mxu0 0.0
    %2737 = vmatpush.msra.mxu0 0.0
    %2738 = vmatpush.msra.mxu0 0.0
    %2739 = vmatpush.msra.mxu0 %v424
    %2740 = vmatpush.msra.mxu0 %v423
    %2741 = vmatmul.f32.gmra.mxu0 %v2503
    %v2742 = vpop.f32.mrf.mxu0
    %v2743 = vadd.f32 0.0, %v2742
    %2744 = vdwg.mxu0
    %v2746 = vsel %vm228, %v2723, 0
    %v2749 = vsel %vm228, %v2724, 0
    %v2752 = vsel %vm235, %v2743, 0
    %2754 = vmatpush.msra.mxu0 0.0
    %2755 = vmatpush.msra.mxu0 0.0
    %2756 = vmatpush.msra.mxu0 0.0
    %2757 = vmatpush.msra.mxu0 0.0
    %2758 = vmatpush.msra.mxu0 0.0
    %2759 = vmatpush.msra.mxu0 0.0
    %2760 = vmatpush.msra.mxu0 0.0
    %2761 = vmatpush.msra.mxu0 0.0
    %2762 = vmatpush.msra.mxu0 0.0
    %2763 = vmatpush.msra.mxu0 0.0
    %2764 = vmatpush.msra.mxu0 0.0
    %2765 = vmatpush.msra.mxu0 0.0
    %2766 = vmatpush.msra.mxu0 0.0
    %2767 = vmatpush.msra.mxu0 0.0
    %2768 = vmatpush.msra.mxu0 0.0
    %2769 = vmatpush.msra.mxu0 %v2752
    %2770 = vmatmul.f32.gmra.mxu0 %v2746
    %v2771 = vpop.f32.mrf.mxu0
    %v2772 = vadd.f32 0.0, %v2771
    %2773 = vmatmul.f32.gmra.mxu0 %v2749
    %v2774 = vpop.f32.mrf.mxu0
    %v2775 = vadd.f32 0.0, %v2774
    %2776 = vdwg.mxu0
    %v2777 = vadd.f32 %v2721, %v2772
    %v2778 = vadd.f32 %v2722, %v2775
    %v2779 = vld [vmem:[%s479] sm:$0xff]
    %v2780 = vld [vmem:[%s479 + $0x8] sm:$0xff]
    %2781 = vmatpush.msra.mxu0 0.0
    %2782 = vmatpush.msra.mxu0 0.0
    %2783 = vmatpush.msra.mxu0 0.0
    %2784 = vmatpush.msra.mxu0 0.0
    %2785 = vmatpush.msra.mxu0 0.0
    %2786 = vmatpush.msra.mxu0 0.0
    %2787 = vmatpush.msra.mxu0 0.0
    %2788 = vmatpush.msra.mxu0 0.0
    %2789 = vmatpush.msra.mxu0 0.0
    %2790 = vmatpush.msra.mxu0 0.0
    %2791 = vmatpush.msra.mxu0 0.0
    %2792 = vmatpush.msra.mxu0 0.0
    %2793 = vmatpush.msra.mxu0 0.0
    %2794 = vmatpush.msra.mxu0 0.0
    %2795 = vmatpush.msra.mxu0 %v486
    %2796 = vmatpush.msra.mxu0 %v485
    %2797 = vmatmul.f32.gmra.mxu0 %v2503
    %v2798 = vpop.f32.mrf.mxu0
    %v2799 = vadd.f32 0.0, %v2798
    %2800 = vdwg.mxu0
    %v2802 = vsel %vm228, %v2779, 0
    %v2805 = vsel %vm228, %v2780, 0
    %v2808 = vsel %vm235, %v2799, 0
    %2810 = vmatpush.msra.mxu0 0.0
    %2811 = vmatpush.msra.mxu0 0.0
    %2812 = vmatpush.msra.mxu0 0.0
    %2813 = vmatpush.msra.mxu0 0.0
    %2814 = vmatpush.msra.mxu0 0.0
    %2815 = vmatpush.msra.mxu0 0.0
    %2816 = vmatpush.msra.mxu0 0.0
    %2817 = vmatpush.msra.mxu0 0.0
    %2818 = vmatpush.msra.mxu0 0.0
    %2819 = vmatpush.msra.mxu0 0.0
    %2820 = vmatpush.msra.mxu0 0.0
    %2821 = vmatpush.msra.mxu0 0.0
    %2822 = vmatpush.msra.mxu0 0.0
    %2823 = vmatpush.msra.mxu0 0.0
    %2824 = vmatpush.msra.mxu0 0.0
    %2825 = vmatpush.msra.mxu0 %v2808
    %2826 = vmatmul.f32.gmra.mxu0 %v2802
    %v2827 = vpop.f32.mrf.mxu0
    %v2828 = vadd.f32 0.0, %v2827
    %2829 = vmatmul.f32.gmra.mxu0 %v2805
    %v2830 = vpop.f32.mrf.mxu0
    %v2831 = vadd.f32 0.0, %v2830
    %2832 = vdwg.mxu0
    %v2833 = vadd.f32 %v2777, %v2828
    %v2834 = vadd.f32 %v2778, %v2831
    %v2835 = vld [vmem:[%s541] sm:$0xff]
    %v2836 = vld [vmem:[%s541 + $0x8] sm:$0xff]
    %2837 = vmatpush.msra.mxu0 0.0
    %2838 = vmatpush.msra.mxu0 0.0
    %2839 = vmatpush.msra.mxu0 0.0
    %2840 = vmatpush.msra.mxu0 0.0
    %2841 = vmatpush.msra.mxu0 0.0
    %2842 = vmatpush.msra.mxu0 0.0
    %2843 = vmatpush.msra.mxu0 0.0
    %2844 = vmatpush.msra.mxu0 0.0
    %2845 = vmatpush.msra.mxu0 0.0
    %2846 = vmatpush.msra.mxu0 0.0
    %2847 = vmatpush.msra.mxu0 0.0
    %2848 = vmatpush.msra.mxu0 0.0
    %2849 = vmatpush.msra.mxu0 0.0
    %2850 = vmatpush.msra.mxu0 0.0
    %2851 = vmatpush.msra.mxu0 %v548
    %2852 = vmatpush.msra.mxu0 %v547
    %2853 = vmatmul.f32.gmra.mxu0 %v2503
    %v2854 = vpop.f32.mrf.mxu0
    %v2855 = vadd.f32 0.0, %v2854
    %2856 = vdwg.mxu0
    %v2858 = vsel %vm228, %v2835, 0
    %v2861 = vsel %vm228, %v2836, 0
    %v2864 = vsel %vm235, %v2855, 0
    %2866 = vmatpush.msra.mxu0 0.0
    %2867 = vmatpush.msra.mxu0 0.0
    %2868 = vmatpush.msra.mxu0 0.0
    %2869 = vmatpush.msra.mxu0 0.0
    %2870 = vmatpush.msra.mxu0 0.0
    %2871 = vmatpush.msra.mxu0 0.0
    %2872 = vmatpush.msra.mxu0 0.0
    %2873 = vmatpush.msra.mxu0 0.0
    %2874 = vmatpush.msra.mxu0 0.0
    %2875 = vmatpush.msra.mxu0 0.0
    %2876 = vmatpush.msra.mxu0 0.0
    %2877 = vmatpush.msra.mxu0 0.0
    %2878 = vmatpush.msra.mxu0 0.0
    %2879 = vmatpush.msra.mxu0 0.0
    %2880 = vmatpush.msra.mxu0 0.0
    %2881 = vmatpush.msra.mxu0 %v2864
    %2882 = vmatmul.f32.gmra.mxu0 %v2858
    %v2883 = vpop.f32.mrf.mxu0
    %v2884 = vadd.f32 0.0, %v2883
    %2885 = vmatmul.f32.gmra.mxu0 %v2861
    %v2886 = vpop.f32.mrf.mxu0
    %v2887 = vadd.f32 0.0, %v2886
    %2888 = vdwg.mxu0
    %v2889 = vadd.f32 %v2833, %v2884
    %v2890 = vadd.f32 %v2834, %v2887
    %v2891 = vld [vmem:[%s11] sm:$0xff]
    %v2892 = vld [vmem:[%s11 + $0x8] sm:$0xff]
    %2894 = vset.pattern.permute.xlu0 0
    %2895 = vperm.xlu0 %2894, %v2891
    %v2896 = vpop.permute.xlu0 %2895
    %2899 = vset.pattern.permute.xlu0 0
    %2900 = vperm.xlu0 %2899, %v2892
    %v2901 = vpop.permute.xlu0 %2900
    %v2903 = vadd.f32 %v2889, %v2896
    %v2904 = vadd.f32 %v2890, %v2901
    %vm2905 = vcmp.gt.f32.partialorder %v2903, 0.0
    %vm2906 = vcmp.gt.f32.partialorder %v2904, 0.0
    %v2907 = vmul.f32 %v2903, 0.2
    %v2908 = vmul.f32 %v2904, 0.2
    %v2909 = vsel %vm2905, %v2903, %v2907
    %v2910 = vsel %vm2906, %v2904, %v2908
    %v2911 = vld [vmem:[%s13] sm:$0xff]
    %v2912 = vld [vmem:[%s13 + $0x8] sm:$0xff]
    %v2913 = vld [vmem:[%s13 + $0x10] sm:$0xff]
    %v2914 = vld [vmem:[%s13 + $0x18] sm:$0xff]
    %v2916 = vsel %vm630, %v2909, 0
    %v2919 = vsel %vm630, %v2910, 0
    %2921 = vmatpush.msra.mxu0 0.0
    %2922 = vmatpush.msra.mxu0 0.0
    %2923 = vmatpush.msra.mxu0 0.0
    %2924 = vmatpush.msra.mxu0 0.0
    %2925 = vmatpush.msra.mxu0 0.0
    %2926 = vmatpush.msra.mxu0 0.0
    %2927 = vmatpush.msra.mxu0 0.0
    %2928 = vmatpush.msra.mxu0 0.0
    %2929 = vmatpush.msra.mxu0 0.0
    %2930 = vmatpush.msra.mxu0 0.0
    %2931 = vmatpush.msra.mxu0 0.0
    %2932 = vmatpush.msra.mxu0 0.0
    %2933 = vmatpush.msra.mxu0 0.0
    %2934 = vmatpush.msra.mxu0 0.0
    %2935 = vmatpush.msra.mxu0 0.0
    %2936 = vmatpush.msra.mxu0 %v629
    %2937 = vmatmul.f32.gmra.mxu0 %v2916
    %v2938 = vpop.f32.mrf.mxu0
    %v2939 = vadd.f32 0.0, %v2938
    %2940 = vmatmul.f32.gmra.mxu0 %v2919
    %v2941 = vpop.f32.mrf.mxu0
    %v2942 = vadd.f32 0.0, %v2941
    %2943 = vdwg.mxu0
    %v2944 = vld [vmem:[%s660] sm:$0xff]
    %v2945 = vld [vmem:[%s660 + $0x8] sm:$0xff]
    %v2946 = vld [vmem:[%s660 + $0x10] sm:$0xff]
    %v2947 = vld [vmem:[%s660 + $0x18] sm:$0xff]
    %v2949 = vsel %vm176, %v2944, 0
    %v2952 = vsel %vm176, %v2945, 0
    %v2955 = vsel %vm176, %v2946, 0
    %v2958 = vsel %vm176, %v2947, 0
    %2960 = vmatpush.msra.mxu0 0.0
    %2961 = vmatpush.msra.mxu0 0.0
    %2962 = vmatpush.msra.mxu0 0.0
    %2963 = vmatpush.msra.mxu0 0.0
    %2964 = vmatpush.msra.mxu0 0.0
    %2965 = vmatpush.msra.mxu0 0.0
    %2966 = vmatpush.msra.mxu0 0.0
    %2967 = vmatpush.msra.mxu0 0.0
    %2968 = vmatpush.msra.mxu0 0.0
    %2969 = vmatpush.msra.mxu0 0.0
    %2970 = vmatpush.msra.mxu0 0.0
    %2971 = vmatpush.msra.mxu0 0.0
    %2972 = vmatpush.msra.mxu0 0.0
    %2973 = vmatpush.msra.mxu0 0.0
    %2974 = vmatpush.msra.mxu0 %v2910
    %2975 = vmatpush.msra.mxu0 %v2909
    %2976 = vmatmul.f32.gmra.mxu0 %v2949
    %v2977 = vpop.f32.mrf.mxu0
    %v2978 = vadd.f32 0.0, %v2977
    %2979 = vmatmul.f32.gmra.mxu0 %v2952
    %v2980 = vpop.f32.mrf.mxu0
    %v2981 = vadd.f32 0.0, %v2980
    %2982 = vmatmul.f32.gmra.mxu0 %v2955
    %v2983 = vpop.f32.mrf.mxu0
    %v2984 = vadd.f32 0.0, %v2983
    %2985 = vmatmul.f32.gmra.mxu0 %v2958
    %v2986 = vpop.f32.mrf.mxu0
    %v2987 = vadd.f32 0.0, %v2986
    %2988 = vdwg.mxu0
    %v2990 = vsel %vm176, %v2911, 0
    %v2993 = vsel %vm176, %v2912, 0
    %v2996 = vsel %vm176, %v2913, 0
    %v2999 = vsel %vm176, %v2914, 0
    %3001 = vmatpush.msra.mxu0 0.0
    %3002 = vmatpush.msra.mxu0 0.0
    %3003 = vmatpush.msra.mxu0 0.0
    %3004 = vmatpush.msra.mxu0 0.0
    %3005 = vmatpush.msra.mxu0 0.0
    %3006 = vmatpush.msra.mxu0 0.0
    %3007 = vmatpush.msra.mxu0 0.0
    %3008 = vmatpush.msra.mxu0 0.0
    %3009 = vmatpush.msra.mxu0 0.0
    %3010 = vmatpush.msra.mxu0 0.0
    %3011 = vmatpush.msra.mxu0 0.0
    %3012 = vmatpush.msra.mxu0 0.0
    %3013 = vmatpush.msra.mxu0 0.0
    %3014 = vmatpush.msra.mxu0 0.0
    %3015 = vmatpush.msra.mxu0 %v2942
    %3016 = vmatpush.msra.mxu0 %v2939
    %3017 = vmatmul.f32.gmra.mxu0 %v2990
    %v3018 = vpop.f32.mrf.mxu0
    %v3019 = vadd.f32 %v2978, %v3018
    %3020 = vmatmul.f32.gmra.mxu0 %v2993
    %v3021 = vpop.f32.mrf.mxu0
    %v3022 = vadd.f32 %v2981, %v3021
    %3023 = vmatmul.f32.gmra.mxu0 %v2996
    %v3024 = vpop.f32.mrf.mxu0
    %v3025 = vadd.f32 %v2984, %v3024
    %3026 = vmatmul.f32.gmra.mxu0 %v2999
    %v3027 = vpop.f32.mrf.mxu0
    %v3028 = vadd.f32 %v2987, %v3027
    %3029 = vdwg.mxu0
    %v3030 = vld [vmem:[%s747] sm:$0xff]
    %v3031 = vld [vmem:[%s747 + $0x8] sm:$0xff]
    %v3032 = vld [vmem:[%s747 + $0x10] sm:$0xff]
    %v3033 = vld [vmem:[%s747 + $0x18] sm:$0xff]
    %3034 = vmatpush.msra.mxu0 0.0
    %3035 = vmatpush.msra.mxu0 0.0
    %3036 = vmatpush.msra.mxu0 0.0
    %3037 = vmatpush.msra.mxu0 0.0
    %3038 = vmatpush.msra.mxu0 0.0
    %3039 = vmatpush.msra.mxu0 0.0
    %3040 = vmatpush.msra.mxu0 0.0
    %3041 = vmatpush.msra.mxu0 0.0
    %3042 = vmatpush.msra.mxu0 0.0
    %3043 = vmatpush.msra.mxu0 0.0
    %3044 = vmatpush.msra.mxu0 0.0
    %3045 = vmatpush.msra.mxu0 0.0
    %3046 = vmatpush.msra.mxu0 0.0
    %3047 = vmatpush.msra.mxu0 0.0
    %3048 = vmatpush.msra.mxu0 0.0
    %3049 = vmatpush.msra.mxu0 %v754
    %3050 = vmatmul.f32.gmra.mxu0 %v2916
    %v3051 = vpop.f32.mrf.mxu0
    %v3052 = vadd.f32 0.0, %v3051
    %3053 = vmatmul.f32.gmra.mxu0 %v2919
    %v3054 = vpop.f32.mrf.mxu0
    %v3055 = vadd.f32 0.0, %v3054
    %3056 = vdwg.mxu0
    %v3058 = vsel %vm176, %v3030, 0
    %v3061 = vsel %vm176, %v3031, 0
    %v3064 = vsel %vm176, %v3032, 0
    %v3067 = vsel %vm176, %v3033, 0
    %3069 = vmatpush.msra.mxu0 0.0
    %3070 = vmatpush.msra.mxu0 0.0
    %3071 = vmatpush.msra.mxu0 0.0
    %3072 = vmatpush.msra.mxu0 0.0
    %3073 = vmatpush.msra.mxu0 0.0
    %3074 = vmatpush.msra.mxu0 0.0
    %3075 = vmatpush.msra.mxu0 0.0
    %3076 = vmatpush.msra.mxu0 0.0
    %3077 = vmatpush.msra.mxu0 0.0
    %3078 = vmatpush.msra.mxu0 0.0
    %3079 = vmatpush.msra.mxu0 0.0
    %3080 = vmatpush.msra.mxu0 0.0
    %3081 = vmatpush.msra.mxu0 0.0
    %3082 = vmatpush.msra.mxu0 0.0
    %3083 = vmatpush.msra.mxu0 %v3055
    %3084 = vmatpush.msra.mxu0 %v3052
    %3085 = vmatmul.f32.gmra.mxu0 %v3058
    %v3086 = vpop.f32.mrf.mxu0
    %v3087 = vadd.f32 0.0, %v3086
    %3088 = vmatmul.f32.gmra.mxu0 %v3061
    %v3089 = vpop.f32.mrf.mxu0
    %v3090 = vadd.f32 0.0, %v3089
    %3091 = vmatmul.f32.gmra.mxu0 %v3064
    %v3092 = vpop.f32.mrf.mxu0
    %v3093 = vadd.f32 0.0, %v3092
    %3094 = vmatmul.f32.gmra.mxu0 %v3067
    %v3095 = vpop.f32.mrf.mxu0
    %v3096 = vadd.f32 0.0, %v3095
    %3097 = vdwg.mxu0
    %v3098 = vadd.f32 %v3019, %v3087
    %v3099 = vadd.f32 %v3022, %v3090
    %v3100 = vadd.f32 %v3025, %v3093
    %v3101 = vadd.f32 %v3028, %v3096
    %v3102 = vld [vmem:[%s15] sm:$0xff]
    %v3103 = vld [vmem:[%s15 + $0x8] sm:$0xff]
    %v3104 = vld [vmem:[%s15 + $0x10] sm:$0xff]
    %v3105 = vld [vmem:[%s15 + $0x18] sm:$0xff]
    %3107 = vset.pattern.permute.xlu0 0
    %3108 = vperm.xlu0 %3107, %v3102
    %v3109 = vpop.permute.xlu0 %3108
    %3112 = vset.pattern.permute.xlu0 0
    %3113 = vperm.xlu0 %3112, %v3103
    %v3114 = vpop.permute.xlu0 %3113
    %3117 = vset.pattern.permute.xlu0 0
    %3118 = vperm.xlu0 %3117, %v3104
    %v3119 = vpop.permute.xlu0 %3118
    %3122 = vset.pattern.permute.xlu0 0
    %3123 = vperm.xlu0 %3122, %v3105
    %v3124 = vpop.permute.xlu0 %3123
    %v3126 = vadd.f32 %v3098, %v3109
    %v3127 = vadd.f32 %v3099, %v3114
    %v3128 = vadd.f32 %v3100, %v3119
    %v3129 = vadd.f32 %v3101, %v3124
    %vm3130 = vcmp.gt.f32.partialorder %v3126, 0.0
    %vm3131 = vcmp.gt.f32.partialorder %v3127, 0.0
    %vm3132 = vcmp.gt.f32.partialorder %v3128, 0.0
    %vm3133 = vcmp.gt.f32.partialorder %v3129, 0.0
    %v3134 = vmul.f32 %v3126, 0.2
    %v3135 = vmul.f32 %v3127, 0.2
    %v3136 = vmul.f32 %v3128, 0.2
    %v3137 = vmul.f32 %v3129, 0.2
    %v3138 = vsel %vm3130, %v3126, %v3134
    %v3139 = vsel %vm3131, %v3127, %v3135
    %v3140 = vsel %vm3132, %v3128, %v3136
    %v3141 = vsel %vm3133, %v3129, %v3137
    %v3142 = vld [vmem:[%s17] sm:$0xff]
    %v3143 = vld [vmem:[%s17 + $0x8] sm:$0xff]
    %v3144 = vld [vmem:[%s17 + $0x10] sm:$0xff]
    %v3145 = vld [vmem:[%s17 + $0x18] sm:$0xff]
    %v3146 = vld [vmem:[%s19] sm:$0xff]
    %v3147 = vld [vmem:[%s19 + $0x8] sm:$0xff]
    %v3148 = vld [vmem:[%s19 + $0x10] sm:$0xff]
    %v3149 = vld [vmem:[%s19 + $0x18] sm:$0xff]
    %3151 = vset.pattern.permute.xlu0 0
    %3152 = vperm.xlu0 %3151, %v3146
    %v3153 = vpop.permute.xlu0 %3152
    %3156 = vset.pattern.permute.xlu0 0
    %3157 = vperm.xlu0 %3156, %v3147
    %v3158 = vpop.permute.xlu0 %3157
    %3161 = vset.pattern.permute.xlu0 0
    %3162 = vperm.xlu0 %3161, %v3148
    %v3163 = vpop.permute.xlu0 %3162
    %3166 = vset.pattern.permute.xlu0 0
    %3167 = vperm.xlu0 %3166, %v3149
    %v3168 = vpop.permute.xlu0 %3167
    %v3171 = vsel %vm176, %v3142, 0
    %v3174 = vsel %vm176, %v3143, 0
    %v3177 = vsel %vm176, %v3144, 0
    %v3180 = vsel %vm176, %v3145, 0
    %3182 = vmatpush.msra.mxu0 0.0
    %3183 = vmatpush.msra.mxu0 0.0
    %3184 = vmatpush.msra.mxu0 0.0
    %3185 = vmatpush.msra.mxu0 0.0
    %3186 = vmatpush.msra.mxu0 0.0
    %3187 = vmatpush.msra.mxu0 0.0
    %3188 = vmatpush.msra.mxu0 0.0
    %3189 = vmatpush.msra.mxu0 0.0
    %3190 = vmatpush.msra.mxu0 0.0
    %3191 = vmatpush.msra.mxu0 0.0
    %3192 = vmatpush.msra.mxu0 0.0
    %3193 = vmatpush.msra.mxu0 0.0
    %3194 = vmatpush.msra.mxu0 0.0
    %3195 = vmatpush.msra.mxu0 0.0
    %3196 = vmatpush.msra.mxu0 %v2910
    %3197 = vmatpush.msra.mxu0 %v2909
    %3198 = vmatmul.f32.gmra.mxu0 %v3171
    %v3199 = vpop.f32.mrf.mxu0
    %v3200 = vadd.f32 %v3153, %v3199
    %3201 = vmatmul.f32.gmra.mxu0 %v3174
    %v3202 = vpop.f32.mrf.mxu0
    %v3203 = vadd.f32 %v3158, %v3202
    %3204 = vmatmul.f32.gmra.mxu0 %v3177
    %v3205 = vpop.f32.mrf.mxu0
    %v3206 = vadd.f32 %v3163, %v3205
    %3207 = vmatmul.f32.gmra.mxu0 %v3180
    %v3208 = vpop.f32.mrf.mxu0
    %v3209 = vadd.f32 %v3168, %v3208
    %3210 = vdwg.mxu0
    %v3211 = vadd.f32 %v3138, %v3200
    %v3212 = vadd.f32 %v3139, %v3203
    %v3213 = vadd.f32 %v3140, %v3206
    %v3214 = vadd.f32 %v3141, %v3209
    %v3215 = vld [vmem:[%s21] sm:$0xff]
    %v3216 = vld [vmem:[%s21 + $0x8] sm:$0xff]
    %v3217 = vld [vmem:[%s21 + $0x10] sm:$0xff]
    %v3218 = vld [vmem:[%s21 + $0x18] sm:$0xff]
    %v3219 = vld [vmem:[%s21 + $0x20] sm:$0xff]
    %v3220 = vld [vmem:[%s21 + $0x28] sm:$0xff]
    %v3221 = vld [vmem:[%s21 + $0x30] sm:$0xff]
    %v3222 = vld [vmem:[%s21 + $0x38] sm:$0xff]
    %v3224 = vsel %vm630, %v3211, 0
    %v3227 = vsel %vm630, %v3212, 0
    %v3230 = vsel %vm630, %v3213, 0
    %v3233 = vsel %vm630, %v3214, 0
    %3235 = vmatpush.msra.mxu0 0.0
    %3236 = vmatpush.msra.mxu0 0.0
    %3237 = vmatpush.msra.mxu0 0.0
    %3238 = vmatpush.msra.mxu0 0.0
    %3239 = vmatpush.msra.mxu0 0.0
    %3240 = vmatpush.msra.mxu0 0.0
    %3241 = vmatpush.msra.mxu0 0.0
    %3242 = vmatpush.msra.mxu0 0.0
    %3243 = vmatpush.msra.mxu0 0.0
    %3244 = vmatpush.msra.mxu0 0.0
    %3245 = vmatpush.msra.mxu0 0.0
    %3246 = vmatpush.msra.mxu0 0.0
    %3247 = vmatpush.msra.mxu0 0.0
    %3248 = vmatpush.msra.mxu0 0.0
    %3249 = vmatpush.msra.mxu0 0.0
    %3250 = vmatpush.msra.mxu0 %v629
    %3251 = vmatmul.f32.gmra.mxu0 %v3224
    %v3252 = vpop.f32.mrf.mxu0
    %v3253 = vadd.f32 0.0, %v3252
    %3254 = vmatmul.f32.gmra.mxu0 %v3227
    %v3255 = vpop.f32.mrf.mxu0
    %v3256 = vadd.f32 0.0, %v3255
    %3257 = vmatmul.f32.gmra.mxu0 %v3230
    %v3258 = vpop.f32.mrf.mxu0
    %v3259 = vadd.f32 0.0, %v3258
    %3260 = vmatmul.f32.gmra.mxu0 %v3233
    %v3261 = vpop.f32.mrf.mxu0
    %v3262 = vadd.f32 0.0, %v3261
    %3263 = vdwg.mxu0
    %v3264 = vld [vmem:[%s985] sm:$0xff]
    %v3265 = vld [vmem:[%s985 + $0x8] sm:$0xff]
    %v3266 = vld [vmem:[%s985 + $0x10] sm:$0xff]
    %v3267 = vld [vmem:[%s985 + $0x18] sm:$0xff]
    %v3268 = vld [vmem:[%s985 + $0x20] sm:$0xff]
    %v3269 = vld [vmem:[%s985 + $0x28] sm:$0xff]
    %v3270 = vld [vmem:[%s985 + $0x30] sm:$0xff]
    %v3271 = vld [vmem:[%s985 + $0x38] sm:$0xff]
    %3272 = vmatpush.msra.mxu0 0.0
    %3273 = vmatpush.msra.mxu0 0.0
    %3274 = vmatpush.msra.mxu0 0.0
    %3275 = vmatpush.msra.mxu0 0.0
    %3276 = vmatpush.msra.mxu0 0.0
    %3277 = vmatpush.msra.mxu0 0.0
    %3278 = vmatpush.msra.mxu0 0.0
    %3279 = vmatpush.msra.mxu0 0.0
    %3280 = vmatpush.msra.mxu0 0.0
    %3281 = vmatpush.msra.mxu0 0.0
    %3282 = vmatpush.msra.mxu0 0.0
    %3283 = vmatpush.msra.mxu0 0.0
    %3284 = vmatpush.msra.mxu0 0.0
    %3285 = vmatpush.msra.mxu0 0.0
    %3286 = vmatpush.msra.mxu0 0.0
    %3287 = vmatpush.msra.mxu0 %v754
    %3288 = vmatmul.f32.gmra.mxu0 %v3224
    %v3289 = vpop.f32.mrf.mxu0
    %v3290 = vadd.f32 0.0, %v3289
    %3291 = vmatmul.f32.gmra.mxu0 %v3227
    %v3292 = vpop.f32.mrf.mxu0
    %v3293 = vadd.f32 0.0, %v3292
    %3294 = vmatmul.f32.gmra.mxu0 %v3230
    %v3295 = vpop.f32.mrf.mxu0
    %v3296 = vadd.f32 0.0, %v3295
    %3297 = vmatmul.f32.gmra.mxu0 %v3233
    %v3298 = vpop.f32.mrf.mxu0
    %v3299 = vadd.f32 0.0, %v3298
    %3300 = vdwg.mxu0
    %v3302 = vsel %vm1023, %v3264, 0
    %v3305 = vsel %vm1023, %v3265, 0
    %v3308 = vsel %vm1023, %v3266, 0
    %v3311 = vsel %vm1023, %v3267, 0
    %v3314 = vsel %vm1023, %v3268, 0
    %v3317 = vsel %vm1023, %v3269, 0
    %v3320 = vsel %vm1023, %v3270, 0
    %v3323 = vsel %vm1023, %v3271, 0
    %3325 = vmatpush.msra.mxu0 0.0
    %3326 = vmatpush.msra.mxu0 0.0
    %3327 = vmatpush.msra.mxu0 0.0
    %3328 = vmatpush.msra.mxu0 0.0
    %3329 = vmatpush.msra.mxu0 0.0
    %3330 = vmatpush.msra.mxu0 0.0
    %3331 = vmatpush.msra.mxu0 0.0
    %3332 = vmatpush.msra.mxu0 0.0
    %3333 = vmatpush.msra.mxu0 0.0
    %3334 = vmatpush.msra.mxu0 0.0
    %3335 = vmatpush.msra.mxu0 0.0
    %3336 = vmatpush.msra.mxu0 0.0
    %3337 = vmatpush.msra.mxu0 %v3299
    %3338 = vmatpush.msra.mxu0 %v3296
    %3339 = vmatpush.msra.mxu0 %v3293
    %3340 = vmatpush.msra.mxu0 %v3290
    %3341 = vmatmul.f32.gmra.mxu0 %v3302
    %v3342 = vpop.f32.mrf.mxu0
    %v3343 = vadd.f32 0.0, %v3342
    %3344 = vmatmul.f32.gmra.mxu0 %v3305
    %v3345 = vpop.f32.mrf.mxu0
    %v3346 = vadd.f32 0.0, %v3345
    %3347 = vmatmul.f32.gmra.mxu0 %v3308
    %v3348 = vpop.f32.mrf.mxu0
    %v3349 = vadd.f32 0.0, %v3348
    %3350 = vmatmul.f32.gmra.mxu0 %v3311
    %v3351 = vpop.f32.mrf.mxu0
    %v3352 = vadd.f32 0.0, %v3351
    %3353 = vmatmul.f32.gmra.mxu0 %v3314
    %v3354 = vpop.f32.mrf.mxu0
    %v3355 = vadd.f32 0.0, %v3354
    %3356 = vmatmul.f32.gmra.mxu0 %v3317
    %v3357 = vpop.f32.mrf.mxu0
    %v3358 = vadd.f32 0.0, %v3357
    %3359 = vmatmul.f32.gmra.mxu0 %v3320
    %v3360 = vpop.f32.mrf.mxu0
    %v3361 = vadd.f32 0.0, %v3360
    %3362 = vmatmul.f32.gmra.mxu0 %v3323
    %v3363 = vpop.f32.mrf.mxu0
    %v3364 = vadd.f32 0.0, %v3363
    %3365 = vdwg.mxu0
    %v3367 = vsel %vm1023, %v3215, 0
    %v3370 = vsel %vm1023, %v3216, 0
    %v3373 = vsel %vm1023, %v3217, 0
    %v3376 = vsel %vm1023, %v3218, 0
    %v3379 = vsel %vm1023, %v3219, 0
    %v3382 = vsel %vm1023, %v3220, 0
    %v3385 = vsel %vm1023, %v3221, 0
    %v3388 = vsel %vm1023, %v3222, 0
    %3390 = vmatpush.msra.mxu0 0.0
    %3391 = vmatpush.msra.mxu0 0.0
    %3392 = vmatpush.msra.mxu0 0.0
    %3393 = vmatpush.msra.mxu0 0.0
    %3394 = vmatpush.msra.mxu0 0.0
    %3395 = vmatpush.msra.mxu0 0.0
    %3396 = vmatpush.msra.mxu0 0.0
    %3397 = vmatpush.msra.mxu0 0.0
    %3398 = vmatpush.msra.mxu0 0.0
    %3399 = vmatpush.msra.mxu0 0.0
    %3400 = vmatpush.msra.mxu0 0.0
    %3401 = vmatpush.msra.mxu0 0.0
    %3402 = vmatpush.msra.mxu0 %v3262
    %3403 = vmatpush.msra.mxu0 %v3259
    %3404 = vmatpush.msra.mxu0 %v3256
    %3405 = vmatpush.msra.mxu0 %v3253
    %3406 = vmatmul.f32.gmra.mxu0 %v3367
    %v3407 = vpop.f32.mrf.mxu0
    %v3408 = vadd.f32 %v3343, %v3407
    %3409 = vmatmul.f32.gmra.mxu0 %v3370
    %v3410 = vpop.f32.mrf.mxu0
    %v3411 = vadd.f32 %v3346, %v3410
    %3412 = vmatmul.f32.gmra.mxu0 %v3373
    %v3413 = vpop.f32.mrf.mxu0
    %v3414 = vadd.f32 %v3349, %v3413
    %3415 = vmatmul.f32.gmra.mxu0 %v3376
    %v3416 = vpop.f32.mrf.mxu0
    %v3417 = vadd.f32 %v3352, %v3416
    %3418 = vmatmul.f32.gmra.mxu0 %v3379
    %v3419 = vpop.f32.mrf.mxu0
    %v3420 = vadd.f32 %v3355, %v3419
    %3421 = vmatmul.f32.gmra.mxu0 %v3382
    %v3422 = vpop.f32.mrf.mxu0
    %v3423 = vadd.f32 %v3358, %v3422
    %3424 = vmatmul.f32.gmra.mxu0 %v3385
    %v3425 = vpop.f32.mrf.mxu0
    %v3426 = vadd.f32 %v3361, %v3425
    %3427 = vmatmul.f32.gmra.mxu0 %v3388
    %v3428 = vpop.f32.mrf.mxu0
    %v3429 = vadd.f32 %v3364, %v3428
    %3430 = vdwg.mxu0
    %v3431 = vld [vmem:[%s1154] sm:$0xff]
    %v3432 = vld [vmem:[%s1154 + $0x8] sm:$0xff]
    %v3433 = vld [vmem:[%s1154 + $0x10] sm:$0xff]
    %v3434 = vld [vmem:[%s1154 + $0x18] sm:$0xff]
    %v3435 = vld [vmem:[%s1154 + $0x20] sm:$0xff]
    %v3436 = vld [vmem:[%s1154 + $0x28] sm:$0xff]
    %v3437 = vld [vmem:[%s1154 + $0x30] sm:$0xff]
    %v3438 = vld [vmem:[%s1154 + $0x38] sm:$0xff]
    %3439 = vmatpush.msra.mxu0 0.0
    %3440 = vmatpush.msra.mxu0 0.0
    %3441 = vmatpush.msra.mxu0 0.0
    %3442 = vmatpush.msra.mxu0 0.0
    %3443 = vmatpush.msra.mxu0 0.0
    %3444 = vmatpush.msra.mxu0 0.0
    %3445 = vmatpush.msra.mxu0 0.0
    %3446 = vmatpush.msra.mxu0 0.0
    %3447 = vmatpush.msra.mxu0 0.0
    %3448 = vmatpush.msra.mxu0 0.0
    %3449 = vmatpush.msra.mxu0 0.0
    %3450 = vmatpush.msra.mxu0 0.0
    %3451 = vmatpush.msra.mxu0 0.0
    %3452 = vmatpush.msra.mxu0 0.0
    %3453 = vmatpush.msra.mxu0 0.0
    %3454 = vmatpush.msra.mxu0 %v1165
    %3455 = vmatmul.f32.gmra.mxu0 %v3224
    %v3456 = vpop.f32.mrf.mxu0
    %v3457 = vadd.f32 0.0, %v3456
    %3458 = vmatmul.f32.gmra.mxu0 %v3227
    %v3459 = vpop.f32.mrf.mxu0
    %v3460 = vadd.f32 0.0, %v3459
    %3461 = vmatmul.f32.gmra.mxu0 %v3230
    %v3462 = vpop.f32.mrf.mxu0
    %v3463 = vadd.f32 0.0, %v3462
    %3464 = vmatmul.f32.gmra.mxu0 %v3233
    %v3465 = vpop.f32.mrf.mxu0
    %v3466 = vadd.f32 0.0, %v3465
    %3467 = vdwg.mxu0
    %v3469 = vsel %vm1023, %v3431, 0
    %v3472 = vsel %vm1023, %v3432, 0
    %v3475 = vsel %vm1023, %v3433, 0
    %v3478 = vsel %vm1023, %v3434, 0
    %v3481 = vsel %vm1023, %v3435, 0
    %v3484 = vsel %vm1023, %v3436, 0
    %v3487 = vsel %vm1023, %v3437, 0
    %v3490 = vsel %vm1023, %v3438, 0
    %3492 = vmatpush.msra.mxu0 0.0
    %3493 = vmatpush.msra.mxu0 0.0
    %3494 = vmatpush.msra.mxu0 0.0
    %3495 = vmatpush.msra.mxu0 0.0
    %3496 = vmatpush.msra.mxu0 0.0
    %3497 = vmatpush.msra.mxu0 0.0
    %3498 = vmatpush.msra.mxu0 0.0
    %3499 = vmatpush.msra.mxu0 0.0
    %3500 = vmatpush.msra.mxu0 0.0
    %3501 = vmatpush.msra.mxu0 0.0
    %3502 = vmatpush.msra.mxu0 0.0
    %3503 = vmatpush.msra.mxu0 0.0
    %3504 = vmatpush.msra.mxu0 %v3466
    %3505 = vmatpush.msra.mxu0 %v3463
    %3506 = vmatpush.msra.mxu0 %v3460
    %3507 = vmatpush.msra.mxu0 %v3457
    %3508 = vmatmul.f32.gmra.mxu0 %v3469
    %v3509 = vpop.f32.mrf.mxu0
    %v3510 = vadd.f32 0.0, %v3509
    %3511 = vmatmul.f32.gmra.mxu0 %v3472
    %v3512 = vpop.f32.mrf.mxu0
    %v3513 = vadd.f32 0.0, %v3512
    %3514 = vmatmul.f32.gmra.mxu0 %v3475
    %v3515 = vpop.f32.mrf.mxu0
    %v3516 = vadd.f32 0.0, %v3515
    %3517 = vmatmul.f32.gmra.mxu0 %v3478
    %v3518 = vpop.f32.mrf.mxu0
    %v3519 = vadd.f32 0.0, %v3518
    %3520 = vmatmul.f32.gmra.mxu0 %v3481
    %v3521 = vpop.f32.mrf.mxu0
    %v3522 = vadd.f32 0.0, %v3521
    %3523 = vmatmul.f32.gmra.mxu0 %v3484
    %v3524 = vpop.f32.mrf.mxu0
    %v3525 = vadd.f32 0.0, %v3524
    %3526 = vmatmul.f32.gmra.mxu0 %v3487
    %v3527 = vpop.f32.mrf.mxu0
    %v3528 = vadd.f32 0.0, %v3527
    %3529 = vmatmul.f32.gmra.mxu0 %v3490
    %v3530 = vpop.f32.mrf.mxu0
    %v3531 = vadd.f32 0.0, %v3530
    %3532 = vdwg.mxu0
    %v3533 = vadd.f32 %v3408, %v3510
    %v3534 = vadd.f32 %v3411, %v3513
    %v3535 = vadd.f32 %v3414, %v3516
    %v3536 = vadd.f32 %v3417, %v3519
    %v3537 = vadd.f32 %v3420, %v3522
    %v3538 = vadd.f32 %v3423, %v3525
    %v3539 = vadd.f32 %v3426, %v3528
    %v3540 = vadd.f32 %v3429, %v3531
    %v3541 = vld [vmem:[%s23] sm:$0xff]
    %v3542 = vld [vmem:[%s23 + $0x8] sm:$0xff]
    %v3543 = vld [vmem:[%s23 + $0x10] sm:$0xff]
    %v3544 = vld [vmem:[%s23 + $0x18] sm:$0xff]
    %v3545 = vld [vmem:[%s23 + $0x20] sm:$0xff]
    %v3546 = vld [vmem:[%s23 + $0x28] sm:$0xff]
    %v3547 = vld [vmem:[%s23 + $0x30] sm:$0xff]
    %v3548 = vld [vmem:[%s23 + $0x38] sm:$0xff]
    %3550 = vset.pattern.permute.xlu0 0
    %3551 = vperm.xlu0 %3550, %v3541
    %v3552 = vpop.permute.xlu0 %3551
    %3555 = vset.pattern.permute.xlu0 0
    %3556 = vperm.xlu0 %3555, %v3542
    %v3557 = vpop.permute.xlu0 %3556
    %3560 = vset.pattern.permute.xlu0 0
    %3561 = vperm.xlu0 %3560, %v3543
    %v3562 = vpop.permute.xlu0 %3561
    %3565 = vset.pattern.permute.xlu0 0
    %3566 = vperm.xlu0 %3565, %v3544
    %v3567 = vpop.permute.xlu0 %3566
    %3570 = vset.pattern.permute.xlu0 0
    %3571 = vperm.xlu0 %3570, %v3545
    %v3572 = vpop.permute.xlu0 %3571
    %3575 = vset.pattern.permute.xlu0 0
    %3576 = vperm.xlu0 %3575, %v3546
    %v3577 = vpop.permute.xlu0 %3576
    %3580 = vset.pattern.permute.xlu0 0
    %3581 = vperm.xlu0 %3580, %v3547
    %v3582 = vpop.permute.xlu0 %3581
    %3585 = vset.pattern.permute.xlu0 0
    %3586 = vperm.xlu0 %3585, %v3548
    %v3587 = vpop.permute.xlu0 %3586
    %v3589 = vadd.f32 %v3533, %v3552
    %v3590 = vadd.f32 %v3534, %v3557
    %v3591 = vadd.f32 %v3535, %v3562
    %v3592 = vadd.f32 %v3536, %v3567
    %v3593 = vadd.f32 %v3537, %v3572
    %v3594 = vadd.f32 %v3538, %v3577
    %v3595 = vadd.f32 %v3539, %v3582
    %v3596 = vadd.f32 %v3540, %v3587
    %vm3597 = vcmp.gt.f32.partialorder %v3589, 0.0
    %vm3598 = vcmp.gt.f32.partialorder %v3590, 0.0
    %vm3599 = vcmp.gt.f32.partialorder %v3591, 0.0
    %vm3600 = vcmp.gt.f32.partialorder %v3592, 0.0
    %vm3601 = vcmp.gt.f32.partialorder %v3593, 0.0
    %vm3602 = vcmp.gt.f32.partialorder %v3594, 0.0
    %vm3603 = vcmp.gt.f32.partialorder %v3595, 0.0
    %vm3604 = vcmp.gt.f32.partialorder %v3596, 0.0
    %v3605 = vmul.f32 %v3589, 0.2
    %v3606 = vmul.f32 %v3590, 0.2
    %v3607 = vmul.f32 %v3591, 0.2
    %v3608 = vmul.f32 %v3592, 0.2
    %v3609 = vmul.f32 %v3593, 0.2
    %v3610 = vmul.f32 %v3594, 0.2
    %v3611 = vmul.f32 %v3595, 0.2
    %v3612 = vmul.f32 %v3596, 0.2
    %v3613 = vsel %vm3597, %v3589, %v3605
    %v3614 = vsel %vm3598, %v3590, %v3606
    %v3615 = vsel %vm3599, %v3591, %v3607
    %v3616 = vsel %vm3600, %v3592, %v3608
    %v3617 = vsel %vm3601, %v3593, %v3609
    %v3618 = vsel %vm3602, %v3594, %v3610
    %v3619 = vsel %vm3603, %v3595, %v3611
    %v3620 = vsel %vm3604, %v3596, %v3612
    %v3621 = vld [vmem:[%s25] sm:$0xff]
    %v3622 = vld [vmem:[%s25 + $0x8] sm:$0xff]
    %v3623 = vld [vmem:[%s25 + $0x10] sm:$0xff]
    %v3624 = vld [vmem:[%s25 + $0x18] sm:$0xff]
    %v3626 = vsel %vm1352, %v3613, 0
    %v3629 = vsel %vm1352, %v3614, 0
    %v3632 = vsel %vm1352, %v3615, 0
    %v3635 = vsel %vm1352, %v3616, 0
    %v3638 = vsel %vm1352, %v3617, 0
    %v3641 = vsel %vm1352, %v3618, 0
    %v3644 = vsel %vm1352, %v3619, 0
    %v3647 = vsel %vm1352, %v3620, 0
    %3649 = vmatpush.msra.mxu0 0.0
    %3650 = vmatpush.msra.mxu0 0.0
    %3651 = vmatpush.msra.mxu0 0.0
    %3652 = vmatpush.msra.mxu0 0.0
    %3653 = vmatpush.msra.mxu0 0.0
    %3654 = vmatpush.msra.mxu0 0.0
    %3655 = vmatpush.msra.mxu0 0.0
    %3656 = vmatpush.msra.mxu0 0.0
    %3657 = vmatpush.msra.mxu0 0.0
    %3658 = vmatpush.msra.mxu0 0.0
    %3659 = vmatpush.msra.mxu0 0.0
    %3660 = vmatpush.msra.mxu0 0.0
    %3661 = vmatpush.msra.mxu0 0.0
    %3662 = vmatpush.msra.mxu0 0.0
    %3663 = vmatpush.msra.mxu0 0.0
    %3664 = vmatpush.msra.mxu0 %v1379
    %3665 = vmatmul.f32.gmra.mxu0 %v3626
    %v3666 = vpop.f32.mrf.mxu0
    %v3667 = vadd.f32 0.0, %v3666
    %3668 = vmatmul.f32.gmra.mxu0 %v3629
    %v3669 = vpop.f32.mrf.mxu0
    %v3670 = vadd.f32 0.0, %v3669
    %3671 = vmatmul.f32.gmra.mxu0 %v3632
    %v3672 = vpop.f32.mrf.mxu0
    %v3673 = vadd.f32 0.0, %v3672
    %3674 = vmatmul.f32.gmra.mxu0 %v3635
    %v3675 = vpop.f32.mrf.mxu0
    %v3676 = vadd.f32 0.0, %v3675
    %3677 = vmatmul.f32.gmra.mxu0 %v3638
    %v3678 = vpop.f32.mrf.mxu0
    %v3679 = vadd.f32 0.0, %v3678
    %3680 = vmatmul.f32.gmra.mxu0 %v3641
    %v3681 = vpop.f32.mrf.mxu0
    %v3682 = vadd.f32 0.0, %v3681
    %3683 = vmatmul.f32.gmra.mxu0 %v3644
    %v3684 = vpop.f32.mrf.mxu0
    %v3685 = vadd.f32 0.0, %v3684
    %3686 = vmatmul.f32.gmra.mxu0 %v3647
    %v3687 = vpop.f32.mrf.mxu0
    %v3688 = vadd.f32 0.0, %v3687
    %3689 = vdwg.mxu0
    %v3690 = vld [vmem:[%s1422] sm:$0xff]
    %v3691 = vld [vmem:[%s1422 + $0x8] sm:$0xff]
    %v3692 = vld [vmem:[%s1422 + $0x10] sm:$0xff]
    %v3693 = vld [vmem:[%s1422 + $0x18] sm:$0xff]
    %v3695 = vsel %vm1427, %v3690, 0
    %v3698 = vsel %vm1427, %v3691, 0
    %v3701 = vsel %vm1427, %v3692, 0
    %v3704 = vsel %vm1427, %v3693, 0
    %3706 = vmatpush.msra.mxu0 0.0
    %3707 = vmatpush.msra.mxu0 0.0
    %3708 = vmatpush.msra.mxu0 0.0
    %3709 = vmatpush.msra.mxu0 0.0
    %3710 = vmatpush.msra.mxu0 0.0
    %3711 = vmatpush.msra.mxu0 0.0
    %3712 = vmatpush.msra.mxu0 0.0
    %3713 = vmatpush.msra.mxu0 0.0
    %3714 = vmatpush.msra.mxu0 %v3620
    %3715 = vmatpush.msra.mxu0 %v3619
    %3716 = vmatpush.msra.mxu0 %v3618
    %3717 = vmatpush.msra.mxu0 %v3617
    %3718 = vmatpush.msra.mxu0 %v3616
    %3719 = vmatpush.msra.mxu0 %v3615
    %3720 = vmatpush.msra.mxu0 %v3614
    %3721 = vmatpush.msra.mxu0 %v3613
    %3722 = vmatmul.f32.gmra.mxu0 %v3695
    %v3723 = vpop.f32.mrf.mxu0
    %v3724 = vadd.f32 0.0, %v3723
    %3725 = vmatmul.f32.gmra.mxu0 %v3698
    %v3726 = vpop.f32.mrf.mxu0
    %v3727 = vadd.f32 0.0, %v3726
    %3728 = vmatmul.f32.gmra.mxu0 %v3701
    %v3729 = vpop.f32.mrf.mxu0
    %v3730 = vadd.f32 0.0, %v3729
    %3731 = vmatmul.f32.gmra.mxu0 %v3704
    %v3732 = vpop.f32.mrf.mxu0
    %v3733 = vadd.f32 0.0, %v3732
    %3734 = vdwg.mxu0
    %v3736 = vsel %vm1427, %v3621, 0
    %v3739 = vsel %vm1427, %v3622, 0
    %v3742 = vsel %vm1427, %v3623, 0
    %v3745 = vsel %vm1427, %v3624, 0
    %3747 = vmatpush.msra.mxu0 0.0
    %3748 = vmatpush.msra.mxu0 0.0
    %3749 = vmatpush.msra.mxu0 0.0
    %3750 = vmatpush.msra.mxu0 0.0
    %3751 = vmatpush.msra.mxu0 0.0
    %3752 = vmatpush.msra.mxu0 0.0
    %3753 = vmatpush.msra.mxu0 0.0
    %3754 = vmatpush.msra.mxu0 0.0
    %3755 = vmatpush.msra.mxu0 %v3688
    %3756 = vmatpush.msra.mxu0 %v3685
    %3757 = vmatpush.msra.mxu0 %v3682
    %3758 = vmatpush.msra.mxu0 %v3679
    %3759 = vmatpush.msra.mxu0 %v3676
    %3760 = vmatpush.msra.mxu0 %v3673
    %3761 = vmatpush.msra.mxu0 %v3670
    %3762 = vmatpush.msra.mxu0 %v3667
    %3763 = vmatmul.f32.gmra.mxu0 %v3736
    %v3764 = vpop.f32.mrf.mxu0
    %v3765 = vadd.f32 %v3724, %v3764
    %3766 = vmatmul.f32.gmra.mxu0 %v3739
    %v3767 = vpop.f32.mrf.mxu0
    %v3768 = vadd.f32 %v3727, %v3767
    %3769 = vmatmul.f32.gmra.mxu0 %v3742
    %v3770 = vpop.f32.mrf.mxu0
    %v3771 = vadd.f32 %v3730, %v3770
    %3772 = vmatmul.f32.gmra.mxu0 %v3745
    %v3773 = vpop.f32.mrf.mxu0
    %v3774 = vadd.f32 %v3733, %v3773
    %3775 = vdwg.mxu0
    %v3776 = vld [vmem:[%s1510] sm:$0xff]
    %v3777 = vld [vmem:[%s1510 + $0x8] sm:$0xff]
    %v3778 = vld [vmem:[%s1510 + $0x10] sm:$0xff]
    %v3779 = vld [vmem:[%s1510 + $0x18] sm:$0xff]
    %3780 = vmatpush.msra.mxu0 0.0
    %3781 = vmatpush.msra.mxu0 0.0
    %3782 = vmatpush.msra.mxu0 0.0
    %3783 = vmatpush.msra.mxu0 0.0
    %3784 = vmatpush.msra.mxu0 0.0
    %3785 = vmatpush.msra.mxu0 0.0
    %3786 = vmatpush.msra.mxu0 0.0
    %3787 = vmatpush.msra.mxu0 0.0
    %3788 = vmatpush.msra.mxu0 0.0
    %3789 = vmatpush.msra.mxu0 0.0
    %3790 = vmatpush.msra.mxu0 0.0
    %3791 = vmatpush.msra.mxu0 0.0
    %3792 = vmatpush.msra.mxu0 0.0
    %3793 = vmatpush.msra.mxu0 0.0
    %3794 = vmatpush.msra.mxu0 0.0
    %3795 = vmatpush.msra.mxu0 %v1516
    %3796 = vmatmul.f32.gmra.mxu0 %v3626
    %v3797 = vpop.f32.mrf.mxu0
    %v3798 = vadd.f32 0.0, %v3797
    %3799 = vmatmul.f32.gmra.mxu0 %v3629
    %v3800 = vpop.f32.mrf.mxu0
    %v3801 = vadd.f32 0.0, %v3800
    %3802 = vmatmul.f32.gmra.mxu0 %v3632
    %v3803 = vpop.f32.mrf.mxu0
    %v3804 = vadd.f32 0.0, %v3803
    %3805 = vmatmul.f32.gmra.mxu0 %v3635
    %v3806 = vpop.f32.mrf.mxu0
    %v3807 = vadd.f32 0.0, %v3806
    %3808 = vmatmul.f32.gmra.mxu0 %v3638
    %v3809 = vpop.f32.mrf.mxu0
    %v3810 = vadd.f32 0.0, %v3809
    %3811 = vmatmul.f32.gmra.mxu0 %v3641
    %v3812 = vpop.f32.mrf.mxu0
    %v3813 = vadd.f32 0.0, %v3812
    %3814 = vmatmul.f32.gmra.mxu0 %v3644
    %v3815 = vpop.f32.mrf.mxu0
    %v3816 = vadd.f32 0.0, %v3815
    %3817 = vmatmul.f32.gmra.mxu0 %v3647
    %v3818 = vpop.f32.mrf.mxu0
    %v3819 = vadd.f32 0.0, %v3818
    %3820 = vdwg.mxu0
    %v3822 = vsel %vm1427, %v3776, 0
    %v3825 = vsel %vm1427, %v3777, 0
    %v3828 = vsel %vm1427, %v3778, 0
    %v3831 = vsel %vm1427, %v3779, 0
    %3833 = vmatpush.msra.mxu0 0.0
    %3834 = vmatpush.msra.mxu0 0.0
    %3835 = vmatpush.msra.mxu0 0.0
    %3836 = vmatpush.msra.mxu0 0.0
    %3837 = vmatpush.msra.mxu0 0.0
    %3838 = vmatpush.msra.mxu0 0.0
    %3839 = vmatpush.msra.mxu0 0.0
    %3840 = vmatpush.msra.mxu0 0.0
    %3841 = vmatpush.msra.mxu0 %v3819
    %3842 = vmatpush.msra.mxu0 %v3816
    %3843 = vmatpush.msra.mxu0 %v3813
    %3844 = vmatpush.msra.mxu0 %v3810
    %3845 = vmatpush.msra.mxu0 %v3807
    %3846 = vmatpush.msra.mxu0 %v3804
    %3847 = vmatpush.msra.mxu0 %v3801
    %3848 = vmatpush.msra.mxu0 %v3798
    %3849 = vmatmul.f32.gmra.mxu0 %v3822
    %v3850 = vpop.f32.mrf.mxu0
    %v3851 = vadd.f32 0.0, %v3850
    %3852 = vmatmul.f32.gmra.mxu0 %v3825
    %v3853 = vpop.f32.mrf.mxu0
    %v3854 = vadd.f32 0.0, %v3853
    %3855 = vmatmul.f32.gmra.mxu0 %v3828
    %v3856 = vpop.f32.mrf.mxu0
    %v3857 = vadd.f32 0.0, %v3856
    %3858 = vmatmul.f32.gmra.mxu0 %v3831
    %v3859 = vpop.f32.mrf.mxu0
    %v3860 = vadd.f32 0.0, %v3859
    %3861 = vdwg.mxu0
    %v3862 = vadd.f32 %v3765, %v3851
    %v3863 = vadd.f32 %v3768, %v3854
    %v3864 = vadd.f32 %v3771, %v3857
    %v3865 = vadd.f32 %v3774, %v3860
    %v3866 = vld [vmem:[%s27] sm:$0xff]
    %v3867 = vld [vmem:[%s27 + $0x8] sm:$0xff]
    %v3868 = vld [vmem:[%s27 + $0x10] sm:$0xff]
    %v3869 = vld [vmem:[%s27 + $0x18] sm:$0xff]
    %3871 = vset.pattern.permute.xlu0 0
    %3872 = vperm.xlu0 %3871, %v3866
    %v3873 = vpop.permute.xlu0 %3872
    %3876 = vset.pattern.permute.xlu0 0
    %3877 = vperm.xlu0 %3876, %v3867
    %v3878 = vpop.permute.xlu0 %3877
    %3881 = vset.pattern.permute.xlu0 0
    %3882 = vperm.xlu0 %3881, %v3868
    %v3883 = vpop.permute.xlu0 %3882
    %3886 = vset.pattern.permute.xlu0 0
    %3887 = vperm.xlu0 %3886, %v3869
    %v3888 = vpop.permute.xlu0 %3887
    %v3890 = vadd.f32 %v3862, %v3873
    %v3891 = vadd.f32 %v3863, %v3878
    %v3892 = vadd.f32 %v3864, %v3883
    %v3893 = vadd.f32 %v3865, %v3888
    %vm3894 = vcmp.gt.f32.partialorder %v3890, 0.0
    %vm3895 = vcmp.gt.f32.partialorder %v3891, 0.0
    %vm3896 = vcmp.gt.f32.partialorder %v3892, 0.0
    %vm3897 = vcmp.gt.f32.partialorder %v3893, 0.0
    %v3898 = vmul.f32 %v3890, 0.2
    %v3899 = vmul.f32 %v3891, 0.2
    %v3900 = vmul.f32 %v3892, 0.2
    %v3901 = vmul.f32 %v3893, 0.2
    %v3902 = vsel %vm3894, %v3890, %v3898
    %v3903 = vsel %vm3895, %v3891, %v3899
    %v3904 = vsel %vm3896, %v3892, %v3900
    %v3905 = vsel %vm3897, %v3893, %v3901
    %v3906 = vld [vmem:[%s29] sm:$0xff]
    %v3907 = vld [vmem:[%s29 + $0x8] sm:$0xff]
    %v3908 = vld [vmem:[%s29 + $0x10] sm:$0xff]
    %v3909 = vld [vmem:[%s29 + $0x18] sm:$0xff]
    %v3910 = vld [vmem:[%s31] sm:$0xff]
    %v3911 = vld [vmem:[%s31 + $0x8] sm:$0xff]
    %v3912 = vld [vmem:[%s31 + $0x10] sm:$0xff]
    %v3913 = vld [vmem:[%s31 + $0x18] sm:$0xff]
    %3915 = vset.pattern.permute.xlu0 0
    %3916 = vperm.xlu0 %3915, %v3910
    %v3917 = vpop.permute.xlu0 %3916
    %3920 = vset.pattern.permute.xlu0 0
    %3921 = vperm.xlu0 %3920, %v3911
    %v3922 = vpop.permute.xlu0 %3921
    %3925 = vset.pattern.permute.xlu0 0
    %3926 = vperm.xlu0 %3925, %v3912
    %v3927 = vpop.permute.xlu0 %3926
    %3930 = vset.pattern.permute.xlu0 0
    %3931 = vperm.xlu0 %3930, %v3913
    %v3932 = vpop.permute.xlu0 %3931
    %v3935 = vsel %vm1427, %v3906, 0
    %v3938 = vsel %vm1427, %v3907, 0
    %v3941 = vsel %vm1427, %v3908, 0
    %v3944 = vsel %vm1427, %v3909, 0
    %3946 = vmatpush.msra.mxu0 0.0
    %3947 = vmatpush.msra.mxu0 0.0
    %3948 = vmatpush.msra.mxu0 0.0
    %3949 = vmatpush.msra.mxu0 0.0
    %3950 = vmatpush.msra.mxu0 0.0
    %3951 = vmatpush.msra.mxu0 0.0
    %3952 = vmatpush.msra.mxu0 0.0
    %3953 = vmatpush.msra.mxu0 0.0
    %3954 = vmatpush.msra.mxu0 %v3620
    %3955 = vmatpush.msra.mxu0 %v3619
    %3956 = vmatpush.msra.mxu0 %v3618
    %3957 = vmatpush.msra.mxu0 %v3617
    %3958 = vmatpush.msra.mxu0 %v3616
    %3959 = vmatpush.msra.mxu0 %v3615
    %3960 = vmatpush.msra.mxu0 %v3614
    %3961 = vmatpush.msra.mxu0 %v3613
    %3962 = vmatmul.f32.gmra.mxu0 %v3935
    %v3963 = vpop.f32.mrf.mxu0
    %v3964 = vadd.f32 %v3917, %v3963
    %3965 = vmatmul.f32.gmra.mxu0 %v3938
    %v3966 = vpop.f32.mrf.mxu0
    %v3967 = vadd.f32 %v3922, %v3966
    %3968 = vmatmul.f32.gmra.mxu0 %v3941
    %v3969 = vpop.f32.mrf.mxu0
    %v3970 = vadd.f32 %v3927, %v3969
    %3971 = vmatmul.f32.gmra.mxu0 %v3944
    %v3972 = vpop.f32.mrf.mxu0
    %v3973 = vadd.f32 %v3932, %v3972
    %3974 = vdwg.mxu0
    %v3975 = vadd.f32 %v3902, %v3964
    %v3976 = vadd.f32 %v3903, %v3967
    %v3977 = vadd.f32 %v3904, %v3970
    %v3978 = vadd.f32 %v3905, %v3973
    %v3979 = vld [vmem:[%s33] sm:$0xff]
    %v3980 = vld [vmem:[%s33 + $0x8] sm:$0xff]
    %v3982 = vsel %vm1352, %v3975, 0
    %v3985 = vsel %vm1352, %v3976, 0
    %v3988 = vsel %vm1352, %v3977, 0
    %v3991 = vsel %vm1352, %v3978, 0
    %3993 = vmatpush.msra.mxu0 0.0
    %3994 = vmatpush.msra.mxu0 0.0
    %3995 = vmatpush.msra.mxu0 0.0
    %3996 = vmatpush.msra.mxu0 0.0
    %3997 = vmatpush.msra.mxu0 0.0
    %3998 = vmatpush.msra.mxu0 0.0
    %3999 = vmatpush.msra.mxu0 0.0
    %4000 = vmatpush.msra.mxu0 0.0
    %4001 = vmatpush.msra.mxu0 0.0
    %4002 = vmatpush.msra.mxu0 0.0
    %4003 = vmatpush.msra.mxu0 0.0
    %4004 = vmatpush.msra.mxu0 0.0
    %4005 = vmatpush.msra.mxu0 0.0
    %4006 = vmatpush.msra.mxu0 0.0
    %4007 = vmatpush.msra.mxu0 0.0
    %4008 = vmatpush.msra.mxu0 %v1379
    %4009 = vmatmul.f32.gmra.mxu0 %v3982
    %v4010 = vpop.f32.mrf.mxu0
    %v4011 = vadd.f32 0.0, %v4010
    %4012 = vmatmul.f32.gmra.mxu0 %v3985
    %v4013 = vpop.f32.mrf.mxu0
    %v4014 = vadd.f32 0.0, %v4013
    %4015 = vmatmul.f32.gmra.mxu0 %v3988
    %v4016 = vpop.f32.mrf.mxu0
    %v4017 = vadd.f32 0.0, %v4016
    %4018 = vmatmul.f32.gmra.mxu0 %v3991
    %v4019 = vpop.f32.mrf.mxu0
    %v4020 = vadd.f32 0.0, %v4019
    %4021 = vdwg.mxu0
    %v4022 = vld [vmem:[%s1760] sm:$0xff]
    %v4023 = vld [vmem:[%s1760 + $0x8] sm:$0xff]
    %v4025 = vsel %vm1023, %v4022, 0
    %v4028 = vsel %vm1023, %v4023, 0
    %4030 = vmatpush.msra.mxu0 0.0
    %4031 = vmatpush.msra.mxu0 0.0
    %4032 = vmatpush.msra.mxu0 0.0
    %4033 = vmatpush.msra.mxu0 0.0
    %4034 = vmatpush.msra.mxu0 0.0
    %4035 = vmatpush.msra.mxu0 0.0
    %4036 = vmatpush.msra.mxu0 0.0
    %4037 = vmatpush.msra.mxu0 0.0
    %4038 = vmatpush.msra.mxu0 0.0
    %4039 = vmatpush.msra.mxu0 0.0
    %4040 = vmatpush.msra.mxu0 0.0
    %4041 = vmatpush.msra.mxu0 0.0
    %4042 = vmatpush.msra.mxu0 %v3978
    %4043 = vmatpush.msra.mxu0 %v3977
    %4044 = vmatpush.msra.mxu0 %v3976
    %4045 = vmatpush.msra.mxu0 %v3975
    %4046 = vmatmul.f32.gmra.mxu0 %v4025
    %v4047 = vpop.f32.mrf.mxu0
    %v4048 = vadd.f32 0.0, %v4047
    %4049 = vmatmul.f32.gmra.mxu0 %v4028
    %v4050 = vpop.f32.mrf.mxu0
    %v4051 = vadd.f32 0.0, %v4050
    %4052 = vdwg.mxu0
    %v4054 = vsel %vm1023, %v3979, 0
    %v4057 = vsel %vm1023, %v3980, 0
    %4059 = vmatpush.msra.mxu0 0.0
    %4060 = vmatpush.msra.mxu0 0.0
    %4061 = vmatpush.msra.mxu0 0.0
    %4062 = vmatpush.msra.mxu0 0.0
    %4063 = vmatpush.msra.mxu0 0.0
    %4064 = vmatpush.msra.mxu0 0.0
    %4065 = vmatpush.msra.mxu0 0.0
    %4066 = vmatpush.msra.mxu0 0.0
    %4067 = vmatpush.msra.mxu0 0.0
    %4068 = vmatpush.msra.mxu0 0.0
    %4069 = vmatpush.msra.mxu0 0.0
    %4070 = vmatpush.msra.mxu0 0.0
    %4071 = vmatpush.msra.mxu0 %v4020
    %4072 = vmatpush.msra.mxu0 %v4017
    %4073 = vmatpush.msra.mxu0 %v4014
    %4074 = vmatpush.msra.mxu0 %v4011
    %4075 = vmatmul.f32.gmra.mxu0 %v4054
    %v4076 = vpop.f32.mrf.mxu0
    %v4077 = vadd.f32 %v4048, %v4076
    %4078 = vmatmul.f32.gmra.mxu0 %v4057
    %v4079 = vpop.f32.mrf.mxu0
    %v4080 = vadd.f32 %v4051, %v4079
    %4081 = vdwg.mxu0
    %v4082 = vld [vmem:[%s1821] sm:$0xff]
    %v4083 = vld [vmem:[%s1821 + $0x8] sm:$0xff]
    %4084 = vmatpush.msra.mxu0 0.0
    %4085 = vmatpush.msra.mxu0 0.0
    %4086 = vmatpush.msra.mxu0 0.0
    %4087 = vmatpush.msra.mxu0 0.0
    %4088 = vmatpush.msra.mxu0 0.0
    %4089 = vmatpush.msra.mxu0 0.0
    %4090 = vmatpush.msra.mxu0 0.0
    %4091 = vmatpush.msra.mxu0 0.0
    %4092 = vmatpush.msra.mxu0 0.0
    %4093 = vmatpush.msra.mxu0 0.0
    %4094 = vmatpush.msra.mxu0 0.0
    %4095 = vmatpush.msra.mxu0 0.0
    %4096 = vmatpush.msra.mxu0 0.0
    %4097 = vmatpush.msra.mxu0 0.0
    %4098 = vmatpush.msra.mxu0 0.0
    %4099 = vmatpush.msra.mxu0 %v1516
    %4100 = vmatmul.f32.gmra.mxu0 %v3982
    %v4101 = vpop.f32.mrf.mxu0
    %v4102 = vadd.f32 0.0, %v4101
    %4103 = vmatmul.f32.gmra.mxu0 %v3985
    %v4104 = vpop.f32.mrf.mxu0
    %v4105 = vadd.f32 0.0, %v4104
    %4106 = vmatmul.f32.gmra.mxu0 %v3988
    %v4107 = vpop.f32.mrf.mxu0
    %v4108 = vadd.f32 0.0, %v4107
    %4109 = vmatmul.f32.gmra.mxu0 %v3991
    %v4110 = vpop.f32.mrf.mxu0
    %v4111 = vadd.f32 0.0, %v4110
    %4112 = vdwg.mxu0
    %v4114 = vsel %vm1023, %v4082, 0
    %v4117 = vsel %vm1023, %v4083, 0
    %4119 = vmatpush.msra.mxu0 0.0
    %4120 = vmatpush.msra.mxu0 0.0
    %4121 = vmatpush.msra.mxu0 0.0
    %4122 = vmatpush.msra.mxu0 0.0
    %4123 = vmatpush.msra.mxu0 0.0
    %4124 = vmatpush.msra.mxu0 0.0
    %4125 = vmatpush.msra.mxu0 0.0
    %4126 = vmatpush.msra.mxu0 0.0
    %4127 = vmatpush.msra.mxu0 0.0
    %4128 = vmatpush.msra.mxu0 0.0
    %4129 = vmatpush.msra.mxu0 0.0
    %4130 = vmatpush.msra.mxu0 0.0
    %4131 = vmatpush.msra.mxu0 %v4111
    %4132 = vmatpush.msra.mxu0 %v4108
    %4133 = vmatpush.msra.mxu0 %v4105
    %4134 = vmatpush.msra.mxu0 %v4102
    %4135 = vmatmul.f32.gmra.mxu0 %v4114
    %v4136 = vpop.f32.mrf.mxu0
    %v4137 = vadd.f32 0.0, %v4136
    %4138 = vmatmul.f32.gmra.mxu0 %v4117
    %v4139 = vpop.f32.mrf.mxu0
    %v4140 = vadd.f32 0.0, %v4139
    %4141 = vdwg.mxu0
    %v4142 = vadd.f32 %v4077, %v4137
    %v4143 = vadd.f32 %v4080, %v4140
    %v4144 = vld [vmem:[%s35] sm:$0xff]
    %v4145 = vld [vmem:[%s35 + $0x8] sm:$0xff]
    %4147 = vset.pattern.permute.xlu0 0
    %4148 = vperm.xlu0 %4147, %v4144
    %v4149 = vpop.permute.xlu0 %4148
    %4152 = vset.pattern.permute.xlu0 0
    %4153 = vperm.xlu0 %4152, %v4145
    %v4154 = vpop.permute.xlu0 %4153
    %v4156 = vadd.f32 %v4142, %v4149
    %v4157 = vadd.f32 %v4143, %v4154
    %vm4158 = vcmp.gt.f32.partialorder %v4156, 0.0
    %vm4159 = vcmp.gt.f32.partialorder %v4157, 0.0
    %v4160 = vmul.f32 %v4156, 0.2
    %v4161 = vmul.f32 %v4157, 0.2
    %v4162 = vsel %vm4158, %v4156, %v4160
    %v4163 = vsel %vm4159, %v4157, %v4161
    %v4164 = vld [vmem:[%s37] sm:$0xff]
    %v4166 = vsel %vm1352, %v4162, 0
    %v4169 = vsel %vm1352, %v4163, 0
    %4171 = vmatpush.msra.mxu0 0.0
    %4172 = vmatpush.msra.mxu0 0.0
    %4173 = vmatpush.msra.mxu0 0.0
    %4174 = vmatpush.msra.mxu0 0.0
    %4175 = vmatpush.msra.mxu0 0.0
    %4176 = vmatpush.msra.mxu0 0.0
    %4177 = vmatpush.msra.mxu0 0.0
    %4178 = vmatpush.msra.mxu0 0.0
    %4179 = vmatpush.msra.mxu0 0.0
    %4180 = vmatpush.msra.mxu0 0.0
    %4181 = vmatpush.msra.mxu0 0.0
    %4182 = vmatpush.msra.mxu0 0.0
    %4183 = vmatpush.msra.mxu0 0.0
    %4184 = vmatpush.msra.mxu0 0.0
    %4185 = vmatpush.msra.mxu0 0.0
    %4186 = vmatpush.msra.mxu0 %v1379
    %4187 = vmatmul.f32.gmra.mxu0 %v4166
    %v4188 = vpop.f32.mrf.mxu0
    %v4189 = vadd.f32 0.0, %v4188
    %4190 = vmatmul.f32.gmra.mxu0 %v4169
    %v4191 = vpop.f32.mrf.mxu0
    %v4192 = vadd.f32 0.0, %v4191
    %4193 = vdwg.mxu0
    %v4194 = vld [vmem:[%s1934] sm:$0xff]
    %v4196 = vsel %vm176, %v4194, 0
    %4198 = vmatpush.msra.mxu0 0.0
    %4199 = vmatpush.msra.mxu0 0.0
    %4200 = vmatpush.msra.mxu0 0.0
    %4201 = vmatpush.msra.mxu0 0.0
    %4202 = vmatpush.msra.mxu0 0.0
    %4203 = vmatpush.msra.mxu0 0.0
    %4204 = vmatpush.msra.mxu0 0.0
    %4205 = vmatpush.msra.mxu0 0.0
    %4206 = vmatpush.msra.mxu0 0.0
    %4207 = vmatpush.msra.mxu0 0.0
    %4208 = vmatpush.msra.mxu0 0.0
    %4209 = vmatpush.msra.mxu0 0.0
    %4210 = vmatpush.msra.mxu0 0.0
    %4211 = vmatpush.msra.mxu0 0.0
    %4212 = vmatpush.msra.mxu0 %v4163
    %4213 = vmatpush.msra.mxu0 %v4162
    %4214 = vmatmul.f32.gmra.mxu0 %v4196
    %v4215 = vpop.f32.mrf.mxu0
    %v4216 = vadd.f32 0.0, %v4215
    %4217 = vdwg.mxu0
    %v4219 = vsel %vm176, %v4164, 0
    %4221 = vmatpush.msra.mxu0 0.0
    %4222 = vmatpush.msra.mxu0 0.0
    %4223 = vmatpush.msra.mxu0 0.0
    %4224 = vmatpush.msra.mxu0 0.0
    %4225 = vmatpush.msra.mxu0 0.0
    %4226 = vmatpush.msra.mxu0 0.0
    %4227 = vmatpush.msra.mxu0 0.0
    %4228 = vmatpush.msra.mxu0 0.0
    %4229 = vmatpush.msra.mxu0 0.0
    %4230 = vmatpush.msra.mxu0 0.0
    %4231 = vmatpush.msra.mxu0 0.0
    %4232 = vmatpush.msra.mxu0 0.0
    %4233 = vmatpush.msra.mxu0 0.0
    %4234 = vmatpush.msra.mxu0 0.0
    %4235 = vmatpush.msra.mxu0 %v4192
    %4236 = vmatpush.msra.mxu0 %v4189
    %4237 = vmatmul.f32.gmra.mxu0 %v4219
    %v4238 = vpop.f32.mrf.mxu0
    %v4239 = vadd.f32 %v4216, %v4238
    %4240 = vdwg.mxu0
    %v4241 = vld [vmem:[%s1982] sm:$0xff]
    %4242 = vmatpush.msra.mxu0 0.0
    %4243 = vmatpush.msra.mxu0 0.0
    %4244 = vmatpush.msra.mxu0 0.0
    %4245 = vmatpush.msra.mxu0 0.0
    %4246 = vmatpush.msra.mxu0 0.0
    %4247 = vmatpush.msra.mxu0 0.0
    %4248 = vmatpush.msra.mxu0 0.0
    %4249 = vmatpush.msra.mxu0 0.0
    %4250 = vmatpush.msra.mxu0 0.0
    %4251 = vmatpush.msra.mxu0 0.0
    %4252 = vmatpush.msra.mxu0 0.0
    %4253 = vmatpush.msra.mxu0 0.0
    %4254 = vmatpush.msra.mxu0 0.0
    %4255 = vmatpush.msra.mxu0 0.0
    %4256 = vmatpush.msra.mxu0 0.0
    %4257 = vmatpush.msra.mxu0 %v1516
    %4258 = vmatmul.f32.gmra.mxu0 %v4166
    %v4259 = vpop.f32.mrf.mxu0
    %v4260 = vadd.f32 0.0, %v4259
    %4261 = vmatmul.f32.gmra.mxu0 %v4169
    %v4262 = vpop.f32.mrf.mxu0
    %v4263 = vadd.f32 0.0, %v4262
    %4264 = vdwg.mxu0
    %v4266 = vsel %vm176, %v4241, 0
    %4268 = vmatpush.msra.mxu0 0.0
    %4269 = vmatpush.msra.mxu0 0.0
    %4270 = vmatpush.msra.mxu0 0.0
    %4271 = vmatpush.msra.mxu0 0.0
    %4272 = vmatpush.msra.mxu0 0.0
    %4273 = vmatpush.msra.mxu0 0.0
    %4274 = vmatpush.msra.mxu0 0.0
    %4275 = vmatpush.msra.mxu0 0.0
    %4276 = vmatpush.msra.mxu0 0.0
    %4277 = vmatpush.msra.mxu0 0.0
    %4278 = vmatpush.msra.mxu0 0.0
    %4279 = vmatpush.msra.mxu0 0.0
    %4280 = vmatpush.msra.mxu0 0.0
    %4281 = vmatpush.msra.mxu0 0.0
    %4282 = vmatpush.msra.mxu0 %v4263
    %4283 = vmatpush.msra.mxu0 %v4260
    %4284 = vmatmul.f32.gmra.mxu0 %v4266
    %v4285 = vpop.f32.mrf.mxu0
    %v4286 = vadd.f32 0.0, %v4285
    %4287 = vdwg.mxu0
    %v4288 = vadd.f32 %v4239, %v4286
    %v4289 = vld [vmem:[%s39] sm:$0xff]
    %4291 = vset.pattern.permute.xlu0 0
    %4292 = vperm.xlu0 %4291, %v4289
    %v4293 = vpop.permute.xlu0 %4292
    %v4295 = vadd.f32 %v4288, %v4293
    %vm4296 = vcmp.gt.f32.partialorder %v4295, 0.0
    %v4297 = vmul.f32 %v4295, 0.2
    %v4298 = vsel %vm4296, %v4295, %v4297
    %v4299 = vld [vmem:[%s41] sm:$0x1]
    %v4301 = vsel %vm630, %v4299, 0
    %4303 = vmatpush.msra.mxu0 0.0
    %4304 = vmatpush.msra.mxu0 0.0
    %4305 = vmatpush.msra.mxu0 0.0
    %4306 = vmatpush.msra.mxu0 0.0
    %4307 = vmatpush.msra.mxu0 0.0
    %4308 = vmatpush.msra.mxu0 0.0
    %4309 = vmatpush.msra.mxu0 0.0
    %4310 = vmatpush.msra.mxu0 0.0
    %4311 = vmatpush.msra.mxu0 0.0
    %4312 = vmatpush.msra.mxu0 0.0
    %4313 = vmatpush.msra.mxu0 0.0
    %4314 = vmatpush.msra.mxu0 0.0
    %4315 = vmatpush.msra.mxu0 0.0
    %4316 = vmatpush.msra.mxu0 0.0
    %4317 = vmatpush.msra.mxu0 0.0
    %4318 = vmatpush.msra.mxu0 %v4298
    %4319 = vmatmul.f32.gmra.mxu0 %v4301
    %v4320 = vpop.f32.mrf.mxu0
    %v4321 = vadd.f32 %v2042, %v4320
    %4322 = vdwg.mxu0
    %v4323 = vld [vmem:[%s43] sm:$0x1]
    %v4325 = vsel %vm630, %v4323, 0
    %4327 = vmatpush.msra.mxu0 0.0
    %4328 = vmatpush.msra.mxu0 0.0
    %4329 = vmatpush.msra.mxu0 0.0
    %4330 = vmatpush.msra.mxu0 0.0
    %4331 = vmatpush.msra.mxu0 0.0
    %4332 = vmatpush.msra.mxu0 0.0
    %4333 = vmatpush.msra.mxu0 0.0
    %4334 = vmatpush.msra.mxu0 0.0
    %4335 = vmatpush.msra.mxu0 0.0
    %4336 = vmatpush.msra.mxu0 0.0
    %4337 = vmatpush.msra.mxu0 0.0
    %4338 = vmatpush.msra.mxu0 0.0
    %4339 = vmatpush.msra.mxu0 0.0
    %4340 = vmatpush.msra.mxu0 0.0
    %4341 = vmatpush.msra.mxu0 0.0
    %4342 = vmatpush.msra.mxu0 %v4298
    %4343 = vmatmul.f32.gmra.mxu0 %v4325
    %v4344 = vpop.f32.mrf.mxu0
    %v4345 = vadd.f32 %v2067, %v4344
    %4346 = vdwg.mxu0
    %v4347 = vld [vmem:[%s45] sm:$0xff]
    %v4348 = vld [vmem:[%s47] sm:$0xff]
    %4350 = vset.pattern.permute.xlu0 0
    %4351 = vperm.xlu0 %4350, %v4348
    %v4352 = vpop.permute.xlu0 %4351
    %v4355 = vsel %vm630, %v4347, 0
    %4357 = vmatpush.msra.mxu0 0.0
    %4358 = vmatpush.msra.mxu0 0.0
    %4359 = vmatpush.msra.mxu0 0.0
    %4360 = vmatpush.msra.mxu0 0.0
    %4361 = vmatpush.msra.mxu0 0.0
    %4362 = vmatpush.msra.mxu0 0.0
    %4363 = vmatpush.msra.mxu0 0.0
    %4364 = vmatpush.msra.mxu0 0.0
    %4365 = vmatpush.msra.mxu0 0.0
    %4366 = vmatpush.msra.mxu0 0.0
    %4367 = vmatpush.msra.mxu0 0.0
    %4368 = vmatpush.msra.mxu0 0.0
    %4369 = vmatpush.msra.mxu0 0.0
    %4370 = vmatpush.msra.mxu0 0.0
    %4371 = vmatpush.msra.mxu0 0.0
    %4372 = vmatpush.msra.mxu0 %v4298
    %4373 = vmatmul.f32.gmra.mxu0 %v4355
    %v4374 = vpop.f32.mrf.mxu0
    %v4375 = vadd.f32 %v4352, %v4374
    %4376 = vdwg.mxu0
    %4377 = vxpose.xlu0.b32.start [1/16] %v4321, 128
    %4378 = vxpose.xlu0.b32.cont [2/16] 0.0, 128
    %4379 = vxpose.xlu0.b32.cont [3/16] 0.0, 128
    %4380 = vxpose.xlu0.b32.cont [4/16] 0.0, 128
    %4381 = vxpose.xlu0.b32.cont [5/16] 0.0, 128
    %4382 = vxpose.xlu0.b32.cont [6/16] 0.0, 128
    %4383 = vxpose.xlu0.b32.cont [7/16] 0.0, 128
    %4384 = vxpose.xlu0.b32.cont [8/16] 0.0, 128
    %4385 = vxpose.xlu0.b32.cont [9/16] 0.0, 128
    %4386 = vxpose.xlu0.b32.cont [10/16] 0.0, 128
    %4387 = vxpose.xlu0.b32.cont [11/16] 0.0, 128
    %4388 = vxpose.xlu0.b32.cont [12/16] 0.0, 128
    %4389 = vxpose.xlu0.b32.cont [13/16] 0.0, 128
    %4390 = vxpose.xlu0.b32.cont [14/16] 0.0, 128
    %4391 = vxpose.xlu0.b32.cont [15/16] 0.0, 128
    %4392 = vxpose.xlu0.b32.end [16/16] 0.0, 128
    %v4393 = vpop.trf.xlu0
    %v4394 = vpop.trf.xlu0
    %v4395 = vpop.trf.xlu0
    %v4396 = vpop.trf.xlu0
    %v4397 = vpop.trf.xlu0
    %v4398 = vpop.trf.xlu0
    %v4399 = vpop.trf.xlu0
    %v4400 = vpop.trf.xlu0
    %v4401 = vpop.trf.xlu0
    %v4402 = vpop.trf.xlu0
    %v4403 = vpop.trf.xlu0
    %v4404 = vpop.trf.xlu0
    %v4405 = vpop.trf.xlu0
    %v4406 = vpop.trf.xlu0
    %v4407 = vpop.trf.xlu0
    %v4408 = vpop.trf.xlu0
    %v4410 = vsel %vm228, %v4393, 0
    %v4413 = vsel %vm235, %v4345, 0
    %4415 = vmatpush.msra.mxu0 0.0
    %4416 = vmatpush.msra.mxu0 0.0
    %4417 = vmatpush.msra.mxu0 0.0
    %4418 = vmatpush.msra.mxu0 0.0
    %4419 = vmatpush.msra.mxu0 0.0
    %4420 = vmatpush.msra.mxu0 0.0
    %4421 = vmatpush.msra.mxu0 0.0
    %4422 = vmatpush.msra.mxu0 0.0
    %4423 = vmatpush.msra.mxu0 0.0
    %4424 = vmatpush.msra.mxu0 0.0
    %4425 = vmatpush.msra.mxu0 0.0
    %4426 = vmatpush.msra.mxu0 0.0
    %4427 = vmatpush.msra.mxu0 0.0
    %4428 = vmatpush.msra.mxu0 0.0
    %4429 = vmatpush.msra.mxu0 0.0
    %4430 = vmatpush.msra.mxu0 %v4413
    %4431 = vmatmul.f32.gmra.mxu0 %v4410
    %v4432 = vpop.f32.mrf.mxu0
    %v4433 = vadd.f32 0.0, %v4432
    %4434 = vdwg.mxu0
    %v4435 = vsel %vm2179, %v4433, -inf
    %4436 = vmax.xlane.f32.xlu0 %v4435
    %v4437 = vpop.xlane.xlu0 %4436
    %v4438 = vsub.f32 %v4433, %v4437
    %v4439 = vmul.f32 %v4438, 1.442695
    %v4440 = vpow.pop %v4439
    %v4441 = vsel %vm2179, %v4440, 0.0
    %4442 = vadd.xlane.f32.xlu0 %v4441
    %v4443 = vpop.xlane.xlu0 %4442
    %v4444 = vrcp.pop %v4443
    %v4445 = vmul.f32 %v4440, %v4444
    %v4447 = vsel %vm1352, %v4375, 0
    %v4450 = vsel %vm1352, %v4445, 0
    %4452 = vmatpush.xpose.msra.mxu0 0.0
    %4453 = vmatpush.xpose.msra.mxu0 0.0
    %4454 = vmatpush.xpose.msra.mxu0 0.0
    %4455 = vmatpush.xpose.msra.mxu0 0.0
    %4456 = vmatpush.xpose.msra.mxu0 0.0
    %4457 = vmatpush.xpose.msra.mxu0 0.0
    %4458 = vmatpush.xpose.msra.mxu0 0.0
    %4459 = vmatpush.xpose.msra.mxu0 0.0
    %4460 = vmatpush.xpose.msra.mxu0 0.0
    %4461 = vmatpush.xpose.msra.mxu0 0.0
    %4462 = vmatpush.xpose.msra.mxu0 0.0
    %4463 = vmatpush.xpose.msra.mxu0 0.0
    %4464 = vmatpush.xpose.msra.mxu0 0.0
    %4465 = vmatpush.xpose.msra.mxu0 0.0
    %4466 = vmatpush.xpose.msra.mxu0 0.0
    %4467 = vmatpush.xpose.msra.mxu0 %v4450
    %4468 = vmatmul.f32.gmra.mxu0 %v4447
    %v4469 = vpop.f32.mrf.mxu0
    %v4470 = vadd.f32 0.0, %v4469
    %4471 = vdwg.mxu0
    %v4472 = vmul.f32 %v2217, %v4470
    %v4473 = vadd.f32 %v4472, %v4298
    %v4474 = vld [vmem:[%s49] sm:$0x1]
    %v4476 = vsel %vm1352, %v4473, 0
    %4478 = vmatpush.msra.mxu0 0.0
    %4479 = vmatpush.msra.mxu0 0.0
    %4480 = vmatpush.msra.mxu0 0.0
    %4481 = vmatpush.msra.mxu0 0.0
    %4482 = vmatpush.msra.mxu0 0.0
    %4483 = vmatpush.msra.mxu0 0.0
    %4484 = vmatpush.msra.mxu0 0.0
    %4485 = vmatpush.msra.mxu0 0.0
    %4486 = vmatpush.msra.mxu0 0.0
    %4487 = vmatpush.msra.mxu0 0.0
    %4488 = vmatpush.msra.mxu0 0.0
    %4489 = vmatpush.msra.mxu0 0.0
    %4490 = vmatpush.msra.mxu0 0.0
    %4491 = vmatpush.msra.mxu0 0.0
    %4492 = vmatpush.msra.mxu0 0.0
    %4493 = vmatpush.msra.mxu0 %v1379
    %4494 = vmatmul.f32.gmra.mxu0 %v4476
    %v4495 = vpop.f32.mrf.mxu0
    %v4496 = vadd.f32 0.0, %v4495
    %4497 = vdwg.mxu0
    %v4498 = vld [vmem:[%s2244] sm:$0x1]
    %v4500 = vsel %vm630, %v4498, 0
    %4502 = vmatpush.msra.mxu0 0.0
    %4503 = vmatpush.msra.mxu0 0.0
    %4504 = vmatpush.msra.mxu0 0.0
    %4505 = vmatpush.msra.mxu0 0.0
    %4506 = vmatpush.msra.mxu0 0.0
    %4507 = vmatpush.msra.mxu0 0.0
    %4508 = vmatpush.msra.mxu0 0.0
    %4509 = vmatpush.msra.mxu0 0.0
    %4510 = vmatpush.msra.mxu0 0.0
    %4511 = vmatpush.msra.mxu0 0.0
    %4512 = vmatpush.msra.mxu0 0.0
    %4513 = vmatpush.msra.mxu0 0.0
    %4514 = vmatpush.msra.mxu0 0.0
    %4515 = vmatpush.msra.mxu0 0.0
    %4516 = vmatpush.msra.mxu0 0.0
    %4517 = vmatpush.msra.mxu0 %v4473
    %4518 = vmatmul.f32.gmra.mxu0 %v4500
    %v4519 = vpop.f32.mrf.mxu0
    %v4520 = vadd.f32 0.0, %v4519
    %4521 = vdwg.mxu0
    %v4523 = vsel %vm630, %v4474, 0
    %4525 = vmatpush.msra.mxu0 0.0
    %4526 = vmatpush.msra.mxu0 0.0
    %4527 = vmatpush.msra.mxu0 0.0
    %4528 = vmatpush.msra.mxu0 0.0
    %4529 = vmatpush.msra.mxu0 0.0
    %4530 = vmatpush.msra.mxu0 0.0
    %4531 = vmatpush.msra.mxu0 0.0
    %4532 = vmatpush.msra.mxu0 0.0
    %4533 = vmatpush.msra.mxu0 0.0
    %4534 = vmatpush.msra.mxu0 0.0
    %4535 = vmatpush.msra.mxu0 0.0
    %4536 = vmatpush.msra.mxu0 0.0
    %4537 = vmatpush.msra.mxu0 0.0
    %4538 = vmatpush.msra.mxu0 0.0
    %4539 = vmatpush.msra.mxu0 0.0
    %4540 = vmatpush.msra.mxu0 %v4496
    %4541 = vmatmul.f32.gmra.mxu0 %v4523
    %v4542 = vpop.f32.mrf.mxu0
    %v4543 = vadd.f32 %v4520, %v4542
    %4544 = vdwg.mxu0
    %v4545 = vld [vmem:[%s2292] sm:$0x1]
    %4546 = vmatpush.msra.mxu0 0.0
    %4547 = vmatpush.msra.mxu0 0.0
    %4548 = vmatpush.msra.mxu0 0.0
    %4549 = vmatpush.msra.mxu0 0.0
    %4550 = vmatpush.msra.mxu0 0.0
    %4551 = vmatpush.msra.mxu0 0.0
    %4552 = vmatpush.msra.mxu0 0.0
    %4553 = vmatpush.msra.mxu0 0.0
    %4554 = vmatpush.msra.mxu0 0.0
    %4555 = vmatpush.msra.mxu0 0.0
    %4556 = vmatpush.msra.mxu0 0.0
    %4557 = vmatpush.msra.mxu0 0.0
    %4558 = vmatpush.msra.mxu0 0.0
    %4559 = vmatpush.msra.mxu0 0.0
    %4560 = vmatpush.msra.mxu0 0.0
    %4561 = vmatpush.msra.mxu0 %v1516
    %4562 = vmatmul.f32.gmra.mxu0 %v4476
    %v4563 = vpop.f32.mrf.mxu0
    %v4564 = vadd.f32 0.0, %v4563
    %4565 = vdwg.mxu0
    %v4567 = vsel %vm630, %v4545, 0
    %4569 = vmatpush.msra.mxu0 0.0
    %4570 = vmatpush.msra.mxu0 0.0
    %4571 = vmatpush.msra.mxu0 0.0
    %4572 = vmatpush.msra.mxu0 0.0
    %4573 = vmatpush.msra.mxu0 0.0
    %4574 = vmatpush.msra.mxu0 0.0
    %4575 = vmatpush.msra.mxu0 0.0
    %4576 = vmatpush.msra.mxu0 0.0
    %4577 = vmatpush.msra.mxu0 0.0
    %4578 = vmatpush.msra.mxu0 0.0
    %4579 = vmatpush.msra.mxu0 0.0
    %4580 = vmatpush.msra.mxu0 0.0
    %4581 = vmatpush.msra.mxu0 0.0
    %4582 = vmatpush.msra.mxu0 0.0
    %4583 = vmatpush.msra.mxu0 0.0
    %4584 = vmatpush.msra.mxu0 %v4564
    %4585 = vmatmul.f32.gmra.mxu0 %v4567
    %v4586 = vpop.f32.mrf.mxu0
    %v4587 = vadd.f32 0.0, %v4586
    %4588 = vdwg.mxu0
    %v4589 = vadd.f32 %v4543, %v4587
    %v4590 = vld [vmem:[#allocation2] sm:$0x1]
    %4592 = vset.pattern.permute.xlu0 0
    %4593 = vperm.xlu0 %4592, %v4590
    %v4594 = vpop.permute.xlu0 %4593
    %v4596 = vperm.slane %v4594, 0
    %v4597 = vadd.f32 %v4589, %v4596
    %v4598 = vsel %vm2346, %v4597, 0.0
    %4599 = vadd.xlane.f32.xlu0 %v4598
    %v4600 = vpop.xlane.xlu0 %4599
    %v4601 = vmul.f32 %v4600, %v2356
    %v4602 = vld [vmem:[%s5 + $0x1] sm:$0x1]
    %v4603 = vld [vmem:[%s7 + $0x1] sm:$0x1]
    %v4604 = vld [vmem:[%s53] sm:$0x1]
    %v4605 = vmul.f32 %v4601, %v4604
    %v4606 = vld [vmem:[%s55] sm:$0x7]
    %v4608 = vsel %vm2363, %v4602, 0
    %v4611 = vsel %vm2367, %v4606, 0
    %4613 = vmatpush.msra.mxu0 0.0
    %4614 = vmatpush.msra.mxu0 0.0
    %4615 = vmatpush.msra.mxu0 0.0
    %4616 = vmatpush.msra.mxu0 0.0
    %4617 = vmatpush.msra.mxu0 0.0
    %4618 = vmatpush.msra.mxu0 0.0
    %4619 = vmatpush.msra.mxu0 0.0
    %4620 = vmatpush.msra.mxu0 0.0
    %4621 = vmatpush.msra.mxu0 0.0
    %4622 = vmatpush.msra.mxu0 0.0
    %4623 = vmatpush.msra.mxu0 0.0
    %4624 = vmatpush.msra.mxu0 0.0
    %4625 = vmatpush.msra.mxu0 0.0
    %4626 = vmatpush.msra.mxu0 0.0
    %4627 = vmatpush.msra.mxu0 0.0
    %4628 = vmatpush.msra.mxu0 %v4611
    %4629 = vmatmul.f32.gmra.mxu0 %v4608
    %v4630 = vpop.f32.mrf.mxu0
    %v4631 = vadd.f32 0.0, %v4630
    %4632 = vdwg.mxu0
    %v4633 = vadd.f32 %v4605, %v4631
    %v4634 = vld [vmem:[%s57] sm:$0x7]
    %v4636 = vsel %vm2363, %v4603, 0
    %v4639 = vsel %vm2367, %v4634, 0
    %4641 = vmatpush.msra.mxu0 0.0
    %4642 = vmatpush.msra.mxu0 0.0
    %4643 = vmatpush.msra.mxu0 0.0
    %4644 = vmatpush.msra.mxu0 0.0
    %4645 = vmatpush.msra.mxu0 0.0
    %4646 = vmatpush.msra.mxu0 0.0
    %4647 = vmatpush.msra.mxu0 0.0
    %4648 = vmatpush.msra.mxu0 0.0
    %4649 = vmatpush.msra.mxu0 0.0
    %4650 = vmatpush.msra.mxu0 0.0
    %4651 = vmatpush.msra.mxu0 0.0
    %4652 = vmatpush.msra.mxu0 0.0
    %4653 = vmatpush.msra.mxu0 0.0
    %4654 = vmatpush.msra.mxu0 0.0
    %4655 = vmatpush.msra.mxu0 0.0
    %4656 = vmatpush.msra.mxu0 %v4639
    %4657 = vmatmul.f32.gmra.mxu0 %v4636
    %v4658 = vpop.f32.mrf.mxu0
    %v4659 = vadd.f32 0.0, %v4658
    %4660 = vdwg.mxu0
    %v4661 = vadd.f32 %v4633, %v4659
    %v4662 = vld [vmem:[%s59] sm:$0x1]
    %v4663 = vadd.f32 %v4661, %v4662
    %vm4664 = vcmp.gt.f32.partialorder %v4663, 0.0
    %v4665 = vmul.f32 %v4663, 0.2
    %v4666 = vsel %vm4664, %v4663, %v4665
    %v4667 = vld [vmem:[%s61] sm:$0xff]
    %v4668 = vld [vmem:[%s61 + $0x8] sm:$0xff]
    %v4669 = vld [vmem:[%s61 + $0x10] sm:$0xff]
    %v4670 = vld [vmem:[%s61 + $0x18] sm:$0xff]
    %v4671 = vld [vmem:[%s61 + $0x20] sm:$0xff]
    %v4672 = vld [vmem:[%s61 + $0x28] sm:$0xff]
    %v4673 = vld [vmem:[%s61 + $0x30] sm:$0xff]
    %v4674 = vld [vmem:[%s61 + $0x38] sm:$0xff]
    %v4675 = vld [vmem:[%s61 + $0x40] sm:$0xff]
    %v4676 = vld [vmem:[%s61 + $0x48] sm:$0xff]
    %v4677 = vld [vmem:[%s61 + $0x50] sm:$0xff]
    %v4678 = vld [vmem:[%s61 + $0x58] sm:$0xff]
    %v4679 = vld [vmem:[%s61 + $0x60] sm:$0xff]
    %v4680 = vld [vmem:[%s61 + $0x68] sm:$0xff]
    %v4681 = vld [vmem:[%s61 + $0x70] sm:$0xff]
    %v4682 = vld [vmem:[%s61 + $0x78] sm:$0xff]
    %v4683 = vld [vmem:[%s63] sm:$0x1]
    %4684 = vmatpush.msra.mxu0 %v4682
    %4685 = vmatpush.msra.mxu0 %v4681
    %4686 = vmatpush.msra.mxu0 %v4680
    %4687 = vmatpush.msra.mxu0 %v4679
    %4688 = vmatpush.msra.mxu0 %v4678
    %4689 = vmatpush.msra.mxu0 %v4677
    %4690 = vmatpush.msra.mxu0 %v4676
    %4691 = vmatpush.msra.mxu0 %v4675
    %4692 = vmatpush.msra.mxu0 %v4674
    %4693 = vmatpush.msra.mxu0 %v4673
    %4694 = vmatpush.msra.mxu0 %v4672
    %4695 = vmatpush.msra.mxu0 %v4671
    %4696 = vmatpush.msra.mxu0 %v4670
    %4697 = vmatpush.msra.mxu0 %v4669
    %4698 = vmatpush.msra.mxu0 %v4668
    %4699 = vmatpush.msra.mxu0 %v4667
    %4700 = vmatmul.f32.gmra.mxu0 %v4666
    %v4701 = vpop.f32.mrf.mxu0
    %v4702 = vadd.f32 %v4683, %v4701
    %4703 = vdwg.mxu0
    %vm4704 = vcmp.gt.f32.partialorder %v4702, 0.0
    %v4705 = vmul.f32 %v4702, 0.2
    %v4706 = vsel %vm4704, %v4702, %v4705
    %v4707 = vld [vmem:[%s65] sm:$0xff]
    %v4708 = vld [vmem:[%s65 + $0x8] sm:$0xff]
    %v4709 = vld [vmem:[%s65 + $0x10] sm:$0xff]
    %v4710 = vld [vmem:[%s65 + $0x18] sm:$0xff]
    %v4711 = vld [vmem:[%s65 + $0x20] sm:$0xff]
    %v4712 = vld [vmem:[%s65 + $0x28] sm:$0xff]
    %v4713 = vld [vmem:[%s65 + $0x30] sm:$0xff]
    %v4714 = vld [vmem:[%s65 + $0x38] sm:$0xff]
    %v4715 = vld [vmem:[#allocation3] sm:$0x1]
    %v4717 = vsel %vm1427, %v4706, 0
    %4719 = vmatpush.msra.mxu0 0.0
    %4720 = vmatpush.msra.mxu0 0.0
    %4721 = vmatpush.msra.mxu0 0.0
    %4722 = vmatpush.msra.mxu0 0.0
    %4723 = vmatpush.msra.mxu0 0.0
    %4724 = vmatpush.msra.mxu0 0.0
    %4725 = vmatpush.msra.mxu0 0.0
    %4726 = vmatpush.msra.mxu0 0.0
    %4727 = vmatpush.msra.mxu0 %v4714
    %4728 = vmatpush.msra.mxu0 %v4713
    %4729 = vmatpush.msra.mxu0 %v4712
    %4730 = vmatpush.msra.mxu0 %v4711
    %4731 = vmatpush.msra.mxu0 %v4710
    %4732 = vmatpush.msra.mxu0 %v4709
    %4733 = vmatpush.msra.mxu0 %v4708
    %4734 = vmatpush.msra.mxu0 %v4707
    %4735 = vmatmul.f32.gmra.mxu0 %v4717
    %v4736 = vpop.f32.mrf.mxu0
    %v4737 = vadd.f32 %v4715, %v4736
    %4738 = vdwg.mxu0
    %4739 = vst.msk [vmem:[%s69 + $0x1] sm:$0x1] %vm2497, %v4737
    // Predicated region
    $region142: #{discriminator_forward.1} parent=1 // pred_check
      _
    $region143: #{discriminator_forward.1} parent=1 // pred_check_branch
      %4741 = sbr.rel (0) target = $region145
    $region144: #{discriminator_forward.1} parent=1 // pred_region
      _
    $region145: #{discriminator_forward.1} parent=1 // pred_fallthru
      _
    // Predicated region
    $region146: #{discriminator_forward.1} parent=1 // pred_check
      _
    $region147: #{discriminator_forward.1} parent=1 // pred_check_branch
      %4743 = sbr.rel (0) target = $region149
    $region148: #{discriminator_forward.1} parent=1 // pred_region
      _
    $region149: #{discriminator_forward.1} parent=1 // pred_fallthru
      _
    %4744 = vsyncpa [#allocation5], 1

</llo_original>
